<compile_context>
chip_gen: v5e
topology: v5e:2x2
jax: 0.10.0
libtpu: 0.0.40
codegen_flags: <defaults>
</compile_context>

<pallas_src>
import functools

import jax
import jax.numpy as jnp
from jax.experimental import pallas as pl
from jax.experimental.pallas import tpu as pltpu


def make_first_layer_kernel(px_tile: int, batch: int, eps: float = 1e-8,
                            slope: float = 0.2):
    def kernel(x_ref, w_ref, b_ref, o_ref):
        # x_ref: (Bp, D)     compute dtype -- padded latents, resident across tiles
        # w_ref: (PX, D, C)  compute dtype -- contiguous weight tile (pixel-major)
        # b_ref: (PX, 1, C)  f32           -- bias tile
        # o_ref: (PX, B, C)  f32           -- output tile (only real batch rows)
        x = x_ref[...]
        inv_c = 1.0 / w_ref.shape[-1]
        # Static unroll: PX is capped at 32 by the tile picker, so program size
        # and vreg live ranges stay bounded (no fori_loop needed).
        for p in range(px_tile):
            l = jnp.dot(x, w_ref[p], preferred_element_type=jnp.float32)  # (Bp, C)
            l = l + b_ref[p]                                              # f32
            ssq = jnp.sum(l * l, axis=-1, keepdims=True)                  # lane reduce (XLU)
            v = l * jax.lax.rsqrt(ssq * inv_c + eps)                      # PixelNorm2d (EUP)
            v = jnp.maximum(v, slope * v)                                 # LeakyReLU(0.2)
            o_ref[p] = v[:batch]                                          # single store
    return kernel


def _vmem_budget_bytes() -> int:
    """Budget for the double-buffered streaming buffers, conservative across
    v5e/v6e (128 MiB physical) and v7x (64 MiB physical per TC)."""
    try:
        phys = int(pltpu.get_tpu_info().vmem_capacity_bytes)
    except Exception:
        phys = 64 << 20  # v7x per-core floor
    return int(min(phys * 0.4, 40 << 20))


def _pick_pixel_tile(hw, C, D, B, w_itemsize, budget_bytes, max_tile=32):
    """Pixel-tile size PX (divisor of hw, <= max_tile) such that the
    double-buffered weight + bias + output blocks fit the VMEM budget,
    preferring a pipelined (>= 2 step) and even-length grid (v7x 2 TCs)."""
    per_px = 2 * (D * C * w_itemsize + C * 4 + B * C * 4)
    cands = [t for t in range(1, min(hw, max_tile) + 1) if hw % t == 0]
    fitting = [t for t in cands if t * per_px <= budget_bytes] or [cands[0]]

    def score(t):
        n = hw // t
        return (n >= 2, n % 2 == 0, t)

    return max(fitting, key=score)


def prepare_first_layer_params(weight, bias, *, out_channels, size_out,
                               weight_dtype=jnp.bfloat16):
    """One-time relayout of nn.Linear params into the kernel's streaming layout.

    weight: (F, D) in PyTorch nn.Linear layout; bias: (F,), F = C*size_out**2.
    Returns w_pix: (hw, D, C) weight_dtype, b_pix: (hw, 1, C) f32.
    Call once and reuse; keeps the relayout out of the per-call forward path.
    """
    C, hw = out_channels, size_out * size_out
    F, D = weight.shape
    assert F == C * hw and bias.shape == (F,)
    w_pix = jnp.transpose(weight.reshape(C, hw, D), (1, 2, 0)).astype(weight_dtype)
    b_pix = jnp.transpose(bias.reshape(C, hw), (1, 0)).reshape(hw, 1, C)
    return w_pix, b_pix.astype(jnp.float32)


def first_layer_forward(noise, w_pix, b_pix, *, out_channels, size_out):
    """noise: (B, latent_dim) (any trailing dims are flattened, as in the
    module's noise.view(B, -1)); w_pix/b_pix from prepare_first_layer_params.
    Returns (B, out_channels, size_out, size_out) float32 NCHW."""
    noise = noise.reshape(noise.shape[0], -1)
    B, D = noise.shape
    C, hw = out_channels, size_out * size_out
    assert w_pix.shape == (hw, D, C) and b_pix.shape == (hw, 1, C)

    cdt = w_pix.dtype
    itemsize = jnp.dtype(cdt).itemsize

    # Pad the batch to the 8-row sublane granularity on the matmul LHS only;
    # the output never contains padded rows.
    Bp = max(8, ((B + 7) // 8) * 8)
    x = jnp.zeros((Bp, D), cdt).at[:B].set(noise.astype(cdt))

    PX = _pick_pixel_tile(hw, C, D, B, itemsize, _vmem_budget_bytes())
    n_tiles = hw // PX

    # Explicit VMEM accounting: double-buffered streams + resident latents.
    w_tile = PX * D * C * itemsize
    b_tile = PX * C * 4
    o_tile = PX * B * C * 4
    vmem_total = 2 * (w_tile + b_tile + o_tile) + Bp * D * itemsize
    vmem_limit = int(min(max(vmem_total + (8 << 20), 32 << 20), 60 << 20))

    cost = pl.CostEstimate(
        flops=2 * Bp * D * C * hw,
        transcendentals=Bp * hw,                         # one rsqrt per (b, pixel)
        bytes_accessed=int(x.size * itemsize
                           + w_pix.size * itemsize
                           + b_pix.size * 4
                           + B * C * hw * 4),
    )

    kernel = make_first_layer_kernel(PX, B)

    out_pbc = pl.pallas_call(
        kernel,
        out_shape=jax.ShapeDtypeStruct((hw, B, C), jnp.float32),
        grid_spec=pltpu.PrefetchScalarGridSpec(
            num_scalar_prefetch=0,
            grid=(n_tiles,),
            in_specs=[
                pl.BlockSpec((Bp, D), lambda j: (0, 0)),        # resident latents
                pl.BlockSpec((PX, D, C), lambda j: (j, 0, 0)),  # contiguous weight stream
                pl.BlockSpec((PX, 1, C), lambda j: (j, 0, 0)),  # bias tile
            ],
            out_specs=pl.BlockSpec((PX, B, C), lambda j: (j, 0, 0)),
        ),
        compiler_params=pltpu.CompilerParams(
            dimension_semantics=("parallel",),
            vmem_limit_bytes=vmem_limit,
        ),
        cost_estimate=cost,
    )(x, w_pix, b_pix)

    # (hw, B, C) -> (B, C, H, W).  This small transpose (2*B*F*4 HBM bytes,
    # << the bf16 weight stream for typical first-layer shapes) is the only
    # remaining relayout in the per-call path.
    # TODO(synk): add a pixels-on-lanes variant for the atypical regime
    # hw >= 128 with C < 128, and/or keep NHWC when the consumer accepts it.
    return out_pbc.transpose(1, 2, 0).reshape(B, out_channels, size_out, size_out)


if __name__ == "__main__":
    # Small, module-consistent shapes.
    batch = 2
    latent_dim = 32
    size_out = 8
    out_channels = 4
    F = size_out * size_out * out_channels

    key = jax.random.PRNGKey(0)
    k_noise, k_w, k_b = jax.random.split(key, 3)

    noise = jax.random.normal(k_noise, (batch, latent_dim), dtype=jnp.float32)

    # Deterministic nn.Linear-style init: U(-1/sqrt(fan_in), 1/sqrt(fan_in))
    bound = 1.0 / (latent_dim ** 0.5)
    weight = jax.random.uniform(k_w, (F, latent_dim), minval=-bound,
                                maxval=bound, dtype=jnp.float32)
    bias = jax.random.uniform(k_b, (F,), minval=-bound, maxval=bound,
                              dtype=jnp.float32)

    # One-time param relayout (hoisted out of the per-call forward path).
    w_pix, b_pix = prepare_first_layer_params(
        weight, bias, out_channels=out_channels, size_out=size_out)

    fwd = jax.jit(functools.partial(first_layer_forward,
                                    out_channels=out_channels,
                                    size_out=size_out))
    out = fwd(noise, w_pix, b_pix)
    jax.block_until_ready(out)

    # Plain-JAX reference with matched bf16 rounding of noise / weight and f32
    # accumulation (intentional precision tradeoff: bf16 weight streaming).
    nb = noise.astype(jnp.bfloat16).astype(jnp.float32)
    wb = weight.astype(jnp.bfloat16).astype(jnp.float32)
    l1 = nb @ wb.T + bias
    l1v = l1.reshape(batch, out_channels, size_out, size_out)
    ms = jnp.mean(l1v * l1v, axis=1, keepdims=True)
    ref = l1v * jax.lax.rsqrt(ms + 1e-8)
    ref = jnp.maximum(ref, 0.2 * ref)

    assert out.shape == (batch, out_channels, size_out, size_out)
    err = float(jnp.max(jnp.abs(out - ref)))
    assert jnp.allclose(out, ref, atol=1e-4, rtol=1e-4), err

    print("KERNEL_OK")
</pallas_src>

<mosaic_0001>
module attributes {stable_mosaic.version = 11 : i64} {
  func.func @kernel(%arg0: i32, %arg1: memref<8x32xbf16, #tpu.memory_space<vmem>>, %arg2: memref<32x32x4xbf16, #tpu.memory_space<vmem>>, %arg3: memref<32x1x4xf32, #tpu.memory_space<vmem>>, %arg4: memref<32x2x4xf32, #tpu.memory_space<vmem>>) attributes {dimension_semantics = [#tpu.dimension_semantics<parallel>], iteration_bounds = array<i64: 2>, scalar_prefetch = 0 : i64, scratch_operands = 0 : i64, tpu.core_type = #tpu.core_type<tc>, window_params = [{pipeline_mode = #tpu.pipeline_mode<synchronous>, transform_indices = @transform_0, window_bounds = array<i64: 8, 32>}, {transform_indices = @transform_1, window_bounds = array<i64: 32, 32, 4>}, {transform_indices = @transform_2, window_bounds = array<i64: 32, 1, 4>}, {transform_indices = @transform_3, window_bounds = array<i64: 32, 2, 4>}]} {
    %c0 = arith.constant 0 : index
    %c0_0 = arith.constant 0 : index
    %0 = vector.load %arg1[%c0, %c0_0] : memref<8x32xbf16, #tpu.memory_space<vmem>>, vector<8x32xbf16>
    %c0_1 = arith.constant 0 : index
    %c0_2 = arith.constant 0 : index
    %c0_3 = arith.constant 0 : index
    %1 = vector.load %arg2[%c0_1, %c0_2, %c0_3] : memref<32x32x4xbf16, #tpu.memory_space<vmem>>, vector<1x32x4xbf16>
    %2 = vector.shape_cast %1 : vector<1x32x4xbf16> to vector<32x4xbf16>
    %cst = arith.constant dense<0.000000e+00> : vector<8x4xf32>
    %3 = tpu.matmul %0, %2, %cst {dimension_numbers = #tpu.dot_dimension_numbers<[1], [0], [0], [1], [0, 0, 1, 1], [], []>} : vector<8x32xbf16>, vector<32x4xbf16>, vector<8x4xf32> -> vector<8x4xf32>
    %c0_4 = arith.constant 0 : index
    %c0_5 = arith.constant 0 : index
    %c0_6 = arith.constant 0 : index
    %4 = vector.load %arg3[%c0_4, %c0_5, %c0_6] : memref<32x1x4xf32, #tpu.memory_space<vmem>>, vector<1x1x4xf32>
    %5 = vector.shape_cast %4 : vector<1x1x4xf32> to vector<1x4xf32>
    %6 = vector.broadcast %5 : vector<1x4xf32> to vector<8x4xf32>
    %7 = arith.addf %3, %6 : vector<8x4xf32>
    %8 = arith.mulf %7, %7 : vector<8x4xf32>
    %cst_7 = arith.constant dense<0.000000e+00> : vector<8xf32>
    %9 = vector.multi_reduction <add>, %8, %cst_7 [1] : vector<8x4xf32> to vector<8xf32>
    %10 = vector.shape_cast %9 : vector<8xf32> to vector<8x1xf32>
    %cst_8 = arith.constant 2.500000e-01 : f32
    %11 = vector.broadcast %cst_8 : f32 to vector<8x1xf32>
    %12 = arith.mulf %10, %11 : vector<8x1xf32>
    %cst_9 = arith.constant 9.99999993E-9 : f32
    %13 = vector.broadcast %cst_9 : f32 to vector<8x1xf32>
    %14 = arith.addf %12, %13 : vector<8x1xf32>
    %15 = math.rsqrt %14 : vector<8x1xf32>
    %16 = vector.broadcast %15 : vector<8x1xf32> to vector<8x4xf32>
    %17 = arith.mulf %7, %16 : vector<8x4xf32>
    %cst_10 = arith.constant 2.000000e-01 : f32
    %18 = vector.broadcast %cst_10 : f32 to vector<8x4xf32>
    %19 = arith.mulf %18, %17 : vector<8x4xf32>
    %20 = arith.maximumf %17, %19 : vector<8x4xf32>
    %21 = vector.extract_strided_slice %20 {offsets = [0, 0], sizes = [2, 4], strides = [1, 1]} : vector<8x4xf32> to vector<2x4xf32>
    %c0_11 = arith.constant 0 : index
    %c0_12 = arith.constant 0 : index
    %c0_13 = arith.constant 0 : index
    %22 = vector.load %arg4[%c0_11, %c0_12, %c0_13] : memref<32x2x4xf32, #tpu.memory_space<vmem>>, vector<1x2x4xf32>
    %23 = vector.shape_cast %22 : vector<1x2x4xf32> to vector<2x4xf32>
    %24 = vector.shape_cast %21 : vector<2x4xf32> to vector<1x2x4xf32>
    tpu.vector_store %arg4[%c0_11, %c0_12, %c0_13], %24 {strides = array<i32>} : memref<32x2x4xf32, #tpu.memory_space<vmem>>, vector<1x2x4xf32>,
    %c1 = arith.constant 1 : index
    %c0_14 = arith.constant 0 : index
    %c0_15 = arith.constant 0 : index
    %25 = vector.load %arg2[%c1, %c0_14, %c0_15] : memref<32x32x4xbf16, #tpu.memory_space<vmem>>, vector<1x32x4xbf16>
    %26 = vector.shape_cast %25 : vector<1x32x4xbf16> to vector<32x4xbf16>
    %cst_16 = arith.constant dense<0.000000e+00> : vector<8x4xf32>
    %27 = tpu.matmul %0, %26, %cst_16 {dimension_numbers = #tpu.dot_dimension_numbers<[1], [0], [0], [1], [0, 0, 1, 1], [], []>} : vector<8x32xbf16>, vector<32x4xbf16>, vector<8x4xf32> -> vector<8x4xf32>
    %c1_17 = arith.constant 1 : index
    %c0_18 = arith.constant 0 : index
    %c0_19 = arith.constant 0 : index
    %28 = vector.load %arg3[%c1_17, %c0_18, %c0_19] : memref<32x1x4xf32, #tpu.memory_space<vmem>>, vector<1x1x4xf32>
    %29 = vector.shape_cast %28 : vector<1x1x4xf32> to vector<1x4xf32>
    %30 = vector.broadcast %29 : vector<1x4xf32> to vector<8x4xf32>
    %31 = arith.addf %27, %30 : vector<8x4xf32>
    %32 = arith.mulf %31, %31 : vector<8x4xf32>
    %cst_20 = arith.constant dense<0.000000e+00> : vector<8xf32>
    %33 = vector.multi_reduction <add>, %32, %cst_20 [1] : vector<8x4xf32> to vector<8xf32>
    %34 = vector.shape_cast %33 : vector<8xf32> to vector<8x1xf32>
    %cst_21 = arith.constant 2.500000e-01 : f32
    %35 = vector.broadcast %cst_21 : f32 to vector<8x1xf32>
    %36 = arith.mulf %34, %35 : vector<8x1xf32>
    %cst_22 = arith.constant 9.99999993E-9 : f32
    %37 = vector.broadcast %cst_22 : f32 to vector<8x1xf32>
    %38 = arith.addf %36, %37 : vector<8x1xf32>
    %39 = math.rsqrt %38 : vector<8x1xf32>
    %40 = vector.broadcast %39 : vector<8x1xf32> to vector<8x4xf32>
    %41 = arith.mulf %31, %40 : vector<8x4xf32>
    %cst_23 = arith.constant 2.000000e-01 : f32
    %42 = vector.broadcast %cst_23 : f32 to vector<8x4xf32>
    %43 = arith.mulf %42, %41 : vector<8x4xf32>
    %44 = arith.maximumf %41, %43 : vector<8x4xf32>
    %45 = vector.extract_strided_slice %44 {offsets = [0, 0], sizes = [2, 4], strides = [1, 1]} : vector<8x4xf32> to vector<2x4xf32>
    %c1_24 = arith.constant 1 : index
    %c0_25 = arith.constant 0 : index
    %c0_26 = arith.constant 0 : index
    %46 = vector.load %arg4[%c1_24, %c0_25, %c0_26] : memref<32x2x4xf32, #tpu.memory_space<vmem>>, vector<1x2x4xf32>
    %47 = vector.shape_cast %46 : vector<1x2x4xf32> to vector<2x4xf32>
    %48 = vector.shape_cast %45 : vector<2x4xf32> to vector<1x2x4xf32>
    tpu.vector_store %arg4[%c1_24, %c0_25, %c0_26], %48 {strides = array<i32>} : memref<32x2x4xf32, #tpu.memory_space<vmem>>, vector<1x2x4xf32>,
    %c2 = arith.constant 2 : index
    %c0_27 = arith.constant 0 : index
    %c0_28 = arith.constant 0 : index
    %49 = vector.load %arg2[%c2, %c0_27, %c0_28] : memref<32x32x4xbf16, #tpu.memory_space<vmem>>, vector<1x32x4xbf16>
    %50 = vector.shape_cast %49 : vector<1x32x4xbf16> to vector<32x4xbf16>
    %cst_29 = arith.constant dense<0.000000e+00> : vector<8x4xf32>
    %51 = tpu.matmul %0, %50, %cst_29 {dimension_numbers = #tpu.dot_dimension_numbers<[1], [0], [0], [1], [0, 0, 1, 1], [], []>} : vector<8x32xbf16>, vector<32x4xbf16>, vector<8x4xf32> -> vector<8x4xf32>
    %c2_30 = arith.constant 2 : index
    %c0_31 = arith.constant 0 : index
    %c0_32 = arith.constant 0 : index
    %52 = vector.load %arg3[%c2_30, %c0_31, %c0_32] : memref<32x1x4xf32, #tpu.memory_space<vmem>>, vector<1x1x4xf32>
    %53 = vector.shape_cast %52 : vector<1x1x4xf32> to vector<1x4xf32>
    %54 = vector.broadcast %53 : vector<1x4xf32> to vector<8x4xf32>
    %55 = arith.addf %51, %54 : vector<8x4xf32>
    %56 = arith.mulf %55, %55 : vector<8x4xf32>
    %cst_33 = arith.constant dense<0.000000e+00> : vector<8xf32>
    %57 = vector.multi_reduction <add>, %56, %cst_33 [1] : vector<8x4xf32> to vector<8xf32>
    %58 = vector.shape_cast %57 : vector<8xf32> to vector<8x1xf32>
    %cst_34 = arith.constant 2.500000e-01 : f32
    %59 = vector.broadcast %cst_34 : f32 to vector<8x1xf32>
    %60 = arith.mulf %58, %59 : vector<8x1xf32>
    %cst_35 = arith.constant 9.99999993E-9 : f32
    %61 = vector.broadcast %cst_35 : f32 to vector<8x1xf32>
    %62 = arith.addf %60, %61 : vector<8x1xf32>
    %63 = math.rsqrt %62 : vector<8x1xf32>
    %64 = vector.broadcast %63 : vector<8x1xf32> to vector<8x4xf32>
    %65 = arith.mulf %55, %64 : vector<8x4xf32>
    %cst_36 = arith.constant 2.000000e-01 : f32
    %66 = vector.broadcast %cst_36 : f32 to vector<8x4xf32>
    %67 = arith.mulf %66, %65 : vector<8x4xf32>
    %68 = arith.maximumf %65, %67 : vector<8x4xf32>
    %69 = vector.extract_strided_slice %68 {offsets = [0, 0], sizes = [2, 4], strides = [1, 1]} : vector<8x4xf32> to vector<2x4xf32>
    %c2_37 = arith.constant 2 : index
    %c0_38 = arith.constant 0 : index
    %c0_39 = arith.constant 0 : index
    %70 = vector.load %arg4[%c2_37, %c0_38, %c0_39] : memref<32x2x4xf32, #tpu.memory_space<vmem>>, vector<1x2x4xf32>
    %71 = vector.shape_cast %70 : vector<1x2x4xf32> to vector<2x4xf32>
    %72 = vector.shape_cast %69 : vector<2x4xf32> to vector<1x2x4xf32>
    tpu.vector_store %arg4[%c2_37, %c0_38, %c0_39], %72 {strides = array<i32>} : memref<32x2x4xf32, #tpu.memory_space<vmem>>, vector<1x2x4xf32>,
    %c3 = arith.constant 3 : index
    %c0_40 = arith.constant 0 : index
    %c0_41 = arith.constant 0 : index
    %73 = vector.load %arg2[%c3, %c0_40, %c0_41] : memref<32x32x4xbf16, #tpu.memory_space<vmem>>, vector<1x32x4xbf16>
    %74 = vector.shape_cast %73 : vector<1x32x4xbf16> to vector<32x4xbf16>
    %cst_42 = arith.constant dense<0.000000e+00> : vector<8x4xf32>
    %75 = tpu.matmul %0, %74, %cst_42 {dimension_numbers = #tpu.dot_dimension_numbers<[1], [0], [0], [1], [0, 0, 1, 1], [], []>} : vector<8x32xbf16>, vector<32x4xbf16>, vector<8x4xf32> -> vector<8x4xf32>
    %c3_43 = arith.constant 3 : index
    %c0_44 = arith.constant 0 : index
    %c0_45 = arith.constant 0 : index
    %76 = vector.load %arg3[%c3_43, %c0_44, %c0_45] : memref<32x1x4xf32, #tpu.memory_space<vmem>>, vector<1x1x4xf32>
    %77 = vector.shape_cast %76 : vector<1x1x4xf32> to vector<1x4xf32>
    %78 = vector.broadcast %77 : vector<1x4xf32> to vector<8x4xf32>
    %79 = arith.addf %75, %78 : vector<8x4xf32>
    %80 = arith.mulf %79, %79 : vector<8x4xf32>
    %cst_46 = arith.constant dense<0.000000e+00> : vector<8xf32>
    %81 = vector.multi_reduction <add>, %80, %cst_46 [1] : vector<8x4xf32> to vector<8xf32>
    %82 = vector.shape_cast %81 : vector<8xf32> to vector<8x1xf32>
    %cst_47 = arith.constant 2.500000e-01 : f32
    %83 = vector.broadcast %cst_47 : f32 to vector<8x1xf32>
    %84 = arith.mulf %82, %83 : vector<8x1xf32>
    %cst_48 = arith.constant 9.99999993E-9 : f32
    %85 = vector.broadcast %cst_48 : f32 to vector<8x1xf32>
    %86 = arith.addf %84, %85 : vector<8x1xf32>
    %87 = math.rsqrt %86 : vector<8x1xf32>
    %88 = vector.broadcast %87 : vector<8x1xf32> to vector<8x4xf32>
    %89 = arith.mulf %79, %88 : vector<8x4xf32>
    %cst_49 = arith.constant 2.000000e-01 : f32
    %90 = vector.broadcast %cst_49 : f32 to vector<8x4xf32>
    %91 = arith.mulf %90, %89 : vector<8x4xf32>
    %92 = arith.maximumf %89, %91 : vector<8x4xf32>
    %93 = vector.extract_strided_slice %92 {offsets = [0, 0], sizes = [2, 4], strides = [1, 1]} : vector<8x4xf32> to vector<2x4xf32>
    %c3_50 = arith.constant 3 : index
    %c0_51 = arith.constant 0 : index
    %c0_52 = arith.constant 0 : index
    %94 = vector.load %arg4[%c3_50, %c0_51, %c0_52] : memref<32x2x4xf32, #tpu.memory_space<vmem>>, vector<1x2x4xf32>
    %95 = vector.shape_cast %94 : vector<1x2x4xf32> to vector<2x4xf32>
    %96 = vector.shape_cast %93 : vector<2x4xf32> to vector<1x2x4xf32>
    tpu.vector_store %arg4[%c3_50, %c0_51, %c0_52], %96 {strides = array<i32>} : memref<32x2x4xf32, #tpu.memory_space<vmem>>, vector<1x2x4xf32>,
    %c4 = arith.constant 4 : index
    %c0_53 = arith.constant 0 : index
    %c0_54 = arith.constant 0 : index
    %97 = vector.load %arg2[%c4, %c0_53, %c0_54] : memref<32x32x4xbf16, #tpu.memory_space<vmem>>, vector<1x32x4xbf16>
    %98 = vector.shape_cast %97 : vector<1x32x4xbf16> to vector<32x4xbf16>
    %cst_55 = arith.constant dense<0.000000e+00> : vector<8x4xf32>
    %99 = tpu.matmul %0, %98, %cst_55 {dimension_numbers = #tpu.dot_dimension_numbers<[1], [0], [0], [1], [0, 0, 1, 1], [], []>} : vector<8x32xbf16>, vector<32x4xbf16>, vector<8x4xf32> -> vector<8x4xf32>
    %c4_56 = arith.constant 4 : index
    %c0_57 = arith.constant 0 : index
    %c0_58 = arith.constant 0 : index
    %100 = vector.load %arg3[%c4_56, %c0_57, %c0_58] : memref<32x1x4xf32, #tpu.memory_space<vmem>>, vector<1x1x4xf32>
    %101 = vector.shape_cast %100 : vector<1x1x4xf32> to vector<1x4xf32>
    %102 = vector.broadcast %101 : vector<1x4xf32> to vector<8x4xf32>
    %103 = arith.addf %99, %102 : vector<8x4xf32>
    %104 = arith.mulf %103, %103 : vector<8x4xf32>
    %cst_59 = arith.constant dense<0.000000e+00> : vector<8xf32>
    %105 = vector.multi_reduction <add>, %104, %cst_59 [1] : vector<8x4xf32> to vector<8xf32>
    %106 = vector.shape_cast %105 : vector<8xf32> to vector<8x1xf32>
    %cst_60 = arith.constant 2.500000e-01 : f32
    %107 = vector.broadcast %cst_60 : f32 to vector<8x1xf32>
    %108 = arith.mulf %106, %107 : vector<8x1xf32>
    %cst_61 = arith.constant 9.99999993E-9 : f32
    %109 = vector.broadcast %cst_61 : f32 to vector<8x1xf32>
    %110 = arith.addf %108, %109 : vector<8x1xf32>
    %111 = math.rsqrt %110 : vector<8x1xf32>
    %112 = vector.broadcast %111 : vector<8x1xf32> to vector<8x4xf32>
    %113 = arith.mulf %103, %112 : vector<8x4xf32>
    %cst_62 = arith.constant 2.000000e-01 : f32
    %114 = vector.broadcast %cst_62 : f32 to vector<8x4xf32>
    %115 = arith.mulf %114, %113 : vector<8x4xf32>
    %116 = arith.maximumf %113, %115 : vector<8x4xf32>
    %117 = vector.extract_strided_slice %116 {offsets = [0, 0], sizes = [2, 4], strides = [1, 1]} : vector<8x4xf32> to vector<2x4xf32>
    %c4_63 = arith.constant 4 : index
    %c0_64 = arith.constant 0 : index
    %c0_65 = arith.constant 0 : index
    %118 = vector.load %arg4[%c4_63, %c0_64, %c0_65] : memref<32x2x4xf32, #tpu.memory_space<vmem>>, vector<1x2x4xf32>
    %119 = vector.shape_cast %118 : vector<1x2x4xf32> to vector<2x4xf32>
    %120 = vector.shape_cast %117 : vector<2x4xf32> to vector<1x2x4xf32>
    tpu.vector_store %arg4[%c4_63, %c0_64, %c0_65], %120 {strides = array<i32>} : memref<32x2x4xf32, #tpu.memory_space<vmem>>, vector<1x2x4xf32>,
    %c5 = arith.constant 5 : index
    %c0_66 = arith.constant 0 : index
    %c0_67 = arith.constant 0 : index
    %121 = vector.load %arg2[%c5, %c0_66, %c0_67] : memref<32x32x4xbf16, #tpu.memory_space<vmem>>, vector<1x32x4xbf16>
    %122 = vector.shape_cast %121 : vector<1x32x4xbf16> to vector<32x4xbf16>
    %cst_68 = arith.constant dense<0.000000e+00> : vector<8x4xf32>
    %123 = tpu.matmul %0, %122, %cst_68 {dimension_numbers = #tpu.dot_dimension_numbers<[1], [0], [0], [1], [0, 0, 1, 1], [], []>} : vector<8x32xbf16>, vector<32x4xbf16>, vector<8x4xf32> -> vector<8x4xf32>
    %c5_69 = arith.constant 5 : index
    %c0_70 = arith.constant 0 : index
    %c0_71 = arith.constant 0 : index
    %124 = vector.load %arg3[%c5_69, %c0_70, %c0_71] : memref<32x1x4xf32, #tpu.memory_space<vmem>>, vector<1x1x4xf32>
    %125 = vector.shape_cast %124 : vector<1x1x4xf32> to vector<1x4xf32>
    %126 = vector.broadcast %125 : vector<1x4xf32> to vector<8x4xf32>
    %127 = arith.addf %123, %126 : vector<8x4xf32>
    %128 = arith.mulf %127, %127 : vector<8x4xf32>
    %cst_72 = arith.constant dense<0.000000e+00> : vector<8xf32>
    %129 = vector.multi_reduction <add>, %128, %cst_72 [1] : vector<8x4xf32> to vector<8xf32>
    %130 = vector.shape_cast %129 : vector<8xf32> to vector<8x1xf32>
    %cst_73 = arith.constant 2.500000e-01 : f32
    %131 = vector.broadcast %cst_73 : f32 to vector<8x1xf32>
    %132 = arith.mulf %130, %131 : vector<8x1xf32>
    %cst_74 = arith.constant 9.99999993E-9 : f32
    %133 = vector.broadcast %cst_74 : f32 to vector<8x1xf32>
    %134 = arith.addf %132, %133 : vector<8x1xf32>
    %135 = math.rsqrt %134 : vector<8x1xf32>
    %136 = vector.broadcast %135 : vector<8x1xf32> to vector<8x4xf32>
    %137 = arith.mulf %127, %136 : vector<8x4xf32>
    %cst_75 = arith.constant 2.000000e-01 : f32
    %138 = vector.broadcast %cst_75 : f32 to vector<8x4xf32>
    %139 = arith.mulf %138, %137 : vector<8x4xf32>
    %140 = arith.maximumf %137, %139 : vector<8x4xf32>
    %141 = vector.extract_strided_slice %140 {offsets = [0, 0], sizes = [2, 4], strides = [1, 1]} : vector<8x4xf32> to vector<2x4xf32>
    %c5_76 = arith.constant 5 : index
    %c0_77 = arith.constant 0 : index
    %c0_78 = arith.constant 0 : index
    %142 = vector.load %arg4[%c5_76, %c0_77, %c0_78] : memref<32x2x4xf32, #tpu.memory_space<vmem>>, vector<1x2x4xf32>
    %143 = vector.shape_cast %142 : vector<1x2x4xf32> to vector<2x4xf32>
    %144 = vector.shape_cast %141 : vector<2x4xf32> to vector<1x2x4xf32>
    tpu.vector_store %arg4[%c5_76, %c0_77, %c0_78], %144 {strides = array<i32>} : memref<32x2x4xf32, #tpu.memory_space<vmem>>, vector<1x2x4xf32>,
    %c6 = arith.constant 6 : index
    %c0_79 = arith.constant 0 : index
    %c0_80 = arith.constant 0 : index
    %145 = vector.load %arg2[%c6, %c0_79, %c0_80] : memref<32x32x4xbf16, #tpu.memory_space<vmem>>, vector<1x32x4xbf16>
    %146 = vector.shape_cast %145 : vector<1x32x4xbf16> to vector<32x4xbf16>
    %cst_81 = arith.constant dense<0.000000e+00> : vector<8x4xf32>
    %147 = tpu.matmul %0, %146, %cst_81 {dimension_numbers = #tpu.dot_dimension_numbers<[1], [0], [0], [1], [0, 0, 1, 1], [], []>} : vector<8x32xbf16>, vector<32x4xbf16>, vector<8x4xf32> -> vector<8x4xf32>
    %c6_82 = arith.constant 6 : index
    %c0_83 = arith.constant 0 : index
    %c0_84 = arith.constant 0 : index
    %148 = vector.load %arg3[%c6_82, %c0_83, %c0_84] : memref<32x1x4xf32, #tpu.memory_space<vmem>>, vector<1x1x4xf32>
    %149 = vector.shape_cast %148 : vector<1x1x4xf32> to vector<1x4xf32>
    %150 = vector.broadcast %149 : vector<1x4xf32> to vector<8x4xf32>
    %151 = arith.addf %147, %150 : vector<8x4xf32>
    %152 = arith.mulf %151, %151 : vector<8x4xf32>
    %cst_85 = arith.constant dense<0.000000e+00> : vector<8xf32>
    %153 = vector.multi_reduction <add>, %152, %cst_85 [1] : vector<8x4xf32> to vector<8xf32>
    %154 = vector.shape_cast %153 : vector<8xf32> to vector<8x1xf32>
    %cst_86 = arith.constant 2.500000e-01 : f32
    %155 = vector.broadcast %cst_86 : f32 to vector<8x1xf32>
    %156 = arith.mulf %154, %155 : vector<8x1xf32>
    %cst_87 = arith.constant 9.99999993E-9 : f32
    %157 = vector.broadcast %cst_87 : f32 to vector<8x1xf32>
    %158 = arith.addf %156, %157 : vector<8x1xf32>
    %159 = math.rsqrt %158 : vector<8x1xf32>
    %160 = vector.broadcast %159 : vector<8x1xf32> to vector<8x4xf32>
    %161 = arith.mulf %151, %160 : vector<8x4xf32>
    %cst_88 = arith.constant 2.000000e-01 : f32
    %162 = vector.broadcast %cst_88 : f32 to vector<8x4xf32>
    %163 = arith.mulf %162, %161 : vector<8x4xf32>
    %164 = arith.maximumf %161, %163 : vector<8x4xf32>
    %165 = vector.extract_strided_slice %164 {offsets = [0, 0], sizes = [2, 4], strides = [1, 1]} : vector<8x4xf32> to vector<2x4xf32>
    %c6_89 = arith.constant 6 : index
    %c0_90 = arith.constant 0 : index
    %c0_91 = arith.constant 0 : index
    %166 = vector.load %arg4[%c6_89, %c0_90, %c0_91] : memref<32x2x4xf32, #tpu.memory_space<vmem>>, vector<1x2x4xf32>
    %167 = vector.shape_cast %166 : vector<1x2x4xf32> to vector<2x4xf32>
    %168 = vector.shape_cast %165 : vector<2x4xf32> to vector<1x2x4xf32>
    tpu.vector_store %arg4[%c6_89, %c0_90, %c0_91], %168 {strides = array<i32>} : memref<32x2x4xf32, #tpu.memory_space<vmem>>, vector<1x2x4xf32>,
    %c7 = arith.constant 7 : index
    %c0_92 = arith.constant 0 : index
    %c0_93 = arith.constant 0 : index
    %169 = vector.load %arg2[%c7, %c0_92, %c0_93] : memref<32x32x4xbf16, #tpu.memory_space<vmem>>, vector<1x32x4xbf16>
    %170 = vector.shape_cast %169 : vector<1x32x4xbf16> to vector<32x4xbf16>
    %cst_94 = arith.constant dense<0.000000e+00> : vector<8x4xf32>
    %171 = tpu.matmul %0, %170, %cst_94 {dimension_numbers = #tpu.dot_dimension_numbers<[1], [0], [0], [1], [0, 0, 1, 1], [], []>} : vector<8x32xbf16>, vector<32x4xbf16>, vector<8x4xf32> -> vector<8x4xf32>
    %c7_95 = arith.constant 7 : index
    %c0_96 = arith.constant 0 : index
    %c0_97 = arith.constant 0 : index
    %172 = vector.load %arg3[%c7_95, %c0_96, %c0_97] : memref<32x1x4xf32, #tpu.memory_space<vmem>>, vector<1x1x4xf32>
    %173 = vector.shape_cast %172 : vector<1x1x4xf32> to vector<1x4xf32>
    %174 = vector.broadcast %173 : vector<1x4xf32> to vector<8x4xf32>
    %175 = arith.addf %171, %174 : vector<8x4xf32>
    %176 = arith.mulf %175, %175 : vector<8x4xf32>
    %cst_98 = arith.constant dense<0.000000e+00> : vector<8xf32>
    %177 = vector.multi_reduction <add>, %176, %cst_98 [1] : vector<8x4xf32> to vector<8xf32>
    %178 = vector.shape_cast %177 : vector<8xf32> to vector<8x1xf32>
    %cst_99 = arith.constant 2.500000e-01 : f32
    %179 = vector.broadcast %cst_99 : f32 to vector<8x1xf32>
    %180 = arith.mulf %178, %179 : vector<8x1xf32>
    %cst_100 = arith.constant 9.99999993E-9 : f32
    %181 = vector.broadcast %cst_100 : f32 to vector<8x1xf32>
    %182 = arith.addf %180, %181 : vector<8x1xf32>
    %183 = math.rsqrt %182 : vector<8x1xf32>
    %184 = vector.broadcast %183 : vector<8x1xf32> to vector<8x4xf32>
    %185 = arith.mulf %175, %184 : vector<8x4xf32>
    %cst_101 = arith.constant 2.000000e-01 : f32
    %186 = vector.broadcast %cst_101 : f32 to vector<8x4xf32>
    %187 = arith.mulf %186, %185 : vector<8x4xf32>
    %188 = arith.maximumf %185, %187 : vector<8x4xf32>
    %189 = vector.extract_strided_slice %188 {offsets = [0, 0], sizes = [2, 4], strides = [1, 1]} : vector<8x4xf32> to vector<2x4xf32>
    %c7_102 = arith.constant 7 : index
    %c0_103 = arith.constant 0 : index
    %c0_104 = arith.constant 0 : index
    %190 = vector.load %arg4[%c7_102, %c0_103, %c0_104] : memref<32x2x4xf32, #tpu.memory_space<vmem>>, vector<1x2x4xf32>
    %191 = vector.shape_cast %190 : vector<1x2x4xf32> to vector<2x4xf32>
    %192 = vector.shape_cast %189 : vector<2x4xf32> to vector<1x2x4xf32>
    tpu.vector_store %arg4[%c7_102, %c0_103, %c0_104], %192 {strides = array<i32>} : memref<32x2x4xf32, #tpu.memory_space<vmem>>, vector<1x2x4xf32>,
    %c8 = arith.constant 8 : index
    %c0_105 = arith.constant 0 : index
    %c0_106 = arith.constant 0 : index
    %193 = vector.load %arg2[%c8, %c0_105, %c0_106] : memref<32x32x4xbf16, #tpu.memory_space<vmem>>, vector<1x32x4xbf16>
    %194 = vector.shape_cast %193 : vector<1x32x4xbf16> to vector<32x4xbf16>
    %cst_107 = arith.constant dense<0.000000e+00> : vector<8x4xf32>
    %195 = tpu.matmul %0, %194, %cst_107 {dimension_numbers = #tpu.dot_dimension_numbers<[1], [0], [0], [1], [0, 0, 1, 1], [], []>} : vector<8x32xbf16>, vector<32x4xbf16>, vector<8x4xf32> -> vector<8x4xf32>
    %c8_108 = arith.constant 8 : index
    %c0_109 = arith.constant 0 : index
    %c0_110 = arith.constant 0 : index
    %196 = vector.load %arg3[%c8_108, %c0_109, %c0_110] : memref<32x1x4xf32, #tpu.memory_space<vmem>>, vector<1x1x4xf32>
    %197 = vector.shape_cast %196 : vector<1x1x4xf32> to vector<1x4xf32>
    %198 = vector.broadcast %197 : vector<1x4xf32> to vector<8x4xf32>
    %199 = arith.addf %195, %198 : vector<8x4xf32>
    %200 = arith.mulf %199, %199 : vector<8x4xf32>
    %cst_111 = arith.constant dense<0.000000e+00> : vector<8xf32>
    %201 = vector.multi_reduction <add>, %200, %cst_111 [1] : vector<8x4xf32> to vector<8xf32>
    %202 = vector.shape_cast %201 : vector<8xf32> to vector<8x1xf32>
    %cst_112 = arith.constant 2.500000e-01 : f32
    %203 = vector.broadcast %cst_112 : f32 to vector<8x1xf32>
    %204 = arith.mulf %202, %203 : vector<8x1xf32>
    %cst_113 = arith.constant 9.99999993E-9 : f32
    %205 = vector.broadcast %cst_113 : f32 to vector<8x1xf32>
    %206 = arith.addf %204, %205 : vector<8x1xf32>
    %207 = math.rsqrt %206 : vector<8x1xf32>
    %208 = vector.broadcast %207 : vector<8x1xf32> to vector<8x4xf32>
    %209 = arith.mulf %199, %208 : vector<8x4xf32>
    %cst_114 = arith.constant 2.000000e-01 : f32
    %210 = vector.broadcast %cst_114 : f32 to vector<8x4xf32>
    %211 = arith.mulf %210, %209 : vector<8x4xf32>
    %212 = arith.maximumf %209, %211 : vector<8x4xf32>
    %213 = vector.extract_strided_slice %212 {offsets = [0, 0], sizes = [2, 4], strides = [1, 1]} : vector<8x4xf32> to vector<2x4xf32>
    %c8_115 = arith.constant 8 : index
    %c0_116 = arith.constant 0 : index
    %c0_117 = arith.constant 0 : index
    %214 = vector.load %arg4[%c8_115, %c0_116, %c0_117] : memref<32x2x4xf32, #tpu.memory_space<vmem>>, vector<1x2x4xf32>
    %215 = vector.shape_cast %214 : vector<1x2x4xf32> to vector<2x4xf32>
    %216 = vector.shape_cast %213 : vector<2x4xf32> to vector<1x2x4xf32>
    tpu.vector_store %arg4[%c8_115, %c0_116, %c0_117], %216 {strides = array<i32>} : memref<32x2x4xf32, #tpu.memory_space<vmem>>, vector<1x2x4xf32>,
    %c9 = arith.constant 9 : index
    %c0_118 = arith.constant 0 : index
    %c0_119 = arith.constant 0 : index
    %217 = vector.load %arg2[%c9, %c0_118, %c0_119] : memref<32x32x4xbf16, #tpu.memory_space<vmem>>, vector<1x32x4xbf16>
    %218 = vector.shape_cast %217 : vector<1x32x4xbf16> to vector<32x4xbf16>
    %cst_120 = arith.constant dense<0.000000e+00> : vector<8x4xf32>
    %219 = tpu.matmul %0, %218, %cst_120 {dimension_numbers = #tpu.dot_dimension_numbers<[1], [0], [0], [1], [0, 0, 1, 1], [], []>} : vector<8x32xbf16>, vector<32x4xbf16>, vector<8x4xf32> -> vector<8x4xf32>
    %c9_121 = arith.constant 9 : index
    %c0_122 = arith.constant 0 : index
    %c0_123 = arith.constant 0 : index
    %220 = vector.load %arg3[%c9_121, %c0_122, %c0_123] : memref<32x1x4xf32, #tpu.memory_space<vmem>>, vector<1x1x4xf32>
    %221 = vector.shape_cast %220 : vector<1x1x4xf32> to vector<1x4xf32>
    %222 = vector.broadcast %221 : vector<1x4xf32> to vector<8x4xf32>
    %223 = arith.addf %219, %222 : vector<8x4xf32>
    %224 = arith.mulf %223, %223 : vector<8x4xf32>
    %cst_124 = arith.constant dense<0.000000e+00> : vector<8xf32>
    %225 = vector.multi_reduction <add>, %224, %cst_124 [1] : vector<8x4xf32> to vector<8xf32>
    %226 = vector.shape_cast %225 : vector<8xf32> to vector<8x1xf32>
    %cst_125 = arith.constant 2.500000e-01 : f32
    %227 = vector.broadcast %cst_125 : f32 to vector<8x1xf32>
    %228 = arith.mulf %226, %227 : vector<8x1xf32>
    %cst_126 = arith.constant 9.99999993E-9 : f32
    %229 = vector.broadcast %cst_126 : f32 to vector<8x1xf32>
    %230 = arith.addf %228, %229 : vector<8x1xf32>
    %231 = math.rsqrt %230 : vector<8x1xf32>
    %232 = vector.broadcast %231 : vector<8x1xf32> to vector<8x4xf32>
    %233 = arith.mulf %223, %232 : vector<8x4xf32>
    %cst_127 = arith.constant 2.000000e-01 : f32
    %234 = vector.broadcast %cst_127 : f32 to vector<8x4xf32>
    %235 = arith.mulf %234, %233 : vector<8x4xf32>
    %236 = arith.maximumf %233, %235 : vector<8x4xf32>
    %237 = vector.extract_strided_slice %236 {offsets = [0, 0], sizes = [2, 4], strides = [1, 1]} : vector<8x4xf32> to vector<2x4xf32>
    %c9_128 = arith.constant 9 : index
    %c0_129 = arith.constant 0 : index
    %c0_130 = arith.constant 0 : index
    %238 = vector.load %arg4[%c9_128, %c0_129, %c0_130] : memref<32x2x4xf32, #tpu.memory_space<vmem>>, vector<1x2x4xf32>
    %239 = vector.shape_cast %238 : vector<1x2x4xf32> to vector<2x4xf32>
    %240 = vector.shape_cast %237 : vector<2x4xf32> to vector<1x2x4xf32>
    tpu.vector_store %arg4[%c9_128, %c0_129, %c0_130], %240 {strides = array<i32>} : memref<32x2x4xf32, #tpu.memory_space<vmem>>, vector<1x2x4xf32>,
    %c10 = arith.constant 10 : index
    %c0_131 = arith.constant 0 : index
    %c0_132 = arith.constant 0 : index
    %241 = vector.load %arg2[%c10, %c0_131, %c0_132] : memref<32x32x4xbf16, #tpu.memory_space<vmem>>, vector<1x32x4xbf16>
    %242 = vector.shape_cast %241 : vector<1x32x4xbf16> to vector<32x4xbf16>
    %cst_133 = arith.constant dense<0.000000e+00> : vector<8x4xf32>
    %243 = tpu.matmul %0, %242, %cst_133 {dimension_numbers = #tpu.dot_dimension_numbers<[1], [0], [0], [1], [0, 0, 1, 1], [], []>} : vector<8x32xbf16>, vector<32x4xbf16>, vector<8x4xf32> -> vector<8x4xf32>
    %c10_134 = arith.constant 10 : index
    %c0_135 = arith.constant 0 : index
    %c0_136 = arith.constant 0 : index
    %244 = vector.load %arg3[%c10_134, %c0_135, %c0_136] : memref<32x1x4xf32, #tpu.memory_space<vmem>>, vector<1x1x4xf32>
    %245 = vector.shape_cast %244 : vector<1x1x4xf32> to vector<1x4xf32>
    %246 = vector.broadcast %245 : vector<1x4xf32> to vector<8x4xf32>
    %247 = arith.addf %243, %246 : vector<8x4xf32>
    %248 = arith.mulf %247, %247 : vector<8x4xf32>
    %cst_137 = arith.constant dense<0.000000e+00> : vector<8xf32>
    %249 = vector.multi_reduction <add>, %248, %cst_137 [1] : vector<8x4xf32> to vector<8xf32>
    %250 = vector.shape_cast %249 : vector<8xf32> to vector<8x1xf32>
    %cst_138 = arith.constant 2.500000e-01 : f32
    %251 = vector.broadcast %cst_138 : f32 to vector<8x1xf32>
    %252 = arith.mulf %250, %251 : vector<8x1xf32>
    %cst_139 = arith.constant 9.99999993E-9 : f32
    %253 = vector.broadcast %cst_139 : f32 to vector<8x1xf32>
    %254 = arith.addf %252, %253 : vector<8x1xf32>
    %255 = math.rsqrt %254 : vector<8x1xf32>
    %256 = vector.broadcast %255 : vector<8x1xf32> to vector<8x4xf32>
    %257 = arith.mulf %247, %256 : vector<8x4xf32>
    %cst_140 = arith.constant 2.000000e-01 : f32
    %258 = vector.broadcast %cst_140 : f32 to vector<8x4xf32>
    %259 = arith.mulf %258, %257 : vector<8x4xf32>
    %260 = arith.maximumf %257, %259 : vector<8x4xf32>
    %261 = vector.extract_strided_slice %260 {offsets = [0, 0], sizes = [2, 4], strides = [1, 1]} : vector<8x4xf32> to vector<2x4xf32>
    %c10_141 = arith.constant 10 : index
    %c0_142 = arith.constant 0 : index
    %c0_143 = arith.constant 0 : index
    %262 = vector.load %arg4[%c10_141, %c0_142, %c0_143] : memref<32x2x4xf32, #tpu.memory_space<vmem>>, vector<1x2x4xf32>
    %263 = vector.shape_cast %262 : vector<1x2x4xf32> to vector<2x4xf32>
    %264 = vector.shape_cast %261 : vector<2x4xf32> to vector<1x2x4xf32>
    tpu.vector_store %arg4[%c10_141, %c0_142, %c0_143], %264 {strides = array<i32>} : memref<32x2x4xf32, #tpu.memory_space<vmem>>, vector<1x2x4xf32>,
    %c11 = arith.constant 11 : index
    %c0_144 = arith.constant 0 : index
    %c0_145 = arith.constant 0 : index
    %265 = vector.load %arg2[%c11, %c0_144, %c0_145] : memref<32x32x4xbf16, #tpu.memory_space<vmem>>, vector<1x32x4xbf16>
    %266 = vector.shape_cast %265 : vector<1x32x4xbf16> to vector<32x4xbf16>
    %cst_146 = arith.constant dense<0.000000e+00> : vector<8x4xf32>
    %267 = tpu.matmul %0, %266, %cst_146 {dimension_numbers = #tpu.dot_dimension_numbers<[1], [0], [0], [1], [0, 0, 1, 1], [], []>} : vector<8x32xbf16>, vector<32x4xbf16>, vector<8x4xf32> -> vector<8x4xf32>
    %c11_147 = arith.constant 11 : index
    %c0_148 = arith.constant 0 : index
    %c0_149 = arith.constant 0 : index
    %268 = vector.load %arg3[%c11_147, %c0_148, %c0_149] : memref<32x1x4xf32, #tpu.memory_space<vmem>>, vector<1x1x4xf32>
    %269 = vector.shape_cast %268 : vector<1x1x4xf32> to vector<1x4xf32>
    %270 = vector.broadcast %269 : vector<1x4xf32> to vector<8x4xf32>
    %271 = arith.addf %267, %270 : vector<8x4xf32>
    %272 = arith.mulf %271, %271 : vector<8x4xf32>
    %cst_150 = arith.constant dense<0.000000e+00> : vector<8xf32>
    %273 = vector.multi_reduction <add>, %272, %cst_150 [1] : vector<8x4xf32> to vector<8xf32>
    %274 = vector.shape_cast %273 : vector<8xf32> to vector<8x1xf32>
    %cst_151 = arith.constant 2.500000e-01 : f32
    %275 = vector.broadcast %cst_151 : f32 to vector<8x1xf32>
    %276 = arith.mulf %274, %275 : vector<8x1xf32>
    %cst_152 = arith.constant 9.99999993E-9 : f32
    %277 = vector.broadcast %cst_152 : f32 to vector<8x1xf32>
    %278 = arith.addf %276, %277 : vector<8x1xf32>
    %279 = math.rsqrt %278 : vector<8x1xf32>
    %280 = vector.broadcast %279 : vector<8x1xf32> to vector<8x4xf32>
    %281 = arith.mulf %271, %280 : vector<8x4xf32>
    %cst_153 = arith.constant 2.000000e-01 : f32
    %282 = vector.broadcast %cst_153 : f32 to vector<8x4xf32>
    %283 = arith.mulf %282, %281 : vector<8x4xf32>
    %284 = arith.maximumf %281, %283 : vector<8x4xf32>
    %285 = vector.extract_strided_slice %284 {offsets = [0, 0], sizes = [2, 4], strides = [1, 1]} : vector<8x4xf32> to vector<2x4xf32>
    %c11_154 = arith.constant 11 : index
    %c0_155 = arith.constant 0 : index
    %c0_156 = arith.constant 0 : index
    %286 = vector.load %arg4[%c11_154, %c0_155, %c0_156] : memref<32x2x4xf32, #tpu.memory_space<vmem>>, vector<1x2x4xf32>
    %287 = vector.shape_cast %286 : vector<1x2x4xf32> to vector<2x4xf32>
    %288 = vector.shape_cast %285 : vector<2x4xf32> to vector<1x2x4xf32>
    tpu.vector_store %arg4[%c11_154, %c0_155, %c0_156], %288 {strides = array<i32>} : memref<32x2x4xf32, #tpu.memory_space<vmem>>, vector<1x2x4xf32>,
    %c12 = arith.constant 12 : index
    %c0_157 = arith.constant 0 : index
    %c0_158 = arith.constant 0 : index
    %289 = vector.load %arg2[%c12, %c0_157, %c0_158] : memref<32x32x4xbf16, #tpu.memory_space<vmem>>, vector<1x32x4xbf16>
    %290 = vector.shape_cast %289 : vector<1x32x4xbf16> to vector<32x4xbf16>
    %cst_159 = arith.constant dense<0.000000e+00> : vector<8x4xf32>
    %291 = tpu.matmul %0, %290, %cst_159 {dimension_numbers = #tpu.dot_dimension_numbers<[1], [0], [0], [1], [0, 0, 1, 1], [], []>} : vector<8x32xbf16>, vector<32x4xbf16>, vector<8x4xf32> -> vector<8x4xf32>
    %c12_160 = arith.constant 12 : index
    %c0_161 = arith.constant 0 : index
    %c0_162 = arith.constant 0 : index
    %292 = vector.load %arg3[%c12_160, %c0_161, %c0_162] : memref<32x1x4xf32, #tpu.memory_space<vmem>>, vector<1x1x4xf32>
    %293 = vector.shape_cast %292 : vector<1x1x4xf32> to vector<1x4xf32>
    %294 = vector.broadcast %293 : vector<1x4xf32> to vector<8x4xf32>
    %295 = arith.addf %291, %294 : vector<8x4xf32>
    %296 = arith.mulf %295, %295 : vector<8x4xf32>
    %cst_163 = arith.constant dense<0.000000e+00> : vector<8xf32>
    %297 = vector.multi_reduction <add>, %296, %cst_163 [1] : vector<8x4xf32> to vector<8xf32>
    %298 = vector.shape_cast %297 : vector<8xf32> to vector<8x1xf32>
    %cst_164 = arith.constant 2.500000e-01 : f32
    %299 = vector.broadcast %cst_164 : f32 to vector<8x1xf32>
    %300 = arith.mulf %298, %299 : vector<8x1xf32>
    %cst_165 = arith.constant 9.99999993E-9 : f32
    %301 = vector.broadcast %cst_165 : f32 to vector<8x1xf32>
    %302 = arith.addf %300, %301 : vector<8x1xf32>
    %303 = math.rsqrt %302 : vector<8x1xf32>
    %304 = vector.broadcast %303 : vector<8x1xf32> to vector<8x4xf32>
    %305 = arith.mulf %295, %304 : vector<8x4xf32>
    %cst_166 = arith.constant 2.000000e-01 : f32
    %306 = vector.broadcast %cst_166 : f32 to vector<8x4xf32>
    %307 = arith.mulf %306, %305 : vector<8x4xf32>
    %308 = arith.maximumf %305, %307 : vector<8x4xf32>
    %309 = vector.extract_strided_slice %308 {offsets = [0, 0], sizes = [2, 4], strides = [1, 1]} : vector<8x4xf32> to vector<2x4xf32>
    %c12_167 = arith.constant 12 : index
    %c0_168 = arith.constant 0 : index
    %c0_169 = arith.constant 0 : index
    %310 = vector.load %arg4[%c12_167, %c0_168, %c0_169] : memref<32x2x4xf32, #tpu.memory_space<vmem>>, vector<1x2x4xf32>
    %311 = vector.shape_cast %310 : vector<1x2x4xf32> to vector<2x4xf32>
    %312 = vector.shape_cast %309 : vector<2x4xf32> to vector<1x2x4xf32>
    tpu.vector_store %arg4[%c12_167, %c0_168, %c0_169], %312 {strides = array<i32>} : memref<32x2x4xf32, #tpu.memory_space<vmem>>, vector<1x2x4xf32>,
    %c13 = arith.constant 13 : index
    %c0_170 = arith.constant 0 : index
    %c0_171 = arith.constant 0 : index
    %313 = vector.load %arg2[%c13, %c0_170, %c0_171] : memref<32x32x4xbf16, #tpu.memory_space<vmem>>, vector<1x32x4xbf16>
    %314 = vector.shape_cast %313 : vector<1x32x4xbf16> to vector<32x4xbf16>
    %cst_172 = arith.constant dense<0.000000e+00> : vector<8x4xf32>
    %315 = tpu.matmul %0, %314, %cst_172 {dimension_numbers = #tpu.dot_dimension_numbers<[1], [0], [0], [1], [0, 0, 1, 1], [], []>} : vector<8x32xbf16>, vector<32x4xbf16>, vector<8x4xf32> -> vector<8x4xf32>
    %c13_173 = arith.constant 13 : index
    %c0_174 = arith.constant 0 : index
    %c0_175 = arith.constant 0 : index
    %316 = vector.load %arg3[%c13_173, %c0_174, %c0_175] : memref<32x1x4xf32, #tpu.memory_space<vmem>>, vector<1x1x4xf32>
    %317 = vector.shape_cast %316 : vector<1x1x4xf32> to vector<1x4xf32>
    %318 = vector.broadcast %317 : vector<1x4xf32> to vector<8x4xf32>
    %319 = arith.addf %315, %318 : vector<8x4xf32>
    %320 = arith.mulf %319, %319 : vector<8x4xf32>
    %cst_176 = arith.constant dense<0.000000e+00> : vector<8xf32>
    %321 = vector.multi_reduction <add>, %320, %cst_176 [1] : vector<8x4xf32> to vector<8xf32>
    %322 = vector.shape_cast %321 : vector<8xf32> to vector<8x1xf32>
    %cst_177 = arith.constant 2.500000e-01 : f32
    %323 = vector.broadcast %cst_177 : f32 to vector<8x1xf32>
    %324 = arith.mulf %322, %323 : vector<8x1xf32>
    %cst_178 = arith.constant 9.99999993E-9 : f32
    %325 = vector.broadcast %cst_178 : f32 to vector<8x1xf32>
    %326 = arith.addf %324, %325 : vector<8x1xf32>
    %327 = math.rsqrt %326 : vector<8x1xf32>
    %328 = vector.broadcast %327 : vector<8x1xf32> to vector<8x4xf32>
    %329 = arith.mulf %319, %328 : vector<8x4xf32>
    %cst_179 = arith.constant 2.000000e-01 : f32
    %330 = vector.broadcast %cst_179 : f32 to vector<8x4xf32>
    %331 = arith.mulf %330, %329 : vector<8x4xf32>
    %332 = arith.maximumf %329, %331 : vector<8x4xf32>
    %333 = vector.extract_strided_slice %332 {offsets = [0, 0], sizes = [2, 4], strides = [1, 1]} : vector<8x4xf32> to vector<2x4xf32>
    %c13_180 = arith.constant 13 : index
    %c0_181 = arith.constant 0 : index
    %c0_182 = arith.constant 0 : index
    %334 = vector.load %arg4[%c13_180, %c0_181, %c0_182] : memref<32x2x4xf32, #tpu.memory_space<vmem>>, vector<1x2x4xf32>
    %335 = vector.shape_cast %334 : vector<1x2x4xf32> to vector<2x4xf32>
    %336 = vector.shape_cast %333 : vector<2x4xf32> to vector<1x2x4xf32>
    tpu.vector_store %arg4[%c13_180, %c0_181, %c0_182], %336 {strides = array<i32>} : memref<32x2x4xf32, #tpu.memory_space<vmem>>, vector<1x2x4xf32>,
    %c14 = arith.constant 14 : index
    %c0_183 = arith.constant 0 : index
    %c0_184 = arith.constant 0 : index
    %337 = vector.load %arg2[%c14, %c0_183, %c0_184] : memref<32x32x4xbf16, #tpu.memory_space<vmem>>, vector<1x32x4xbf16>
    %338 = vector.shape_cast %337 : vector<1x32x4xbf16> to vector<32x4xbf16>
    %cst_185 = arith.constant dense<0.000000e+00> : vector<8x4xf32>
    %339 = tpu.matmul %0, %338, %cst_185 {dimension_numbers = #tpu.dot_dimension_numbers<[1], [0], [0], [1], [0, 0, 1, 1], [], []>} : vector<8x32xbf16>, vector<32x4xbf16>, vector<8x4xf32> -> vector<8x4xf32>
    %c14_186 = arith.constant 14 : index
    %c0_187 = arith.constant 0 : index
    %c0_188 = arith.constant 0 : index
    %340 = vector.load %arg3[%c14_186, %c0_187, %c0_188] : memref<32x1x4xf32, #tpu.memory_space<vmem>>, vector<1x1x4xf32>
    %341 = vector.shape_cast %340 : vector<1x1x4xf32> to vector<1x4xf32>
    %342 = vector.broadcast %341 : vector<1x4xf32> to vector<8x4xf32>
    %343 = arith.addf %339, %342 : vector<8x4xf32>
    %344 = arith.mulf %343, %343 : vector<8x4xf32>
    %cst_189 = arith.constant dense<0.000000e+00> : vector<8xf32>
    %345 = vector.multi_reduction <add>, %344, %cst_189 [1] : vector<8x4xf32> to vector<8xf32>
    %346 = vector.shape_cast %345 : vector<8xf32> to vector<8x1xf32>
    %cst_190 = arith.constant 2.500000e-01 : f32
    %347 = vector.broadcast %cst_190 : f32 to vector<8x1xf32>
    %348 = arith.mulf %346, %347 : vector<8x1xf32>
    %cst_191 = arith.constant 9.99999993E-9 : f32
    %349 = vector.broadcast %cst_191 : f32 to vector<8x1xf32>
    %350 = arith.addf %348, %349 : vector<8x1xf32>
    %351 = math.rsqrt %350 : vector<8x1xf32>
    %352 = vector.broadcast %351 : vector<8x1xf32> to vector<8x4xf32>
    %353 = arith.mulf %343, %352 : vector<8x4xf32>
    %cst_192 = arith.constant 2.000000e-01 : f32
    %354 = vector.broadcast %cst_192 : f32 to vector<8x4xf32>
    %355 = arith.mulf %354, %353 : vector<8x4xf32>
    %356 = arith.maximumf %353, %355 : vector<8x4xf32>
    %357 = vector.extract_strided_slice %356 {offsets = [0, 0], sizes = [2, 4], strides = [1, 1]} : vector<8x4xf32> to vector<2x4xf32>
    %c14_193 = arith.constant 14 : index
    %c0_194 = arith.constant 0 : index
    %c0_195 = arith.constant 0 : index
    %358 = vector.load %arg4[%c14_193, %c0_194, %c0_195] : memref<32x2x4xf32, #tpu.memory_space<vmem>>, vector<1x2x4xf32>
    %359 = vector.shape_cast %358 : vector<1x2x4xf32> to vector<2x4xf32>
    %360 = vector.shape_cast %357 : vector<2x4xf32> to vector<1x2x4xf32>
    tpu.vector_store %arg4[%c14_193, %c0_194, %c0_195], %360 {strides = array<i32>} : memref<32x2x4xf32, #tpu.memory_space<vmem>>, vector<1x2x4xf32>,
    %c15 = arith.constant 15 : index
    %c0_196 = arith.constant 0 : index
    %c0_197 = arith.constant 0 : index
    %361 = vector.load %arg2[%c15, %c0_196, %c0_197] : memref<32x32x4xbf16, #tpu.memory_space<vmem>>, vector<1x32x4xbf16>
    %362 = vector.shape_cast %361 : vector<1x32x4xbf16> to vector<32x4xbf16>
    %cst_198 = arith.constant dense<0.000000e+00> : vector<8x4xf32>
    %363 = tpu.matmul %0, %362, %cst_198 {dimension_numbers = #tpu.dot_dimension_numbers<[1], [0], [0], [1], [0, 0, 1, 1], [], []>} : vector<8x32xbf16>, vector<32x4xbf16>, vector<8x4xf32> -> vector<8x4xf32>
    %c15_199 = arith.constant 15 : index
    %c0_200 = arith.constant 0 : index
    %c0_201 = arith.constant 0 : index
    %364 = vector.load %arg3[%c15_199, %c0_200, %c0_201] : memref<32x1x4xf32, #tpu.memory_space<vmem>>, vector<1x1x4xf32>
    %365 = vector.shape_cast %364 : vector<1x1x4xf32> to vector<1x4xf32>
    %366 = vector.broadcast %365 : vector<1x4xf32> to vector<8x4xf32>
    %367 = arith.addf %363, %366 : vector<8x4xf32>
    %368 = arith.mulf %367, %367 : vector<8x4xf32>
    %cst_202 = arith.constant dense<0.000000e+00> : vector<8xf32>
    %369 = vector.multi_reduction <add>, %368, %cst_202 [1] : vector<8x4xf32> to vector<8xf32>
    %370 = vector.shape_cast %369 : vector<8xf32> to vector<8x1xf32>
    %cst_203 = arith.constant 2.500000e-01 : f32
    %371 = vector.broadcast %cst_203 : f32 to vector<8x1xf32>
    %372 = arith.mulf %370, %371 : vector<8x1xf32>
    %cst_204 = arith.constant 9.99999993E-9 : f32
    %373 = vector.broadcast %cst_204 : f32 to vector<8x1xf32>
    %374 = arith.addf %372, %373 : vector<8x1xf32>
    %375 = math.rsqrt %374 : vector<8x1xf32>
    %376 = vector.broadcast %375 : vector<8x1xf32> to vector<8x4xf32>
    %377 = arith.mulf %367, %376 : vector<8x4xf32>
    %cst_205 = arith.constant 2.000000e-01 : f32
    %378 = vector.broadcast %cst_205 : f32 to vector<8x4xf32>
    %379 = arith.mulf %378, %377 : vector<8x4xf32>
    %380 = arith.maximumf %377, %379 : vector<8x4xf32>
    %381 = vector.extract_strided_slice %380 {offsets = [0, 0], sizes = [2, 4], strides = [1, 1]} : vector<8x4xf32> to vector<2x4xf32>
    %c15_206 = arith.constant 15 : index
    %c0_207 = arith.constant 0 : index
    %c0_208 = arith.constant 0 : index
    %382 = vector.load %arg4[%c15_206, %c0_207, %c0_208] : memref<32x2x4xf32, #tpu.memory_space<vmem>>, vector<1x2x4xf32>
    %383 = vector.shape_cast %382 : vector<1x2x4xf32> to vector<2x4xf32>
    %384 = vector.shape_cast %381 : vector<2x4xf32> to vector<1x2x4xf32>
    tpu.vector_store %arg4[%c15_206, %c0_207, %c0_208], %384 {strides = array<i32>} : memref<32x2x4xf32, #tpu.memory_space<vmem>>, vector<1x2x4xf32>,
    %c16 = arith.constant 16 : index
    %c0_209 = arith.constant 0 : index
    %c0_210 = arith.constant 0 : index
    %385 = vector.load %arg2[%c16, %c0_209, %c0_210] : memref<32x32x4xbf16, #tpu.memory_space<vmem>>, vector<1x32x4xbf16>
    %386 = vector.shape_cast %385 : vector<1x32x4xbf16> to vector<32x4xbf16>
    %cst_211 = arith.constant dense<0.000000e+00> : vector<8x4xf32>
    %387 = tpu.matmul %0, %386, %cst_211 {dimension_numbers = #tpu.dot_dimension_numbers<[1], [0], [0], [1], [0, 0, 1, 1], [], []>} : vector<8x32xbf16>, vector<32x4xbf16>, vector<8x4xf32> -> vector<8x4xf32>
    %c16_212 = arith.constant 16 : index
    %c0_213 = arith.constant 0 : index
    %c0_214 = arith.constant 0 : index
    %388 = vector.load %arg3[%c16_212, %c0_213, %c0_214] : memref<32x1x4xf32, #tpu.memory_space<vmem>>, vector<1x1x4xf32>
    %389 = vector.shape_cast %388 : vector<1x1x4xf32> to vector<1x4xf32>
    %390 = vector.broadcast %389 : vector<1x4xf32> to vector<8x4xf32>
    %391 = arith.addf %387, %390 : vector<8x4xf32>
    %392 = arith.mulf %391, %391 : vector<8x4xf32>
    %cst_215 = arith.constant dense<0.000000e+00> : vector<8xf32>
    %393 = vector.multi_reduction <add>, %392, %cst_215 [1] : vector<8x4xf32> to vector<8xf32>
    %394 = vector.shape_cast %393 : vector<8xf32> to vector<8x1xf32>
    %cst_216 = arith.constant 2.500000e-01 : f32
    %395 = vector.broadcast %cst_216 : f32 to vector<8x1xf32>
    %396 = arith.mulf %394, %395 : vector<8x1xf32>
    %cst_217 = arith.constant 9.99999993E-9 : f32
    %397 = vector.broadcast %cst_217 : f32 to vector<8x1xf32>
    %398 = arith.addf %396, %397 : vector<8x1xf32>
    %399 = math.rsqrt %398 : vector<8x1xf32>
    %400 = vector.broadcast %399 : vector<8x1xf32> to vector<8x4xf32>
    %401 = arith.mulf %391, %400 : vector<8x4xf32>
    %cst_218 = arith.constant 2.000000e-01 : f32
    %402 = vector.broadcast %cst_218 : f32 to vector<8x4xf32>
    %403 = arith.mulf %402, %401 : vector<8x4xf32>
    %404 = arith.maximumf %401, %403 : vector<8x4xf32>
    %405 = vector.extract_strided_slice %404 {offsets = [0, 0], sizes = [2, 4], strides = [1, 1]} : vector<8x4xf32> to vector<2x4xf32>
    %c16_219 = arith.constant 16 : index
    %c0_220 = arith.constant 0 : index
    %c0_221 = arith.constant 0 : index
    %406 = vector.load %arg4[%c16_219, %c0_220, %c0_221] : memref<32x2x4xf32, #tpu.memory_space<vmem>>, vector<1x2x4xf32>
    %407 = vector.shape_cast %406 : vector<1x2x4xf32> to vector<2x4xf32>
    %408 = vector.shape_cast %405 : vector<2x4xf32> to vector<1x2x4xf32>
    tpu.vector_store %arg4[%c16_219, %c0_220, %c0_221], %408 {strides = array<i32>} : memref<32x2x4xf32, #tpu.memory_space<vmem>>, vector<1x2x4xf32>,
    %c17 = arith.constant 17 : index
    %c0_222 = arith.constant 0 : index
    %c0_223 = arith.constant 0 : index
    %409 = vector.load %arg2[%c17, %c0_222, %c0_223] : memref<32x32x4xbf16, #tpu.memory_space<vmem>>, vector<1x32x4xbf16>
    %410 = vector.shape_cast %409 : vector<1x32x4xbf16> to vector<32x4xbf16>
    %cst_224 = arith.constant dense<0.000000e+00> : vector<8x4xf32>
    %411 = tpu.matmul %0, %410, %cst_224 {dimension_numbers = #tpu.dot_dimension_numbers<[1], [0], [0], [1], [0, 0, 1, 1], [], []>} : vector<8x32xbf16>, vector<32x4xbf16>, vector<8x4xf32> -> vector<8x4xf32>
    %c17_225 = arith.constant 17 : index
    %c0_226 = arith.constant 0 : index
    %c0_227 = arith.constant 0 : index
    %412 = vector.load %arg3[%c17_225, %c0_226, %c0_227] : memref<32x1x4xf32, #tpu.memory_space<vmem>>, vector<1x1x4xf32>
    %413 = vector.shape_cast %412 : vector<1x1x4xf32> to vector<1x4xf32>
    %414 = vector.broadcast %413 : vector<1x4xf32> to vector<8x4xf32>
    %415 = arith.addf %411, %414 : vector<8x4xf32>
    %416 = arith.mulf %415, %415 : vector<8x4xf32>
    %cst_228 = arith.constant dense<0.000000e+00> : vector<8xf32>
    %417 = vector.multi_reduction <add>, %416, %cst_228 [1] : vector<8x4xf32> to vector<8xf32>
    %418 = vector.shape_cast %417 : vector<8xf32> to vector<8x1xf32>
    %cst_229 = arith.constant 2.500000e-01 : f32
    %419 = vector.broadcast %cst_229 : f32 to vector<8x1xf32>
    %420 = arith.mulf %418, %419 : vector<8x1xf32>
    %cst_230 = arith.constant 9.99999993E-9 : f32
    %421 = vector.broadcast %cst_230 : f32 to vector<8x1xf32>
    %422 = arith.addf %420, %421 : vector<8x1xf32>
    %423 = math.rsqrt %422 : vector<8x1xf32>
    %424 = vector.broadcast %423 : vector<8x1xf32> to vector<8x4xf32>
    %425 = arith.mulf %415, %424 : vector<8x4xf32>
    %cst_231 = arith.constant 2.000000e-01 : f32
    %426 = vector.broadcast %cst_231 : f32 to vector<8x4xf32>
    %427 = arith.mulf %426, %425 : vector<8x4xf32>
    %428 = arith.maximumf %425, %427 : vector<8x4xf32>
    %429 = vector.extract_strided_slice %428 {offsets = [0, 0], sizes = [2, 4], strides = [1, 1]} : vector<8x4xf32> to vector<2x4xf32>
    %c17_232 = arith.constant 17 : index
    %c0_233 = arith.constant 0 : index
    %c0_234 = arith.constant 0 : index
    %430 = vector.load %arg4[%c17_232, %c0_233, %c0_234] : memref<32x2x4xf32, #tpu.memory_space<vmem>>, vector<1x2x4xf32>
    %431 = vector.shape_cast %430 : vector<1x2x4xf32> to vector<2x4xf32>
    %432 = vector.shape_cast %429 : vector<2x4xf32> to vector<1x2x4xf32>
    tpu.vector_store %arg4[%c17_232, %c0_233, %c0_234], %432 {strides = array<i32>} : memref<32x2x4xf32, #tpu.memory_space<vmem>>, vector<1x2x4xf32>,
    %c18 = arith.constant 18 : index
    %c0_235 = arith.constant 0 : index
    %c0_236 = arith.constant 0 : index
    %433 = vector.load %arg2[%c18, %c0_235, %c0_236] : memref<32x32x4xbf16, #tpu.memory_space<vmem>>, vector<1x32x4xbf16>
    %434 = vector.shape_cast %433 : vector<1x32x4xbf16> to vector<32x4xbf16>
    %cst_237 = arith.constant dense<0.000000e+00> : vector<8x4xf32>
    %435 = tpu.matmul %0, %434, %cst_237 {dimension_numbers = #tpu.dot_dimension_numbers<[1], [0], [0], [1], [0, 0, 1, 1], [], []>} : vector<8x32xbf16>, vector<32x4xbf16>, vector<8x4xf32> -> vector<8x4xf32>
    %c18_238 = arith.constant 18 : index
    %c0_239 = arith.constant 0 : index
    %c0_240 = arith.constant 0 : index
    %436 = vector.load %arg3[%c18_238, %c0_239, %c0_240] : memref<32x1x4xf32, #tpu.memory_space<vmem>>, vector<1x1x4xf32>
    %437 = vector.shape_cast %436 : vector<1x1x4xf32> to vector<1x4xf32>
    %438 = vector.broadcast %437 : vector<1x4xf32> to vector<8x4xf32>
    %439 = arith.addf %435, %438 : vector<8x4xf32>
    %440 = arith.mulf %439, %439 : vector<8x4xf32>
    %cst_241 = arith.constant dense<0.000000e+00> : vector<8xf32>
    %441 = vector.multi_reduction <add>, %440, %cst_241 [1] : vector<8x4xf32> to vector<8xf32>
    %442 = vector.shape_cast %441 : vector<8xf32> to vector<8x1xf32>
    %cst_242 = arith.constant 2.500000e-01 : f32
    %443 = vector.broadcast %cst_242 : f32 to vector<8x1xf32>
    %444 = arith.mulf %442, %443 : vector<8x1xf32>
    %cst_243 = arith.constant 9.99999993E-9 : f32
    %445 = vector.broadcast %cst_243 : f32 to vector<8x1xf32>
    %446 = arith.addf %444, %445 : vector<8x1xf32>
    %447 = math.rsqrt %446 : vector<8x1xf32>
    %448 = vector.broadcast %447 : vector<8x1xf32> to vector<8x4xf32>
    %449 = arith.mulf %439, %448 : vector<8x4xf32>
    %cst_244 = arith.constant 2.000000e-01 : f32
    %450 = vector.broadcast %cst_244 : f32 to vector<8x4xf32>
    %451 = arith.mulf %450, %449 : vector<8x4xf32>
    %452 = arith.maximumf %449, %451 : vector<8x4xf32>
    %453 = vector.extract_strided_slice %452 {offsets = [0, 0], sizes = [2, 4], strides = [1, 1]} : vector<8x4xf32> to vector<2x4xf32>
    %c18_245 = arith.constant 18 : index
    %c0_246 = arith.constant 0 : index
    %c0_247 = arith.constant 0 : index
    %454 = vector.load %arg4[%c18_245, %c0_246, %c0_247] : memref<32x2x4xf32, #tpu.memory_space<vmem>>, vector<1x2x4xf32>
    %455 = vector.shape_cast %454 : vector<1x2x4xf32> to vector<2x4xf32>
    %456 = vector.shape_cast %453 : vector<2x4xf32> to vector<1x2x4xf32>
    tpu.vector_store %arg4[%c18_245, %c0_246, %c0_247], %456 {strides = array<i32>} : memref<32x2x4xf32, #tpu.memory_space<vmem>>, vector<1x2x4xf32>,
    %c19 = arith.constant 19 : index
    %c0_248 = arith.constant 0 : index
    %c0_249 = arith.constant 0 : index
    %457 = vector.load %arg2[%c19, %c0_248, %c0_249] : memref<32x32x4xbf16, #tpu.memory_space<vmem>>, vector<1x32x4xbf16>
    %458 = vector.shape_cast %457 : vector<1x32x4xbf16> to vector<32x4xbf16>
    %cst_250 = arith.constant dense<0.000000e+00> : vector<8x4xf32>
    %459 = tpu.matmul %0, %458, %cst_250 {dimension_numbers = #tpu.dot_dimension_numbers<[1], [0], [0], [1], [0, 0, 1, 1], [], []>} : vector<8x32xbf16>, vector<32x4xbf16>, vector<8x4xf32> -> vector<8x4xf32>
    %c19_251 = arith.constant 19 : index
    %c0_252 = arith.constant 0 : index
    %c0_253 = arith.constant 0 : index
    %460 = vector.load %arg3[%c19_251, %c0_252, %c0_253] : memref<32x1x4xf32, #tpu.memory_space<vmem>>, vector<1x1x4xf32>
    %461 = vector.shape_cast %460 : vector<1x1x4xf32> to vector<1x4xf32>
    %462 = vector.broadcast %461 : vector<1x4xf32> to vector<8x4xf32>
    %463 = arith.addf %459, %462 : vector<8x4xf32>
    %464 = arith.mulf %463, %463 : vector<8x4xf32>
    %cst_254 = arith.constant dense<0.000000e+00> : vector<8xf32>
    %465 = vector.multi_reduction <add>, %464, %cst_254 [1] : vector<8x4xf32> to vector<8xf32>
    %466 = vector.shape_cast %465 : vector<8xf32> to vector<8x1xf32>
    %cst_255 = arith.constant 2.500000e-01 : f32
    %467 = vector.broadcast %cst_255 : f32 to vector<8x1xf32>
    %468 = arith.mulf %466, %467 : vector<8x1xf32>
    %cst_256 = arith.constant 9.99999993E-9 : f32
    %469 = vector.broadcast %cst_256 : f32 to vector<8x1xf32>
    %470 = arith.addf %468, %469 : vector<8x1xf32>
    %471 = math.rsqrt %470 : vector<8x1xf32>
    %472 = vector.broadcast %471 : vector<8x1xf32> to vector<8x4xf32>
    %473 = arith.mulf %463, %472 : vector<8x4xf32>
    %cst_257 = arith.constant 2.000000e-01 : f32
    %474 = vector.broadcast %cst_257 : f32 to vector<8x4xf32>
    %475 = arith.mulf %474, %473 : vector<8x4xf32>
    %476 = arith.maximumf %473, %475 : vector<8x4xf32>
    %477 = vector.extract_strided_slice %476 {offsets = [0, 0], sizes = [2, 4], strides = [1, 1]} : vector<8x4xf32> to vector<2x4xf32>
    %c19_258 = arith.constant 19 : index
    %c0_259 = arith.constant 0 : index
    %c0_260 = arith.constant 0 : index
    %478 = vector.load %arg4[%c19_258, %c0_259, %c0_260] : memref<32x2x4xf32, #tpu.memory_space<vmem>>, vector<1x2x4xf32>
    %479 = vector.shape_cast %478 : vector<1x2x4xf32> to vector<2x4xf32>
    %480 = vector.shape_cast %477 : vector<2x4xf32> to vector<1x2x4xf32>
    tpu.vector_store %arg4[%c19_258, %c0_259, %c0_260], %480 {strides = array<i32>} : memref<32x2x4xf32, #tpu.memory_space<vmem>>, vector<1x2x4xf32>,
    %c20 = arith.constant 20 : index
    %c0_261 = arith.constant 0 : index
    %c0_262 = arith.constant 0 : index
    %481 = vector.load %arg2[%c20, %c0_261, %c0_262] : memref<32x32x4xbf16, #tpu.memory_space<vmem>>, vector<1x32x4xbf16>
    %482 = vector.shape_cast %481 : vector<1x32x4xbf16> to vector<32x4xbf16>
    %cst_263 = arith.constant dense<0.000000e+00> : vector<8x4xf32>
    %483 = tpu.matmul %0, %482, %cst_263 {dimension_numbers = #tpu.dot_dimension_numbers<[1], [0], [0], [1], [0, 0, 1, 1], [], []>} : vector<8x32xbf16>, vector<32x4xbf16>, vector<8x4xf32> -> vector<8x4xf32>
    %c20_264 = arith.constant 20 : index
    %c0_265 = arith.constant 0 : index
    %c0_266 = arith.constant 0 : index
    %484 = vector.load %arg3[%c20_264, %c0_265, %c0_266] : memref<32x1x4xf32, #tpu.memory_space<vmem>>, vector<1x1x4xf32>
    %485 = vector.shape_cast %484 : vector<1x1x4xf32> to vector<1x4xf32>
    %486 = vector.broadcast %485 : vector<1x4xf32> to vector<8x4xf32>
    %487 = arith.addf %483, %486 : vector<8x4xf32>
    %488 = arith.mulf %487, %487 : vector<8x4xf32>
    %cst_267 = arith.constant dense<0.000000e+00> : vector<8xf32>
    %489 = vector.multi_reduction <add>, %488, %cst_267 [1] : vector<8x4xf32> to vector<8xf32>
    %490 = vector.shape_cast %489 : vector<8xf32> to vector<8x1xf32>
    %cst_268 = arith.constant 2.500000e-01 : f32
    %491 = vector.broadcast %cst_268 : f32 to vector<8x1xf32>
    %492 = arith.mulf %490, %491 : vector<8x1xf32>
    %cst_269 = arith.constant 9.99999993E-9 : f32
    %493 = vector.broadcast %cst_269 : f32 to vector<8x1xf32>
    %494 = arith.addf %492, %493 : vector<8x1xf32>
    %495 = math.rsqrt %494 : vector<8x1xf32>
    %496 = vector.broadcast %495 : vector<8x1xf32> to vector<8x4xf32>
    %497 = arith.mulf %487, %496 : vector<8x4xf32>
    %cst_270 = arith.constant 2.000000e-01 : f32
    %498 = vector.broadcast %cst_270 : f32 to vector<8x4xf32>
    %499 = arith.mulf %498, %497 : vector<8x4xf32>
    %500 = arith.maximumf %497, %499 : vector<8x4xf32>
    %501 = vector.extract_strided_slice %500 {offsets = [0, 0], sizes = [2, 4], strides = [1, 1]} : vector<8x4xf32> to vector<2x4xf32>
    %c20_271 = arith.constant 20 : index
    %c0_272 = arith.constant 0 : index
    %c0_273 = arith.constant 0 : index
    %502 = vector.load %arg4[%c20_271, %c0_272, %c0_273] : memref<32x2x4xf32, #tpu.memory_space<vmem>>, vector<1x2x4xf32>
    %503 = vector.shape_cast %502 : vector<1x2x4xf32> to vector<2x4xf32>
    %504 = vector.shape_cast %501 : vector<2x4xf32> to vector<1x2x4xf32>
    tpu.vector_store %arg4[%c20_271, %c0_272, %c0_273], %504 {strides = array<i32>} : memref<32x2x4xf32, #tpu.memory_space<vmem>>, vector<1x2x4xf32>,
    %c21 = arith.constant 21 : index
    %c0_274 = arith.constant 0 : index
    %c0_275 = arith.constant 0 : index
    %505 = vector.load %arg2[%c21, %c0_274, %c0_275] : memref<32x32x4xbf16, #tpu.memory_space<vmem>>, vector<1x32x4xbf16>
    %506 = vector.shape_cast %505 : vector<1x32x4xbf16> to vector<32x4xbf16>
    %cst_276 = arith.constant dense<0.000000e+00> : vector<8x4xf32>
    %507 = tpu.matmul %0, %506, %cst_276 {dimension_numbers = #tpu.dot_dimension_numbers<[1], [0], [0], [1], [0, 0, 1, 1], [], []>} : vector<8x32xbf16>, vector<32x4xbf16>, vector<8x4xf32> -> vector<8x4xf32>
    %c21_277 = arith.constant 21 : index
    %c0_278 = arith.constant 0 : index
    %c0_279 = arith.constant 0 : index
    %508 = vector.load %arg3[%c21_277, %c0_278, %c0_279] : memref<32x1x4xf32, #tpu.memory_space<vmem>>, vector<1x1x4xf32>
    %509 = vector.shape_cast %508 : vector<1x1x4xf32> to vector<1x4xf32>
    %510 = vector.broadcast %509 : vector<1x4xf32> to vector<8x4xf32>
    %511 = arith.addf %507, %510 : vector<8x4xf32>
    %512 = arith.mulf %511, %511 : vector<8x4xf32>
    %cst_280 = arith.constant dense<0.000000e+00> : vector<8xf32>
    %513 = vector.multi_reduction <add>, %512, %cst_280 [1] : vector<8x4xf32> to vector<8xf32>
    %514 = vector.shape_cast %513 : vector<8xf32> to vector<8x1xf32>
    %cst_281 = arith.constant 2.500000e-01 : f32
    %515 = vector.broadcast %cst_281 : f32 to vector<8x1xf32>
    %516 = arith.mulf %514, %515 : vector<8x1xf32>
    %cst_282 = arith.constant 9.99999993E-9 : f32
    %517 = vector.broadcast %cst_282 : f32 to vector<8x1xf32>
    %518 = arith.addf %516, %517 : vector<8x1xf32>
    %519 = math.rsqrt %518 : vector<8x1xf32>
    %520 = vector.broadcast %519 : vector<8x1xf32> to vector<8x4xf32>
    %521 = arith.mulf %511, %520 : vector<8x4xf32>
    %cst_283 = arith.constant 2.000000e-01 : f32
    %522 = vector.broadcast %cst_283 : f32 to vector<8x4xf32>
    %523 = arith.mulf %522, %521 : vector<8x4xf32>
    %524 = arith.maximumf %521, %523 : vector<8x4xf32>
    %525 = vector.extract_strided_slice %524 {offsets = [0, 0], sizes = [2, 4], strides = [1, 1]} : vector<8x4xf32> to vector<2x4xf32>
    %c21_284 = arith.constant 21 : index
    %c0_285 = arith.constant 0 : index
    %c0_286 = arith.constant 0 : index
    %526 = vector.load %arg4[%c21_284, %c0_285, %c0_286] : memref<32x2x4xf32, #tpu.memory_space<vmem>>, vector<1x2x4xf32>
    %527 = vector.shape_cast %526 : vector<1x2x4xf32> to vector<2x4xf32>
    %528 = vector.shape_cast %525 : vector<2x4xf32> to vector<1x2x4xf32>
    tpu.vector_store %arg4[%c21_284, %c0_285, %c0_286], %528 {strides = array<i32>} : memref<32x2x4xf32, #tpu.memory_space<vmem>>, vector<1x2x4xf32>,
    %c22 = arith.constant 22 : index
    %c0_287 = arith.constant 0 : index
    %c0_288 = arith.constant 0 : index
    %529 = vector.load %arg2[%c22, %c0_287, %c0_288] : memref<32x32x4xbf16, #tpu.memory_space<vmem>>, vector<1x32x4xbf16>
    %530 = vector.shape_cast %529 : vector<1x32x4xbf16> to vector<32x4xbf16>
    %cst_289 = arith.constant dense<0.000000e+00> : vector<8x4xf32>
    %531 = tpu.matmul %0, %530, %cst_289 {dimension_numbers = #tpu.dot_dimension_numbers<[1], [0], [0], [1], [0, 0, 1, 1], [], []>} : vector<8x32xbf16>, vector<32x4xbf16>, vector<8x4xf32> -> vector<8x4xf32>
    %c22_290 = arith.constant 22 : index
    %c0_291 = arith.constant 0 : index
    %c0_292 = arith.constant 0 : index
    %532 = vector.load %arg3[%c22_290, %c0_291, %c0_292] : memref<32x1x4xf32, #tpu.memory_space<vmem>>, vector<1x1x4xf32>
    %533 = vector.shape_cast %532 : vector<1x1x4xf32> to vector<1x4xf32>
    %534 = vector.broadcast %533 : vector<1x4xf32> to vector<8x4xf32>
    %535 = arith.addf %531, %534 : vector<8x4xf32>
    %536 = arith.mulf %535, %535 : vector<8x4xf32>
    %cst_293 = arith.constant dense<0.000000e+00> : vector<8xf32>
    %537 = vector.multi_reduction <add>, %536, %cst_293 [1] : vector<8x4xf32> to vector<8xf32>
    %538 = vector.shape_cast %537 : vector<8xf32> to vector<8x1xf32>
    %cst_294 = arith.constant 2.500000e-01 : f32
    %539 = vector.broadcast %cst_294 : f32 to vector<8x1xf32>
    %540 = arith.mulf %538, %539 : vector<8x1xf32>
    %cst_295 = arith.constant 9.99999993E-9 : f32
    %541 = vector.broadcast %cst_295 : f32 to vector<8x1xf32>
    %542 = arith.addf %540, %541 : vector<8x1xf32>
    %543 = math.rsqrt %542 : vector<8x1xf32>
    %544 = vector.broadcast %543 : vector<8x1xf32> to vector<8x4xf32>
    %545 = arith.mulf %535, %544 : vector<8x4xf32>
    %cst_296 = arith.constant 2.000000e-01 : f32
    %546 = vector.broadcast %cst_296 : f32 to vector<8x4xf32>
    %547 = arith.mulf %546, %545 : vector<8x4xf32>
    %548 = arith.maximumf %545, %547 : vector<8x4xf32>
    %549 = vector.extract_strided_slice %548 {offsets = [0, 0], sizes = [2, 4], strides = [1, 1]} : vector<8x4xf32> to vector<2x4xf32>
    %c22_297 = arith.constant 22 : index
    %c0_298 = arith.constant 0 : index
    %c0_299 = arith.constant 0 : index
    %550 = vector.load %arg4[%c22_297, %c0_298, %c0_299] : memref<32x2x4xf32, #tpu.memory_space<vmem>>, vector<1x2x4xf32>
    %551 = vector.shape_cast %550 : vector<1x2x4xf32> to vector<2x4xf32>
    %552 = vector.shape_cast %549 : vector<2x4xf32> to vector<1x2x4xf32>
    tpu.vector_store %arg4[%c22_297, %c0_298, %c0_299], %552 {strides = array<i32>} : memref<32x2x4xf32, #tpu.memory_space<vmem>>, vector<1x2x4xf32>,
    %c23 = arith.constant 23 : index
    %c0_300 = arith.constant 0 : index
    %c0_301 = arith.constant 0 : index
    %553 = vector.load %arg2[%c23, %c0_300, %c0_301] : memref<32x32x4xbf16, #tpu.memory_space<vmem>>, vector<1x32x4xbf16>
    %554 = vector.shape_cast %553 : vector<1x32x4xbf16> to vector<32x4xbf16>
    %cst_302 = arith.constant dense<0.000000e+00> : vector<8x4xf32>
    %555 = tpu.matmul %0, %554, %cst_302 {dimension_numbers = #tpu.dot_dimension_numbers<[1], [0], [0], [1], [0, 0, 1, 1], [], []>} : vector<8x32xbf16>, vector<32x4xbf16>, vector<8x4xf32> -> vector<8x4xf32>
    %c23_303 = arith.constant 23 : index
    %c0_304 = arith.constant 0 : index
    %c0_305 = arith.constant 0 : index
    %556 = vector.load %arg3[%c23_303, %c0_304, %c0_305] : memref<32x1x4xf32, #tpu.memory_space<vmem>>, vector<1x1x4xf32>
    %557 = vector.shape_cast %556 : vector<1x1x4xf32> to vector<1x4xf32>
    %558 = vector.broadcast %557 : vector<1x4xf32> to vector<8x4xf32>
    %559 = arith.addf %555, %558 : vector<8x4xf32>
    %560 = arith.mulf %559, %559 : vector<8x4xf32>
    %cst_306 = arith.constant dense<0.000000e+00> : vector<8xf32>
    %561 = vector.multi_reduction <add>, %560, %cst_306 [1] : vector<8x4xf32> to vector<8xf32>
    %562 = vector.shape_cast %561 : vector<8xf32> to vector<8x1xf32>
    %cst_307 = arith.constant 2.500000e-01 : f32
    %563 = vector.broadcast %cst_307 : f32 to vector<8x1xf32>
    %564 = arith.mulf %562, %563 : vector<8x1xf32>
    %cst_308 = arith.constant 9.99999993E-9 : f32
    %565 = vector.broadcast %cst_308 : f32 to vector<8x1xf32>
    %566 = arith.addf %564, %565 : vector<8x1xf32>
    %567 = math.rsqrt %566 : vector<8x1xf32>
    %568 = vector.broadcast %567 : vector<8x1xf32> to vector<8x4xf32>
    %569 = arith.mulf %559, %568 : vector<8x4xf32>
    %cst_309 = arith.constant 2.000000e-01 : f32
    %570 = vector.broadcast %cst_309 : f32 to vector<8x4xf32>
    %571 = arith.mulf %570, %569 : vector<8x4xf32>
    %572 = arith.maximumf %569, %571 : vector<8x4xf32>
    %573 = vector.extract_strided_slice %572 {offsets = [0, 0], sizes = [2, 4], strides = [1, 1]} : vector<8x4xf32> to vector<2x4xf32>
    %c23_310 = arith.constant 23 : index
    %c0_311 = arith.constant 0 : index
    %c0_312 = arith.constant 0 : index
    %574 = vector.load %arg4[%c23_310, %c0_311, %c0_312] : memref<32x2x4xf32, #tpu.memory_space<vmem>>, vector<1x2x4xf32>
    %575 = vector.shape_cast %574 : vector<1x2x4xf32> to vector<2x4xf32>
    %576 = vector.shape_cast %573 : vector<2x4xf32> to vector<1x2x4xf32>
    tpu.vector_store %arg4[%c23_310, %c0_311, %c0_312], %576 {strides = array<i32>} : memref<32x2x4xf32, #tpu.memory_space<vmem>>, vector<1x2x4xf32>,
    %c24 = arith.constant 24 : index
    %c0_313 = arith.constant 0 : index
    %c0_314 = arith.constant 0 : index
    %577 = vector.load %arg2[%c24, %c0_313, %c0_314] : memref<32x32x4xbf16, #tpu.memory_space<vmem>>, vector<1x32x4xbf16>
    %578 = vector.shape_cast %577 : vector<1x32x4xbf16> to vector<32x4xbf16>
    %cst_315 = arith.constant dense<0.000000e+00> : vector<8x4xf32>
    %579 = tpu.matmul %0, %578, %cst_315 {dimension_numbers = #tpu.dot_dimension_numbers<[1], [0], [0], [1], [0, 0, 1, 1], [], []>} : vector<8x32xbf16>, vector<32x4xbf16>, vector<8x4xf32> -> vector<8x4xf32>
    %c24_316 = arith.constant 24 : index
    %c0_317 = arith.constant 0 : index
    %c0_318 = arith.constant 0 : index
    %580 = vector.load %arg3[%c24_316, %c0_317, %c0_318] : memref<32x1x4xf32, #tpu.memory_space<vmem>>, vector<1x1x4xf32>
    %581 = vector.shape_cast %580 : vector<1x1x4xf32> to vector<1x4xf32>
    %582 = vector.broadcast %581 : vector<1x4xf32> to vector<8x4xf32>
    %583 = arith.addf %579, %582 : vector<8x4xf32>
    %584 = arith.mulf %583, %583 : vector<8x4xf32>
    %cst_319 = arith.constant dense<0.000000e+00> : vector<8xf32>
    %585 = vector.multi_reduction <add>, %584, %cst_319 [1] : vector<8x4xf32> to vector<8xf32>
    %586 = vector.shape_cast %585 : vector<8xf32> to vector<8x1xf32>
    %cst_320 = arith.constant 2.500000e-01 : f32
    %587 = vector.broadcast %cst_320 : f32 to vector<8x1xf32>
    %588 = arith.mulf %586, %587 : vector<8x1xf32>
    %cst_321 = arith.constant 9.99999993E-9 : f32
    %589 = vector.broadcast %cst_321 : f32 to vector<8x1xf32>
    %590 = arith.addf %588, %589 : vector<8x1xf32>
    %591 = math.rsqrt %590 : vector<8x1xf32>
    %592 = vector.broadcast %591 : vector<8x1xf32> to vector<8x4xf32>
    %593 = arith.mulf %583, %592 : vector<8x4xf32>
    %cst_322 = arith.constant 2.000000e-01 : f32
    %594 = vector.broadcast %cst_322 : f32 to vector<8x4xf32>
    %595 = arith.mulf %594, %593 : vector<8x4xf32>
    %596 = arith.maximumf %593, %595 : vector<8x4xf32>
    %597 = vector.extract_strided_slice %596 {offsets = [0, 0], sizes = [2, 4], strides = [1, 1]} : vector<8x4xf32> to vector<2x4xf32>
    %c24_323 = arith.constant 24 : index
    %c0_324 = arith.constant 0 : index
    %c0_325 = arith.constant 0 : index
    %598 = vector.load %arg4[%c24_323, %c0_324, %c0_325] : memref<32x2x4xf32, #tpu.memory_space<vmem>>, vector<1x2x4xf32>
    %599 = vector.shape_cast %598 : vector<1x2x4xf32> to vector<2x4xf32>
    %600 = vector.shape_cast %597 : vector<2x4xf32> to vector<1x2x4xf32>
    tpu.vector_store %arg4[%c24_323, %c0_324, %c0_325], %600 {strides = array<i32>} : memref<32x2x4xf32, #tpu.memory_space<vmem>>, vector<1x2x4xf32>,
    %c25 = arith.constant 25 : index
    %c0_326 = arith.constant 0 : index
    %c0_327 = arith.constant 0 : index
    %601 = vector.load %arg2[%c25, %c0_326, %c0_327] : memref<32x32x4xbf16, #tpu.memory_space<vmem>>, vector<1x32x4xbf16>
    %602 = vector.shape_cast %601 : vector<1x32x4xbf16> to vector<32x4xbf16>
    %cst_328 = arith.constant dense<0.000000e+00> : vector<8x4xf32>
    %603 = tpu.matmul %0, %602, %cst_328 {dimension_numbers = #tpu.dot_dimension_numbers<[1], [0], [0], [1], [0, 0, 1, 1], [], []>} : vector<8x32xbf16>, vector<32x4xbf16>, vector<8x4xf32> -> vector<8x4xf32>
    %c25_329 = arith.constant 25 : index
    %c0_330 = arith.constant 0 : index
    %c0_331 = arith.constant 0 : index
    %604 = vector.load %arg3[%c25_329, %c0_330, %c0_331] : memref<32x1x4xf32, #tpu.memory_space<vmem>>, vector<1x1x4xf32>
    %605 = vector.shape_cast %604 : vector<1x1x4xf32> to vector<1x4xf32>
    %606 = vector.broadcast %605 : vector<1x4xf32> to vector<8x4xf32>
    %607 = arith.addf %603, %606 : vector<8x4xf32>
    %608 = arith.mulf %607, %607 : vector<8x4xf32>
    %cst_332 = arith.constant dense<0.000000e+00> : vector<8xf32>
    %609 = vector.multi_reduction <add>, %608, %cst_332 [1] : vector<8x4xf32> to vector<8xf32>
    %610 = vector.shape_cast %609 : vector<8xf32> to vector<8x1xf32>
    %cst_333 = arith.constant 2.500000e-01 : f32
    %611 = vector.broadcast %cst_333 : f32 to vector<8x1xf32>
    %612 = arith.mulf %610, %611 : vector<8x1xf32>
    %cst_334 = arith.constant 9.99999993E-9 : f32
    %613 = vector.broadcast %cst_334 : f32 to vector<8x1xf32>
    %614 = arith.addf %612, %613 : vector<8x1xf32>
    %615 = math.rsqrt %614 : vector<8x1xf32>
    %616 = vector.broadcast %615 : vector<8x1xf32> to vector<8x4xf32>
    %617 = arith.mulf %607, %616 : vector<8x4xf32>
    %cst_335 = arith.constant 2.000000e-01 : f32
    %618 = vector.broadcast %cst_335 : f32 to vector<8x4xf32>
    %619 = arith.mulf %618, %617 : vector<8x4xf32>
    %620 = arith.maximumf %617, %619 : vector<8x4xf32>
    %621 = vector.extract_strided_slice %620 {offsets = [0, 0], sizes = [2, 4], strides = [1, 1]} : vector<8x4xf32> to vector<2x4xf32>
    %c25_336 = arith.constant 25 : index
    %c0_337 = arith.constant 0 : index
    %c0_338 = arith.constant 0 : index
    %622 = vector.load %arg4[%c25_336, %c0_337, %c0_338] : memref<32x2x4xf32, #tpu.memory_space<vmem>>, vector<1x2x4xf32>
    %623 = vector.shape_cast %622 : vector<1x2x4xf32> to vector<2x4xf32>
    %624 = vector.shape_cast %621 : vector<2x4xf32> to vector<1x2x4xf32>
    tpu.vector_store %arg4[%c25_336, %c0_337, %c0_338], %624 {strides = array<i32>} : memref<32x2x4xf32, #tpu.memory_space<vmem>>, vector<1x2x4xf32>,
    %c26 = arith.constant 26 : index
    %c0_339 = arith.constant 0 : index
    %c0_340 = arith.constant 0 : index
    %625 = vector.load %arg2[%c26, %c0_339, %c0_340] : memref<32x32x4xbf16, #tpu.memory_space<vmem>>, vector<1x32x4xbf16>
    %626 = vector.shape_cast %625 : vector<1x32x4xbf16> to vector<32x4xbf16>
    %cst_341 = arith.constant dense<0.000000e+00> : vector<8x4xf32>
    %627 = tpu.matmul %0, %626, %cst_341 {dimension_numbers = #tpu.dot_dimension_numbers<[1], [0], [0], [1], [0, 0, 1, 1], [], []>} : vector<8x32xbf16>, vector<32x4xbf16>, vector<8x4xf32> -> vector<8x4xf32>
    %c26_342 = arith.constant 26 : index
    %c0_343 = arith.constant 0 : index
    %c0_344 = arith.constant 0 : index
    %628 = vector.load %arg3[%c26_342, %c0_343, %c0_344] : memref<32x1x4xf32, #tpu.memory_space<vmem>>, vector<1x1x4xf32>
    %629 = vector.shape_cast %628 : vector<1x1x4xf32> to vector<1x4xf32>
    %630 = vector.broadcast %629 : vector<1x4xf32> to vector<8x4xf32>
    %631 = arith.addf %627, %630 : vector<8x4xf32>
    %632 = arith.mulf %631, %631 : vector<8x4xf32>
    %cst_345 = arith.constant dense<0.000000e+00> : vector<8xf32>
    %633 = vector.multi_reduction <add>, %632, %cst_345 [1] : vector<8x4xf32> to vector<8xf32>
    %634 = vector.shape_cast %633 : vector<8xf32> to vector<8x1xf32>
    %cst_346 = arith.constant 2.500000e-01 : f32
    %635 = vector.broadcast %cst_346 : f32 to vector<8x1xf32>
    %636 = arith.mulf %634, %635 : vector<8x1xf32>
    %cst_347 = arith.constant 9.99999993E-9 : f32
    %637 = vector.broadcast %cst_347 : f32 to vector<8x1xf32>
    %638 = arith.addf %636, %637 : vector<8x1xf32>
    %639 = math.rsqrt %638 : vector<8x1xf32>
    %640 = vector.broadcast %639 : vector<8x1xf32> to vector<8x4xf32>
    %641 = arith.mulf %631, %640 : vector<8x4xf32>
    %cst_348 = arith.constant 2.000000e-01 : f32
    %642 = vector.broadcast %cst_348 : f32 to vector<8x4xf32>
    %643 = arith.mulf %642, %641 : vector<8x4xf32>
    %644 = arith.maximumf %641, %643 : vector<8x4xf32>
    %645 = vector.extract_strided_slice %644 {offsets = [0, 0], sizes = [2, 4], strides = [1, 1]} : vector<8x4xf32> to vector<2x4xf32>
    %c26_349 = arith.constant 26 : index
    %c0_350 = arith.constant 0 : index
    %c0_351 = arith.constant 0 : index
    %646 = vector.load %arg4[%c26_349, %c0_350, %c0_351] : memref<32x2x4xf32, #tpu.memory_space<vmem>>, vector<1x2x4xf32>
    %647 = vector.shape_cast %646 : vector<1x2x4xf32> to vector<2x4xf32>
    %648 = vector.shape_cast %645 : vector<2x4xf32> to vector<1x2x4xf32>
    tpu.vector_store %arg4[%c26_349, %c0_350, %c0_351], %648 {strides = array<i32>} : memref<32x2x4xf32, #tpu.memory_space<vmem>>, vector<1x2x4xf32>,
    %c27 = arith.constant 27 : index
    %c0_352 = arith.constant 0 : index
    %c0_353 = arith.constant 0 : index
    %649 = vector.load %arg2[%c27, %c0_352, %c0_353] : memref<32x32x4xbf16, #tpu.memory_space<vmem>>, vector<1x32x4xbf16>
    %650 = vector.shape_cast %649 : vector<1x32x4xbf16> to vector<32x4xbf16>
    %cst_354 = arith.constant dense<0.000000e+00> : vector<8x4xf32>
    %651 = tpu.matmul %0, %650, %cst_354 {dimension_numbers = #tpu.dot_dimension_numbers<[1], [0], [0], [1], [0, 0, 1, 1], [], []>} : vector<8x32xbf16>, vector<32x4xbf16>, vector<8x4xf32> -> vector<8x4xf32>
    %c27_355 = arith.constant 27 : index
    %c0_356 = arith.constant 0 : index
    %c0_357 = arith.constant 0 : index
    %652 = vector.load %arg3[%c27_355, %c0_356, %c0_357] : memref<32x1x4xf32, #tpu.memory_space<vmem>>, vector<1x1x4xf32>
    %653 = vector.shape_cast %652 : vector<1x1x4xf32> to vector<1x4xf32>
    %654 = vector.broadcast %653 : vector<1x4xf32> to vector<8x4xf32>
    %655 = arith.addf %651, %654 : vector<8x4xf32>
    %656 = arith.mulf %655, %655 : vector<8x4xf32>
    %cst_358 = arith.constant dense<0.000000e+00> : vector<8xf32>
    %657 = vector.multi_reduction <add>, %656, %cst_358 [1] : vector<8x4xf32> to vector<8xf32>
    %658 = vector.shape_cast %657 : vector<8xf32> to vector<8x1xf32>
    %cst_359 = arith.constant 2.500000e-01 : f32
    %659 = vector.broadcast %cst_359 : f32 to vector<8x1xf32>
    %660 = arith.mulf %658, %659 : vector<8x1xf32>
    %cst_360 = arith.constant 9.99999993E-9 : f32
    %661 = vector.broadcast %cst_360 : f32 to vector<8x1xf32>
    %662 = arith.addf %660, %661 : vector<8x1xf32>
    %663 = math.rsqrt %662 : vector<8x1xf32>
    %664 = vector.broadcast %663 : vector<8x1xf32> to vector<8x4xf32>
    %665 = arith.mulf %655, %664 : vector<8x4xf32>
    %cst_361 = arith.constant 2.000000e-01 : f32
    %666 = vector.broadcast %cst_361 : f32 to vector<8x4xf32>
    %667 = arith.mulf %666, %665 : vector<8x4xf32>
    %668 = arith.maximumf %665, %667 : vector<8x4xf32>
    %669 = vector.extract_strided_slice %668 {offsets = [0, 0], sizes = [2, 4], strides = [1, 1]} : vector<8x4xf32> to vector<2x4xf32>
    %c27_362 = arith.constant 27 : index
    %c0_363 = arith.constant 0 : index
    %c0_364 = arith.constant 0 : index
    %670 = vector.load %arg4[%c27_362, %c0_363, %c0_364] : memref<32x2x4xf32, #tpu.memory_space<vmem>>, vector<1x2x4xf32>
    %671 = vector.shape_cast %670 : vector<1x2x4xf32> to vector<2x4xf32>
    %672 = vector.shape_cast %669 : vector<2x4xf32> to vector<1x2x4xf32>
    tpu.vector_store %arg4[%c27_362, %c0_363, %c0_364], %672 {strides = array<i32>} : memref<32x2x4xf32, #tpu.memory_space<vmem>>, vector<1x2x4xf32>,
    %c28 = arith.constant 28 : index
    %c0_365 = arith.constant 0 : index
    %c0_366 = arith.constant 0 : index
    %673 = vector.load %arg2[%c28, %c0_365, %c0_366] : memref<32x32x4xbf16, #tpu.memory_space<vmem>>, vector<1x32x4xbf16>
    %674 = vector.shape_cast %673 : vector<1x32x4xbf16> to vector<32x4xbf16>
    %cst_367 = arith.constant dense<0.000000e+00> : vector<8x4xf32>
    %675 = tpu.matmul %0, %674, %cst_367 {dimension_numbers = #tpu.dot_dimension_numbers<[1], [0], [0], [1], [0, 0, 1, 1], [], []>} : vector<8x32xbf16>, vector<32x4xbf16>, vector<8x4xf32> -> vector<8x4xf32>
    %c28_368 = arith.constant 28 : index
    %c0_369 = arith.constant 0 : index
    %c0_370 = arith.constant 0 : index
    %676 = vector.load %arg3[%c28_368, %c0_369, %c0_370] : memref<32x1x4xf32, #tpu.memory_space<vmem>>, vector<1x1x4xf32>
    %677 = vector.shape_cast %676 : vector<1x1x4xf32> to vector<1x4xf32>
    %678 = vector.broadcast %677 : vector<1x4xf32> to vector<8x4xf32>
    %679 = arith.addf %675, %678 : vector<8x4xf32>
    %680 = arith.mulf %679, %679 : vector<8x4xf32>
    %cst_371 = arith.constant dense<0.000000e+00> : vector<8xf32>
    %681 = vector.multi_reduction <add>, %680, %cst_371 [1] : vector<8x4xf32> to vector<8xf32>
    %682 = vector.shape_cast %681 : vector<8xf32> to vector<8x1xf32>
    %cst_372 = arith.constant 2.500000e-01 : f32
    %683 = vector.broadcast %cst_372 : f32 to vector<8x1xf32>
    %684 = arith.mulf %682, %683 : vector<8x1xf32>
    %cst_373 = arith.constant 9.99999993E-9 : f32
    %685 = vector.broadcast %cst_373 : f32 to vector<8x1xf32>
    %686 = arith.addf %684, %685 : vector<8x1xf32>
    %687 = math.rsqrt %686 : vector<8x1xf32>
    %688 = vector.broadcast %687 : vector<8x1xf32> to vector<8x4xf32>
    %689 = arith.mulf %679, %688 : vector<8x4xf32>
    %cst_374 = arith.constant 2.000000e-01 : f32
    %690 = vector.broadcast %cst_374 : f32 to vector<8x4xf32>
    %691 = arith.mulf %690, %689 : vector<8x4xf32>
    %692 = arith.maximumf %689, %691 : vector<8x4xf32>
    %693 = vector.extract_strided_slice %692 {offsets = [0, 0], sizes = [2, 4], strides = [1, 1]} : vector<8x4xf32> to vector<2x4xf32>
    %c28_375 = arith.constant 28 : index
    %c0_376 = arith.constant 0 : index
    %c0_377 = arith.constant 0 : index
    %694 = vector.load %arg4[%c28_375, %c0_376, %c0_377] : memref<32x2x4xf32, #tpu.memory_space<vmem>>, vector<1x2x4xf32>
    %695 = vector.shape_cast %694 : vector<1x2x4xf32> to vector<2x4xf32>
    %696 = vector.shape_cast %693 : vector<2x4xf32> to vector<1x2x4xf32>
    tpu.vector_store %arg4[%c28_375, %c0_376, %c0_377], %696 {strides = array<i32>} : memref<32x2x4xf32, #tpu.memory_space<vmem>>, vector<1x2x4xf32>,
    %c29 = arith.constant 29 : index
    %c0_378 = arith.constant 0 : index
    %c0_379 = arith.constant 0 : index
    %697 = vector.load %arg2[%c29, %c0_378, %c0_379] : memref<32x32x4xbf16, #tpu.memory_space<vmem>>, vector<1x32x4xbf16>
    %698 = vector.shape_cast %697 : vector<1x32x4xbf16> to vector<32x4xbf16>
    %cst_380 = arith.constant dense<0.000000e+00> : vector<8x4xf32>
    %699 = tpu.matmul %0, %698, %cst_380 {dimension_numbers = #tpu.dot_dimension_numbers<[1], [0], [0], [1], [0, 0, 1, 1], [], []>} : vector<8x32xbf16>, vector<32x4xbf16>, vector<8x4xf32> -> vector<8x4xf32>
    %c29_381 = arith.constant 29 : index
    %c0_382 = arith.constant 0 : index
    %c0_383 = arith.constant 0 : index
    %700 = vector.load %arg3[%c29_381, %c0_382, %c0_383] : memref<32x1x4xf32, #tpu.memory_space<vmem>>, vector<1x1x4xf32>
    %701 = vector.shape_cast %700 : vector<1x1x4xf32> to vector<1x4xf32>
    %702 = vector.broadcast %701 : vector<1x4xf32> to vector<8x4xf32>
    %703 = arith.addf %699, %702 : vector<8x4xf32>
    %704 = arith.mulf %703, %703 : vector<8x4xf32>
    %cst_384 = arith.constant dense<0.000000e+00> : vector<8xf32>
    %705 = vector.multi_reduction <add>, %704, %cst_384 [1] : vector<8x4xf32> to vector<8xf32>
    %706 = vector.shape_cast %705 : vector<8xf32> to vector<8x1xf32>
    %cst_385 = arith.constant 2.500000e-01 : f32
    %707 = vector.broadcast %cst_385 : f32 to vector<8x1xf32>
    %708 = arith.mulf %706, %707 : vector<8x1xf32>
    %cst_386 = arith.constant 9.99999993E-9 : f32
    %709 = vector.broadcast %cst_386 : f32 to vector<8x1xf32>
    %710 = arith.addf %708, %709 : vector<8x1xf32>
    %711 = math.rsqrt %710 : vector<8x1xf32>
    %712 = vector.broadcast %711 : vector<8x1xf32> to vector<8x4xf32>
    %713 = arith.mulf %703, %712 : vector<8x4xf32>
    %cst_387 = arith.constant 2.000000e-01 : f32
    %714 = vector.broadcast %cst_387 : f32 to vector<8x4xf32>
    %715 = arith.mulf %714, %713 : vector<8x4xf32>
    %716 = arith.maximumf %713, %715 : vector<8x4xf32>
    %717 = vector.extract_strided_slice %716 {offsets = [0, 0], sizes = [2, 4], strides = [1, 1]} : vector<8x4xf32> to vector<2x4xf32>
    %c29_388 = arith.constant 29 : index
    %c0_389 = arith.constant 0 : index
    %c0_390 = arith.constant 0 : index
    %718 = vector.load %arg4[%c29_388, %c0_389, %c0_390] : memref<32x2x4xf32, #tpu.memory_space<vmem>>, vector<1x2x4xf32>
    %719 = vector.shape_cast %718 : vector<1x2x4xf32> to vector<2x4xf32>
    %720 = vector.shape_cast %717 : vector<2x4xf32> to vector<1x2x4xf32>
    tpu.vector_store %arg4[%c29_388, %c0_389, %c0_390], %720 {strides = array<i32>} : memref<32x2x4xf32, #tpu.memory_space<vmem>>, vector<1x2x4xf32>,
    %c30 = arith.constant 30 : index
    %c0_391 = arith.constant 0 : index
    %c0_392 = arith.constant 0 : index
    %721 = vector.load %arg2[%c30, %c0_391, %c0_392] : memref<32x32x4xbf16, #tpu.memory_space<vmem>>, vector<1x32x4xbf16>
    %722 = vector.shape_cast %721 : vector<1x32x4xbf16> to vector<32x4xbf16>
    %cst_393 = arith.constant dense<0.000000e+00> : vector<8x4xf32>
    %723 = tpu.matmul %0, %722, %cst_393 {dimension_numbers = #tpu.dot_dimension_numbers<[1], [0], [0], [1], [0, 0, 1, 1], [], []>} : vector<8x32xbf16>, vector<32x4xbf16>, vector<8x4xf32> -> vector<8x4xf32>
    %c30_394 = arith.constant 30 : index
    %c0_395 = arith.constant 0 : index
    %c0_396 = arith.constant 0 : index
    %724 = vector.load %arg3[%c30_394, %c0_395, %c0_396] : memref<32x1x4xf32, #tpu.memory_space<vmem>>, vector<1x1x4xf32>
    %725 = vector.shape_cast %724 : vector<1x1x4xf32> to vector<1x4xf32>
    %726 = vector.broadcast %725 : vector<1x4xf32> to vector<8x4xf32>
    %727 = arith.addf %723, %726 : vector<8x4xf32>
    %728 = arith.mulf %727, %727 : vector<8x4xf32>
    %cst_397 = arith.constant dense<0.000000e+00> : vector<8xf32>
    %729 = vector.multi_reduction <add>, %728, %cst_397 [1] : vector<8x4xf32> to vector<8xf32>
    %730 = vector.shape_cast %729 : vector<8xf32> to vector<8x1xf32>
    %cst_398 = arith.constant 2.500000e-01 : f32
    %731 = vector.broadcast %cst_398 : f32 to vector<8x1xf32>
    %732 = arith.mulf %730, %731 : vector<8x1xf32>
    %cst_399 = arith.constant 9.99999993E-9 : f32
    %733 = vector.broadcast %cst_399 : f32 to vector<8x1xf32>
    %734 = arith.addf %732, %733 : vector<8x1xf32>
    %735 = math.rsqrt %734 : vector<8x1xf32>
    %736 = vector.broadcast %735 : vector<8x1xf32> to vector<8x4xf32>
    %737 = arith.mulf %727, %736 : vector<8x4xf32>
    %cst_400 = arith.constant 2.000000e-01 : f32
    %738 = vector.broadcast %cst_400 : f32 to vector<8x4xf32>
    %739 = arith.mulf %738, %737 : vector<8x4xf32>
    %740 = arith.maximumf %737, %739 : vector<8x4xf32>
    %741 = vector.extract_strided_slice %740 {offsets = [0, 0], sizes = [2, 4], strides = [1, 1]} : vector<8x4xf32> to vector<2x4xf32>
    %c30_401 = arith.constant 30 : index
    %c0_402 = arith.constant 0 : index
    %c0_403 = arith.constant 0 : index
    %742 = vector.load %arg4[%c30_401, %c0_402, %c0_403] : memref<32x2x4xf32, #tpu.memory_space<vmem>>, vector<1x2x4xf32>
    %743 = vector.shape_cast %742 : vector<1x2x4xf32> to vector<2x4xf32>
    %744 = vector.shape_cast %741 : vector<2x4xf32> to vector<1x2x4xf32>
    tpu.vector_store %arg4[%c30_401, %c0_402, %c0_403], %744 {strides = array<i32>} : memref<32x2x4xf32, #tpu.memory_space<vmem>>, vector<1x2x4xf32>,
    %c31 = arith.constant 31 : index
    %c0_404 = arith.constant 0 : index
    %c0_405 = arith.constant 0 : index
    %745 = vector.load %arg2[%c31, %c0_404, %c0_405] : memref<32x32x4xbf16, #tpu.memory_space<vmem>>, vector<1x32x4xbf16>
    %746 = vector.shape_cast %745 : vector<1x32x4xbf16> to vector<32x4xbf16>
    %cst_406 = arith.constant dense<0.000000e+00> : vector<8x4xf32>
    %747 = tpu.matmul %0, %746, %cst_406 {dimension_numbers = #tpu.dot_dimension_numbers<[1], [0], [0], [1], [0, 0, 1, 1], [], []>} : vector<8x32xbf16>, vector<32x4xbf16>, vector<8x4xf32> -> vector<8x4xf32>
    %c31_407 = arith.constant 31 : index
    %c0_408 = arith.constant 0 : index
    %c0_409 = arith.constant 0 : index
    %748 = vector.load %arg3[%c31_407, %c0_408, %c0_409] : memref<32x1x4xf32, #tpu.memory_space<vmem>>, vector<1x1x4xf32>
    %749 = vector.shape_cast %748 : vector<1x1x4xf32> to vector<1x4xf32>
    %750 = vector.broadcast %749 : vector<1x4xf32> to vector<8x4xf32>
    %751 = arith.addf %747, %750 : vector<8x4xf32>
    %752 = arith.mulf %751, %751 : vector<8x4xf32>
    %cst_410 = arith.constant dense<0.000000e+00> : vector<8xf32>
    %753 = vector.multi_reduction <add>, %752, %cst_410 [1] : vector<8x4xf32> to vector<8xf32>
    %754 = vector.shape_cast %753 : vector<8xf32> to vector<8x1xf32>
    %cst_411 = arith.constant 2.500000e-01 : f32
    %755 = vector.broadcast %cst_411 : f32 to vector<8x1xf32>
    %756 = arith.mulf %754, %755 : vector<8x1xf32>
    %cst_412 = arith.constant 9.99999993E-9 : f32
    %757 = vector.broadcast %cst_412 : f32 to vector<8x1xf32>
    %758 = arith.addf %756, %757 : vector<8x1xf32>
    %759 = math.rsqrt %758 : vector<8x1xf32>
    %760 = vector.broadcast %759 : vector<8x1xf32> to vector<8x4xf32>
    %761 = arith.mulf %751, %760 : vector<8x4xf32>
    %cst_413 = arith.constant 2.000000e-01 : f32
    %762 = vector.broadcast %cst_413 : f32 to vector<8x4xf32>
    %763 = arith.mulf %762, %761 : vector<8x4xf32>
    %764 = arith.maximumf %761, %763 : vector<8x4xf32>
    %765 = vector.extract_strided_slice %764 {offsets = [0, 0], sizes = [2, 4], strides = [1, 1]} : vector<8x4xf32> to vector<2x4xf32>
    %c31_414 = arith.constant 31 : index
    %c0_415 = arith.constant 0 : index
    %c0_416 = arith.constant 0 : index
    %766 = vector.load %arg4[%c31_414, %c0_415, %c0_416] : memref<32x2x4xf32, #tpu.memory_space<vmem>>, vector<1x2x4xf32>
    %767 = vector.shape_cast %766 : vector<1x2x4xf32> to vector<2x4xf32>
    %768 = vector.shape_cast %765 : vector<2x4xf32> to vector<1x2x4xf32>
    tpu.vector_store %arg4[%c31_414, %c0_415, %c0_416], %768 {strides = array<i32>} : memref<32x2x4xf32, #tpu.memory_space<vmem>>, vector<1x2x4xf32>,
    return
  }
  func.func @transform_0(%arg0: i32) -> (i32, i32) {
    %c0_i32 = arith.constant 0 : i32
    %c0_i32_0 = arith.constant 0 : i32
    %c0_i32_1 = arith.constant 0 : i32
    return %c0_i32, %c0_i32_0 : i32, i32
  }
  func.func @transform_1(%arg0: i32) -> (i32, i32, i32) {
    %c0_i32 = arith.constant 0 : i32
    %c0_i32_0 = arith.constant 0 : i32
    %c0_i32_1 = arith.constant 0 : i32
    return %arg0, %c0_i32, %c0_i32_0 : i32, i32, i32
  }
  func.func @transform_2(%arg0: i32) -> (i32, i32, i32) {
    %c0_i32 = arith.constant 0 : i32
    %c0_i32_0 = arith.constant 0 : i32
    %c0_i32_1 = arith.constant 0 : i32
    return %arg0, %c0_i32, %c0_i32_0 : i32, i32, i32
  }
  func.func @transform_3(%arg0: i32) -> (i32, i32, i32) {
    %c0_i32 = arith.constant 0 : i32
    %c0_i32_0 = arith.constant 0 : i32
    %c0_i32_1 = arith.constant 0 : i32
    return %arg0, %c0_i32, %c0_i32_0 : i32, i32, i32
  }
}

</mosaic_0001>

<llo_original>
// kernel: first_layer_forward.1
$region0: #{first_layer_forward.1}
  #allocation0 [shape = 'u32[]', space=smem, size = 0x4, offset = 0x4, fixed_abs, tag = 'smem constant byte address 0x4 - core index']
  #allocation1 [shape = 'u32[72,128]{1,0:T(1,128)}', space=vmem, size = 0x9000, scoped, tag = 'internal scratch']
  %s0 = inlined_call_operand.vmem [shape: bf16[8,32], index: 0, kind: input, shape index: {}]
  %s1 = inlined_call_operand.vmem [shape: bf16[64,32,4], index: 1, kind: input, shape index: {}]
  %s2 = inlined_call_operand.vmem [shape: f32[64,1,4], index: 2, kind: input, shape index: {}]
  %s3 = inlined_call_operand.vmem [shape: f32[64,2,4], index: 3, kind: output, shape index: {}]
  %s4 = sld [smem:[#allocation0]]
  $region45: #{first_layer_forward.1} parent=0
    _
  %s6 = ssub.s32 1, %s4
  %s7 = scalar_select 0, %s6, %s4
  loop: start=0, step=1, limit=4
  $region2: #{first_layer_forward.1} parent=0 // loop_pre_header
    _
  $region3: #{first_layer_forward.1} parent=0 // loop_header
    %s9 = sphi 0, %s13
    %p10 = scmp.ge.s32.totalorder %s9, 4
    %s17 = sphi 0, %s17
    %s19 = sphi 0, %s17
    %s20 = sphi 0, %s19
    %s34 = sphi 0, %s20
    %s40 = sphi 0, %s42
    %s43 = sphi 0, %s40
    %s44 = sphi 0, %s43
    %s60 = sphi 0, %s44
    %s66 = sphi 0, %s68
    %s69 = sphi 0, %s66
    %s70 = sphi 0, %s69
    %s86 = sphi 0, %s70
    %s92 = sphi 0, %s94
    %s95 = sphi 0, %s92
    %s96 = sphi 0, %s95
    %s112 = sphi 0, %s96
  $region4: #{first_layer_forward.1} parent=0 // loop_header_branch
    %12 = sbr.rel (%p10) target = $region8
  $region5: #{first_layer_forward.1} parent=0 // loop_body
    %s14 = ssub.s32 %s9, 1
    %s15 = ssub.s32 %s9, 2
    %s16 = sadd.s32 %s9, 1
    %s18 = sadd.s32 %s17, 1
    %p21 = scmp.eq.s32.totalorder %s9, 1
    %p22 = scmp.ne.s32.totalorder %s17, %s19
    %p23 = scmp.eq.s32.totalorder %s9, 0
    %p24 = por %p22, %p23
    %p25 = scmp.ne.s32.totalorder %s17, %s19
    %p26 = scmp.eq.s32.totalorder %s14, 1
    %p27 = por %p25, %p26
    %p28 = scmp.ne.s32.totalorder %s19, %s20
    %p29 = scmp.eq.s32.totalorder %s14, 0
    %p30 = por %p28, %p29
    %p31 = scmp.ne.s32.totalorder %s19, %s20
    %p32 = scmp.eq.s32.totalorder %s15, 1
    %p33 = por %p31, %p32
    %p35 = scmp.ne.s32.totalorder %s20, %s34
    %p36 = scmp.eq.s32.totalorder %s15, 0
    %p37 = por %p35, %p36
    %s38 = ssub.s32 %s9, %s16
    %p39 = scmp.eq.s32.totalorder %s38, 0
    %s41 = sadd.s32 %s40, 1
    %s42 = scalar_select %p39, %s40, %s41
    %p45 = pneg %p39
    %p46 = scmp.eq.s32.totalorder %s9, 1
    %p47 = por %p45, %p46
    %p48 = scmp.ne.s32.totalorder %s40, %s43
    %p49 = scmp.eq.s32.totalorder %s9, 0
    %p50 = por %p48, %p49
    %p51 = scmp.ne.s32.totalorder %s40, %s43
    %p52 = scmp.eq.s32.totalorder %s14, 1
    %p53 = por %p51, %p52
    %p54 = scmp.ne.s32.totalorder %s43, %s44
    %p55 = scmp.eq.s32.totalorder %s14, 0
    %p56 = por %p54, %p55
    %p57 = scmp.ne.s32.totalorder %s43, %s44
    %p58 = scmp.eq.s32.totalorder %s15, 1
    %p59 = por %p57, %p58
    %p61 = scmp.ne.s32.totalorder %s44, %s60
    %p62 = scmp.eq.s32.totalorder %s15, 0
    %p63 = por %p61, %p62
    %s64 = ssub.s32 %s9, %s16
    %p65 = scmp.eq.s32.totalorder %s64, 0
    %s67 = sadd.s32 %s66, 1
    %s68 = scalar_select %p65, %s66, %s67
    %p71 = pneg %p65
    %p72 = scmp.eq.s32.totalorder %s9, 1
    %p73 = por %p71, %p72
    %p74 = scmp.ne.s32.totalorder %s66, %s69
    %p75 = scmp.eq.s32.totalorder %s9, 0
    %p76 = por %p74, %p75
    %p77 = scmp.ne.s32.totalorder %s66, %s69
    %p78 = scmp.eq.s32.totalorder %s14, 1
    %p79 = por %p77, %p78
    %p80 = scmp.ne.s32.totalorder %s69, %s70
    %p81 = scmp.eq.s32.totalorder %s14, 0
    %p82 = por %p80, %p81
    %p83 = scmp.ne.s32.totalorder %s69, %s70
    %p84 = scmp.eq.s32.totalorder %s15, 1
    %p85 = por %p83, %p84
    %p87 = scmp.ne.s32.totalorder %s70, %s86
    %p88 = scmp.eq.s32.totalorder %s15, 0
    %p89 = por %p87, %p88
    %s90 = ssub.s32 %s9, %s16
    %p91 = scmp.eq.s32.totalorder %s90, 0
    %s93 = sadd.s32 %s92, 1
    %s94 = scalar_select %p91, %s92, %s93
    %p97 = pneg %p91
    %p98 = scmp.eq.s32.totalorder %s9, 1
    %p99 = por %p97, %p98
    %p100 = scmp.ne.s32.totalorder %s92, %s95
    %p101 = scmp.eq.s32.totalorder %s9, 0
    %p102 = por %p100, %p101
    %p103 = scmp.ne.s32.totalorder %s92, %s95
    %p104 = scmp.eq.s32.totalorder %s14, 1
    %p105 = por %p103, %p104
    %p106 = scmp.ne.s32.totalorder %s95, %s96
    %p107 = scmp.eq.s32.totalorder %s14, 0
    %p108 = por %p106, %p107
    %p109 = scmp.ne.s32.totalorder %s95, %s96
    %p110 = scmp.eq.s32.totalorder %s15, 1
    %p111 = por %p109, %p110
    %p113 = scmp.ne.s32.totalorder %s96, %s112
    %p114 = scmp.eq.s32.totalorder %s15, 0
    %p115 = por %p113, %p114
    %p116 = scmp.le.s32.totalorder 1, %s9
    %p117 = scmp.lt.s32.totalorder %s9, 3
    %p118 = pnand %p116, %p117
    %p119 = pneg %p118
    // Predicated region
    $region9: #{first_layer_forward.1} parent=5 // pred_check
      _
    $region10: #{first_layer_forward.1} parent=5 // pred_check_branch
      %121 = sbr.rel (%p118) target = $region12
    $region11: #{first_layer_forward.1} parent=5 // pred_region
      %s122 = ssub.s32 %s9, 1
      // Predicated region
      $region13: #{first_layer_forward.1} parent=11 // pred_check
        %p123 = pneg %p30
      $region14: #{first_layer_forward.1} parent=11 // pred_check_branch
        %125 = sbr.rel (%p123) target = $region16
      $region15: #{first_layer_forward.1} parent=11 // pred_region
        _
      $region16: #{first_layer_forward.1} parent=11 // pred_fallthru
        _
    $region12: #{first_layer_forward.1} parent=5 // pred_fallthru
      _
    %p126 = scmp.lt.s32.totalorder %s9, 2
    // Predicated region
    $region17: #{first_layer_forward.1} parent=5 // pred_check
      %p127 = pneg %p126
    $region18: #{first_layer_forward.1} parent=5 // pred_check_branch
      %129 = sbr.rel (%p127) target = $region20
    $region19: #{first_layer_forward.1} parent=5 // pred_region
      // Predicated region
      $region21: #{first_layer_forward.1} parent=19 // pred_check
        %p130 = pneg %p50
      $region22: #{first_layer_forward.1} parent=19 // pred_check_branch
        %132 = sbr.rel (%p130) target = $region24
      $region23: #{first_layer_forward.1} parent=19 // pred_region
        %s133 = smul.u32 32, %s9
        %p134 = scmp.lt.s32.totalorder %s133, 63
        %s135 = scalar_select %p134, %s133, 63
        %s136 = smul.addr %s135, 4
        %s137 = smul.addr %s136, 4
        %s138 = scalar_lea.vmem %s1, %s137
        %s139 = smul.u32 32, %s9
      $region24: #{first_layer_forward.1} parent=19 // pred_fallthru
        _
      // Predicated region
      $region25: #{first_layer_forward.1} parent=19 // pred_check
        %p140 = pneg %p76
      $region26: #{first_layer_forward.1} parent=19 // pred_check_branch
        %142 = sbr.rel (%p140) target = $region28
      $region27: #{first_layer_forward.1} parent=19 // pred_region
        %s143 = smul.u32 32, %s9
        %p144 = scmp.lt.s32.totalorder %s143, 63
        %s145 = scalar_select %p144, %s143, 63
        %s146 = scalar_lea.vmem %s2, %s145
        %s147 = smul.u32 32, %s9
      $region28: #{first_layer_forward.1} parent=19 // pred_fallthru
        _
    $region20: #{first_layer_forward.1} parent=5 // pred_fallthru
      _
    %p148 = scmp.le.s32.totalorder 1, %s9
    %p149 = scmp.lt.s32.totalorder %s9, 3
    %p150 = pnand %p148, %p149
    %p151 = pneg %p150
    // Predicated region
    $region29: #{first_layer_forward.1} parent=5 // pred_check
      _
    $region30: #{first_layer_forward.1} parent=5 // pred_check_branch
      %153 = sbr.rel (%p150) target = $region32
    $region31: #{first_layer_forward.1} parent=5 // pred_region
      %s154 = ssub.s32 %s9, 1
      %p155 = pneg %p30
      %p156 = pneg %p27
      %s157 = smul.u32 32, %s14
      %p158 = scmp.lt.s32.totalorder %s157, 63
      %s159 = scalar_select %p158, %s157, 63
      %s160 = smul.addr %s159, 4
      %s161 = smul.addr %s160, 4
      %s162 = scalar_lea.vmem %s1, %s161
      %p163 = pneg %p56
      %p164 = pneg %p53
      %s165 = smul.u32 32, %s14
      %p166 = scmp.lt.s32.totalorder %s165, 63
      %s167 = scalar_select %p166, %s165, 63
      %s168 = scalar_lea.vmem %s2, %s167
      %p169 = pneg %p82
      %p170 = pneg %p79
      %p171 = pneg %p108
      %p172 = pneg %p105
      %s173 = smul.u32 32, %s14
      %p174 = scmp.lt.s32.totalorder %s173, 63
      %s175 = scalar_select %p174, %s173, 63
      %s176 = smul.addr %s175, 2
      %s177 = scalar_lea.vmem %s3, %s176
      %s178 = smul.u32 32, %s14
      %p179 = scmp.lt.s32.totalorder %s178, 63
      %s180 = scalar_select %p179, %s178, 63
      %s181 = smul.addr %s180, 4
      %s182 = smul.addr %s181, 4
      %s183 = scalar_lea.vmem %s1, %s182
      %s184 = smul.u32 32, %s14
      %s185 = smul.u32 32, %s14
      %p186 = scmp.lt.s32.totalorder %s185, 63
      %s187 = scalar_select %p186, %s185, 63
      %s188 = scalar_lea.vmem %s2, %s187
      %s189 = smul.u32 32, %s14
      %s190 = smul.u32 32, %s14
      %p191 = scmp.lt.s32.totalorder %s190, 63
      %s192 = scalar_select %p191, %s190, 63
      %s193 = smul.addr %s192, 2
      %s194 = scalar_lea.vmem %s3, %s193
      %s195 = smul.u32 32, %s14
      %v197 = vld [vmem:[%s0] sm:$0xf]
      %v198 = vld [vmem:[%s183] sm:$0xf]
      %v199 = vld [vmem:[%s183 + $0x4] sm:$0xf]
      %v200 = vld [vmem:[%s183 + $0x8] sm:$0xf]
      %v201 = vld [vmem:[%s183 + $0xc] sm:$0xf]
      %v202 = vld [vmem:[%s188] sm:$0x1]
      %v204 = vperm.slane %v202, 0
      %v210 = vunpack.c.l.b16 %v198
      %v211 = vunpack.c.l.b16 %v199
      %v212 = vunpack.c.l.b16 %v200
      %v213 = vunpack.c.l.b16 %v201
      %v214 = vpack.c.b16 %v211, %v210
      %v215 = vpack.c.b16 %v213, %v212
      %vm218 = vcmask 261120
      %v220 = vsel %vm218, %v197, 0
      %222 = vmatpush.bf16.msra.mxu0 0
      %223 = vmatpush.bf16.msra.mxu0 0
      %224 = vmatpush.bf16.msra.mxu0 0
      %225 = vmatpush.bf16.msra.mxu0 0
      %226 = vmatpush.bf16.msra.mxu0 0
      %227 = vmatpush.bf16.msra.mxu0 0
      %228 = vmatpush.bf16.msra.mxu0 %v215
      %229 = vmatpush.bf16.msra.mxu0 %v214
      %230 = vmatmul.bf16.gmra.mxu0 %v220
      %v231 = vpop.f32.mrf.mxu0
      %v232 = vadd.f32 %v204, %v231
      %v233 = vpop.f32.mrf.mxu0
      %234 = vdwg.mxu0
      %v235 = vmul.f32 %v232, %v232
      %vm236 = vcmask 31744
      %v237 = vsel %vm236, %v235, 0.0
      %238 = vadd.xlane.f32.xlu0 %v237
      %v239 = vpop.xlane.xlu0 %238
      %v240 = vmul.f32 %v239, 0.25
      %v241 = vadd.f32 %v240, 1e-08
      %v242 = vrsqrt.pop %v241
      %v243 = vmul.f32 %v242, %v241
      %v244 = vmul.f32 %v243, %v242
      %v245 = vmul.f32 0.5, %v244
      %v246 = vsub.f32 1.5, %v245
      %v247 = vmul.f32 %v242, %v246
      %vm248 = vweird.f32 %v241
      %vm249 = vweird.f32 %v242
      %vm250 = vmor %vm248, %vm249
      %v251 = vsel %vm250, %v242, %v247
      %v252 = vmul.f32 %v232, %v251
      %v253 = vmul.f32 %v252, 0.2
      %v254 = vmax.f32 %v252, %v253
      %vm255 = vcmask 25600
      %256 = vst.msk [vmem:[%s194] sm:$0x3] %vm255, %v254
      %s257 = scalar_lea.vmem %s183, 16
      %v258 = vld [vmem:[%s257] sm:$0xf]
      %v259 = vld [vmem:[%s257 + $0x4] sm:$0xf]
      %v260 = vld [vmem:[%s257 + $0x8] sm:$0xf]
      %v261 = vld [vmem:[%s257 + $0xc] sm:$0xf]
      %s262 = scalar_lea.vmem %s188, 1
      %v263 = vld [vmem:[%s262] sm:$0x1]
      %v265 = vperm.slane %v263, 0
      %v271 = vunpack.c.l.b16 %v258
      %v272 = vunpack.c.l.b16 %v259
      %v273 = vunpack.c.l.b16 %v260
      %v274 = vunpack.c.l.b16 %v261
      %v275 = vpack.c.b16 %v272, %v271
      %v276 = vpack.c.b16 %v274, %v273
      %279 = vmatpush.bf16.msra.mxu0 0
      %280 = vmatpush.bf16.msra.mxu0 0
      %281 = vmatpush.bf16.msra.mxu0 0
      %282 = vmatpush.bf16.msra.mxu0 0
      %283 = vmatpush.bf16.msra.mxu0 0
      %284 = vmatpush.bf16.msra.mxu0 0
      %285 = vmatpush.bf16.msra.mxu0 %v276
      %286 = vmatpush.bf16.msra.mxu0 %v275
      %287 = vmatmul.bf16.gmra.mxu0 %v220
      %v288 = vpop.f32.mrf.mxu0
      %v289 = vadd.f32 %v265, %v288
      %v290 = vpop.f32.mrf.mxu0
      %291 = vdwg.mxu0
      %v292 = vmul.f32 %v289, %v289
      %v293 = vsel %vm236, %v292, 0.0
      %294 = vadd.xlane.f32.xlu0 %v293
      %v295 = vpop.xlane.xlu0 %294
      %v296 = vmul.f32 %v295, 0.25
      %v297 = vadd.f32 %v296, 1e-08
      %v298 = vrsqrt.pop %v297
      %v299 = vmul.f32 %v298, %v297
      %v300 = vmul.f32 %v299, %v298
      %v301 = vmul.f32 0.5, %v300
      %v302 = vsub.f32 1.5, %v301
      %v303 = vmul.f32 %v298, %v302
      %vm304 = vweird.f32 %v297
      %vm305 = vweird.f32 %v298
      %vm306 = vmor %vm304, %vm305
      %v307 = vsel %vm306, %v298, %v303
      %v308 = vmul.f32 %v289, %v307
      %v309 = vmul.f32 %v308, 0.2
      %v310 = vmax.f32 %v308, %v309
      %s311 = scalar_lea.vmem %s194, 2
      %312 = vst.msk [vmem:[%s311] sm:$0x3] %vm255, %v310
      %s313 = scalar_lea.vmem %s183, 32
      %v314 = vld [vmem:[%s313] sm:$0xf]
      %v315 = vld [vmem:[%s313 + $0x4] sm:$0xf]
      %v316 = vld [vmem:[%s313 + $0x8] sm:$0xf]
      %v317 = vld [vmem:[%s313 + $0xc] sm:$0xf]
      %s318 = scalar_lea.vmem %s188, 2
      %v319 = vld [vmem:[%s318] sm:$0x1]
      %v321 = vperm.slane %v319, 0
      %v327 = vunpack.c.l.b16 %v314
      %v328 = vunpack.c.l.b16 %v315
      %v329 = vunpack.c.l.b16 %v316
      %v330 = vunpack.c.l.b16 %v317
      %v331 = vpack.c.b16 %v328, %v327
      %v332 = vpack.c.b16 %v330, %v329
      %335 = vmatpush.bf16.msra.mxu0 0
      %336 = vmatpush.bf16.msra.mxu0 0
      %337 = vmatpush.bf16.msra.mxu0 0
      %338 = vmatpush.bf16.msra.mxu0 0
      %339 = vmatpush.bf16.msra.mxu0 0
      %340 = vmatpush.bf16.msra.mxu0 0
      %341 = vmatpush.bf16.msra.mxu0 %v332
      %342 = vmatpush.bf16.msra.mxu0 %v331
      %343 = vmatmul.bf16.gmra.mxu0 %v220
      %v344 = vpop.f32.mrf.mxu0
      %v345 = vadd.f32 %v321, %v344
      %v346 = vpop.f32.mrf.mxu0
      %347 = vdwg.mxu0
      %v348 = vmul.f32 %v345, %v345
      %v349 = vsel %vm236, %v348, 0.0
      %350 = vadd.xlane.f32.xlu0 %v349
      %v351 = vpop.xlane.xlu0 %350
      %v352 = vmul.f32 %v351, 0.25
      %v353 = vadd.f32 %v352, 1e-08
      %v354 = vrsqrt.pop %v353
      %v355 = vmul.f32 %v354, %v353
      %v356 = vmul.f32 %v355, %v354
      %v357 = vmul.f32 0.5, %v356
      %v358 = vsub.f32 1.5, %v357
      %v359 = vmul.f32 %v354, %v358
      %vm360 = vweird.f32 %v353
      %vm361 = vweird.f32 %v354
      %vm362 = vmor %vm360, %vm361
      %v363 = vsel %vm362, %v354, %v359
      %v364 = vmul.f32 %v345, %v363
      %v365 = vmul.f32 %v364, 0.2
      %v366 = vmax.f32 %v364, %v365
      %s367 = scalar_lea.vmem %s194, 4
      %368 = vst.msk [vmem:[%s367] sm:$0x3] %vm255, %v366
      %s369 = scalar_lea.vmem %s183, 48
      %v370 = vld [vmem:[%s369] sm:$0xf]
      %v371 = vld [vmem:[%s369 + $0x4] sm:$0xf]
      %v372 = vld [vmem:[%s369 + $0x8] sm:$0xf]
      %v373 = vld [vmem:[%s369 + $0xc] sm:$0xf]
      %s374 = scalar_lea.vmem %s188, 3
      %v375 = vld [vmem:[%s374] sm:$0x1]
      %v377 = vperm.slane %v375, 0
      %v383 = vunpack.c.l.b16 %v370
      %v384 = vunpack.c.l.b16 %v371
      %v385 = vunpack.c.l.b16 %v372
      %v386 = vunpack.c.l.b16 %v373
      %v387 = vpack.c.b16 %v384, %v383
      %v388 = vpack.c.b16 %v386, %v385
      %391 = vmatpush.bf16.msra.mxu0 0
      %392 = vmatpush.bf16.msra.mxu0 0
      %393 = vmatpush.bf16.msra.mxu0 0
      %394 = vmatpush.bf16.msra.mxu0 0
      %395 = vmatpush.bf16.msra.mxu0 0
      %396 = vmatpush.bf16.msra.mxu0 0
      %397 = vmatpush.bf16.msra.mxu0 %v388
      %398 = vmatpush.bf16.msra.mxu0 %v387
      %399 = vmatmul.bf16.gmra.mxu0 %v220
      %v400 = vpop.f32.mrf.mxu0
      %v401 = vadd.f32 %v377, %v400
      %v402 = vpop.f32.mrf.mxu0
      %403 = vdwg.mxu0
      %v404 = vmul.f32 %v401, %v401
      %v405 = vsel %vm236, %v404, 0.0
      %406 = vadd.xlane.f32.xlu0 %v405
      %v407 = vpop.xlane.xlu0 %406
      %v408 = vmul.f32 %v407, 0.25
      %v409 = vadd.f32 %v408, 1e-08
      %v410 = vrsqrt.pop %v409
      %v411 = vmul.f32 %v410, %v409
      %v412 = vmul.f32 %v411, %v410
      %v413 = vmul.f32 0.5, %v412
      %v414 = vsub.f32 1.5, %v413
      %v415 = vmul.f32 %v410, %v414
      %vm416 = vweird.f32 %v409
      %vm417 = vweird.f32 %v410
      %vm418 = vmor %vm416, %vm417
      %v419 = vsel %vm418, %v410, %v415
      %v420 = vmul.f32 %v401, %v419
      %v421 = vmul.f32 %v420, 0.2
      %v422 = vmax.f32 %v420, %v421
      %s423 = scalar_lea.vmem %s194, 6
      %424 = vst.msk [vmem:[%s423] sm:$0x3] %vm255, %v422
      %s425 = scalar_lea.vmem %s183, 64
      %v426 = vld [vmem:[%s425] sm:$0xf]
      %v427 = vld [vmem:[%s425 + $0x4] sm:$0xf]
      %v428 = vld [vmem:[%s425 + $0x8] sm:$0xf]
      %v429 = vld [vmem:[%s425 + $0xc] sm:$0xf]
      %s430 = scalar_lea.vmem %s188, 4
      %v431 = vld [vmem:[%s430] sm:$0x1]
      %v433 = vperm.slane %v431, 0
      %v439 = vunpack.c.l.b16 %v426
      %v440 = vunpack.c.l.b16 %v427
      %v441 = vunpack.c.l.b16 %v428
      %v442 = vunpack.c.l.b16 %v429
      %v443 = vpack.c.b16 %v440, %v439
      %v444 = vpack.c.b16 %v442, %v441
      %447 = vmatpush.bf16.msra.mxu0 0
      %448 = vmatpush.bf16.msra.mxu0 0
      %449 = vmatpush.bf16.msra.mxu0 0
      %450 = vmatpush.bf16.msra.mxu0 0
      %451 = vmatpush.bf16.msra.mxu0 0
      %452 = vmatpush.bf16.msra.mxu0 0
      %453 = vmatpush.bf16.msra.mxu0 %v444
      %454 = vmatpush.bf16.msra.mxu0 %v443
      %455 = vmatmul.bf16.gmra.mxu0 %v220
      %v456 = vpop.f32.mrf.mxu0
      %v457 = vadd.f32 %v433, %v456
      %v458 = vpop.f32.mrf.mxu0
      %459 = vdwg.mxu0
      %v460 = vmul.f32 %v457, %v457
      %v461 = vsel %vm236, %v460, 0.0
      %462 = vadd.xlane.f32.xlu0 %v461
      %v463 = vpop.xlane.xlu0 %462
      %v464 = vmul.f32 %v463, 0.25
      %v465 = vadd.f32 %v464, 1e-08
      %v466 = vrsqrt.pop %v465
      %v467 = vmul.f32 %v466, %v465
      %v468 = vmul.f32 %v467, %v466
      %v469 = vmul.f32 0.5, %v468
      %v470 = vsub.f32 1.5, %v469
      %v471 = vmul.f32 %v466, %v470
      %vm472 = vweird.f32 %v465
      %vm473 = vweird.f32 %v466
      %vm474 = vmor %vm472, %vm473
      %v475 = vsel %vm474, %v466, %v471
      %v476 = vmul.f32 %v457, %v475
      %v477 = vmul.f32 %v476, 0.2
      %v478 = vmax.f32 %v476, %v477
      %s479 = scalar_lea.vmem %s194, 8
      %480 = vst.msk [vmem:[%s479] sm:$0x3] %vm255, %v478
      %s481 = scalar_lea.vmem %s183, 80
      %v482 = vld [vmem:[%s481] sm:$0xf]
      %v483 = vld [vmem:[%s481 + $0x4] sm:$0xf]
      %v484 = vld [vmem:[%s481 + $0x8] sm:$0xf]
      %v485 = vld [vmem:[%s481 + $0xc] sm:$0xf]
      %s486 = scalar_lea.vmem %s188, 5
      %v487 = vld [vmem:[%s486] sm:$0x1]
      %v489 = vperm.slane %v487, 0
      %v495 = vunpack.c.l.b16 %v482
      %v496 = vunpack.c.l.b16 %v483
      %v497 = vunpack.c.l.b16 %v484
      %v498 = vunpack.c.l.b16 %v485
      %v499 = vpack.c.b16 %v496, %v495
      %v500 = vpack.c.b16 %v498, %v497
      %503 = vmatpush.bf16.msra.mxu0 0
      %504 = vmatpush.bf16.msra.mxu0 0
      %505 = vmatpush.bf16.msra.mxu0 0
      %506 = vmatpush.bf16.msra.mxu0 0
      %507 = vmatpush.bf16.msra.mxu0 0
      %508 = vmatpush.bf16.msra.mxu0 0
      %509 = vmatpush.bf16.msra.mxu0 %v500
      %510 = vmatpush.bf16.msra.mxu0 %v499
      %511 = vmatmul.bf16.gmra.mxu0 %v220
      %v512 = vpop.f32.mrf.mxu0
      %v513 = vadd.f32 %v489, %v512
      %v514 = vpop.f32.mrf.mxu0
      %515 = vdwg.mxu0
      %v516 = vmul.f32 %v513, %v513
      %v517 = vsel %vm236, %v516, 0.0
      %518 = vadd.xlane.f32.xlu0 %v517
      %v519 = vpop.xlane.xlu0 %518
      %v520 = vmul.f32 %v519, 0.25
      %v521 = vadd.f32 %v520, 1e-08
      %v522 = vrsqrt.pop %v521
      %v523 = vmul.f32 %v522, %v521
      %v524 = vmul.f32 %v523, %v522
      %v525 = vmul.f32 0.5, %v524
      %v526 = vsub.f32 1.5, %v525
      %v527 = vmul.f32 %v522, %v526
      %vm528 = vweird.f32 %v521
      %vm529 = vweird.f32 %v522
      %vm530 = vmor %vm528, %vm529
      %v531 = vsel %vm530, %v522, %v527
      %v532 = vmul.f32 %v513, %v531
      %v533 = vmul.f32 %v532, 0.2
      %v534 = vmax.f32 %v532, %v533
      %s535 = scalar_lea.vmem %s194, 10
      %536 = vst.msk [vmem:[%s535] sm:$0x3] %vm255, %v534
      %s537 = scalar_lea.vmem %s183, 96
      %v538 = vld [vmem:[%s537] sm:$0xf]
      %v539 = vld [vmem:[%s537 + $0x4] sm:$0xf]
      %v540 = vld [vmem:[%s537 + $0x8] sm:$0xf]
      %v541 = vld [vmem:[%s537 + $0xc] sm:$0xf]
      %s542 = scalar_lea.vmem %s188, 6
      %v543 = vld [vmem:[%s542] sm:$0x1]
      %v545 = vperm.slane %v543, 0
      %v551 = vunpack.c.l.b16 %v538
      %v552 = vunpack.c.l.b16 %v539
      %v553 = vunpack.c.l.b16 %v540
      %v554 = vunpack.c.l.b16 %v541
      %v555 = vpack.c.b16 %v552, %v551
      %v556 = vpack.c.b16 %v554, %v553
      %559 = vmatpush.bf16.msra.mxu0 0
      %560 = vmatpush.bf16.msra.mxu0 0
      %561 = vmatpush.bf16.msra.mxu0 0
      %562 = vmatpush.bf16.msra.mxu0 0
      %563 = vmatpush.bf16.msra.mxu0 0
      %564 = vmatpush.bf16.msra.mxu0 0
      %565 = vmatpush.bf16.msra.mxu0 %v556
      %566 = vmatpush.bf16.msra.mxu0 %v555
      %567 = vmatmul.bf16.gmra.mxu0 %v220
      %v568 = vpop.f32.mrf.mxu0
      %v569 = vadd.f32 %v545, %v568
      %v570 = vpop.f32.mrf.mxu0
      %571 = vdwg.mxu0
      %v572 = vmul.f32 %v569, %v569
      %v573 = vsel %vm236, %v572, 0.0
      %574 = vadd.xlane.f32.xlu0 %v573
      %v575 = vpop.xlane.xlu0 %574
      %v576 = vmul.f32 %v575, 0.25
      %v577 = vadd.f32 %v576, 1e-08
      %v578 = vrsqrt.pop %v577
      %v579 = vmul.f32 %v578, %v577
      %v580 = vmul.f32 %v579, %v578
      %v581 = vmul.f32 0.5, %v580
      %v582 = vsub.f32 1.5, %v581
      %v583 = vmul.f32 %v578, %v582
      %vm584 = vweird.f32 %v577
      %vm585 = vweird.f32 %v578
      %vm586 = vmor %vm584, %vm585
      %v587 = vsel %vm586, %v578, %v583
      %v588 = vmul.f32 %v569, %v587
      %v589 = vmul.f32 %v588, 0.2
      %v590 = vmax.f32 %v588, %v589
      %s591 = scalar_lea.vmem %s194, 12
      %592 = vst.msk [vmem:[%s591] sm:$0x3] %vm255, %v590
      %s593 = scalar_lea.vmem %s183, 112
      %v594 = vld [vmem:[%s593] sm:$0xf]
      %v595 = vld [vmem:[%s593 + $0x4] sm:$0xf]
      %v596 = vld [vmem:[%s593 + $0x8] sm:$0xf]
      %v597 = vld [vmem:[%s593 + $0xc] sm:$0xf]
      %s598 = scalar_lea.vmem %s188, 7
      %v599 = vld [vmem:[%s598] sm:$0x1]
      %v601 = vperm.slane %v599, 0
      %v607 = vunpack.c.l.b16 %v594
      %v608 = vunpack.c.l.b16 %v595
      %v609 = vunpack.c.l.b16 %v596
      %v610 = vunpack.c.l.b16 %v597
      %v611 = vpack.c.b16 %v608, %v607
      %v612 = vpack.c.b16 %v610, %v609
      %615 = vmatpush.bf16.msra.mxu0 0
      %616 = vmatpush.bf16.msra.mxu0 0
      %617 = vmatpush.bf16.msra.mxu0 0
      %618 = vmatpush.bf16.msra.mxu0 0
      %619 = vmatpush.bf16.msra.mxu0 0
      %620 = vmatpush.bf16.msra.mxu0 0
      %621 = vmatpush.bf16.msra.mxu0 %v612
      %622 = vmatpush.bf16.msra.mxu0 %v611
      %623 = vmatmul.bf16.gmra.mxu0 %v220
      %v624 = vpop.f32.mrf.mxu0
      %v625 = vadd.f32 %v601, %v624
      %v626 = vpop.f32.mrf.mxu0
      %627 = vdwg.mxu0
      %v628 = vmul.f32 %v625, %v625
      %v629 = vsel %vm236, %v628, 0.0
      %630 = vadd.xlane.f32.xlu0 %v629
      %v631 = vpop.xlane.xlu0 %630
      %v632 = vmul.f32 %v631, 0.25
      %v633 = vadd.f32 %v632, 1e-08
      %v634 = vrsqrt.pop %v633
      %v635 = vmul.f32 %v634, %v633
      %v636 = vmul.f32 %v635, %v634
      %v637 = vmul.f32 0.5, %v636
      %v638 = vsub.f32 1.5, %v637
      %v639 = vmul.f32 %v634, %v638
      %vm640 = vweird.f32 %v633
      %vm641 = vweird.f32 %v634
      %vm642 = vmor %vm640, %vm641
      %v643 = vsel %vm642, %v634, %v639
      %v644 = vmul.f32 %v625, %v643
      %v645 = vmul.f32 %v644, 0.2
      %v646 = vmax.f32 %v644, %v645
      %s647 = scalar_lea.vmem %s194, 14
      %648 = vst.msk [vmem:[%s647] sm:$0x3] %vm255, %v646
      %s649 = scalar_lea.vmem %s183, 128
      %v650 = vld [vmem:[%s649] sm:$0xf]
      %v651 = vld [vmem:[%s649 + $0x4] sm:$0xf]
      %v652 = vld [vmem:[%s649 + $0x8] sm:$0xf]
      %v653 = vld [vmem:[%s649 + $0xc] sm:$0xf]
      %s654 = scalar_lea.vmem %s188, 8
      %v655 = vld [vmem:[%s654] sm:$0x1]
      %v657 = vperm.slane %v655, 0
      %v663 = vunpack.c.l.b16 %v650
      %v664 = vunpack.c.l.b16 %v651
      %v665 = vunpack.c.l.b16 %v652
      %v666 = vunpack.c.l.b16 %v653
      %v667 = vpack.c.b16 %v664, %v663
      %v668 = vpack.c.b16 %v666, %v665
      %671 = vmatpush.bf16.msra.mxu0 0
      %672 = vmatpush.bf16.msra.mxu0 0
      %673 = vmatpush.bf16.msra.mxu0 0
      %674 = vmatpush.bf16.msra.mxu0 0
      %675 = vmatpush.bf16.msra.mxu0 0
      %676 = vmatpush.bf16.msra.mxu0 0
      %677 = vmatpush.bf16.msra.mxu0 %v668
      %678 = vmatpush.bf16.msra.mxu0 %v667
      %679 = vmatmul.bf16.gmra.mxu0 %v220
      %v680 = vpop.f32.mrf.mxu0
      %v681 = vadd.f32 %v657, %v680
      %v682 = vpop.f32.mrf.mxu0
      %683 = vdwg.mxu0
      %v684 = vmul.f32 %v681, %v681
      %v685 = vsel %vm236, %v684, 0.0
      %686 = vadd.xlane.f32.xlu0 %v685
      %v687 = vpop.xlane.xlu0 %686
      %v688 = vmul.f32 %v687, 0.25
      %v689 = vadd.f32 %v688, 1e-08
      %v690 = vrsqrt.pop %v689
      %v691 = vmul.f32 %v690, %v689
      %v692 = vmul.f32 %v691, %v690
      %v693 = vmul.f32 0.5, %v692
      %v694 = vsub.f32 1.5, %v693
      %v695 = vmul.f32 %v690, %v694
      %vm696 = vweird.f32 %v689
      %vm697 = vweird.f32 %v690
      %vm698 = vmor %vm696, %vm697
      %v699 = vsel %vm698, %v690, %v695
      %v700 = vmul.f32 %v681, %v699
      %v701 = vmul.f32 %v700, 0.2
      %v702 = vmax.f32 %v700, %v701
      %s703 = scalar_lea.vmem %s194, 16
      %704 = vst.msk [vmem:[%s703] sm:$0x3] %vm255, %v702
      %s705 = scalar_lea.vmem %s183, 144
      %v706 = vld [vmem:[%s705] sm:$0xf]
      %v707 = vld [vmem:[%s705 + $0x4] sm:$0xf]
      %v708 = vld [vmem:[%s705 + $0x8] sm:$0xf]
      %v709 = vld [vmem:[%s705 + $0xc] sm:$0xf]
      %s710 = scalar_lea.vmem %s188, 9
      %v711 = vld [vmem:[%s710] sm:$0x1]
      %v713 = vperm.slane %v711, 0
      %v719 = vunpack.c.l.b16 %v706
      %v720 = vunpack.c.l.b16 %v707
      %v721 = vunpack.c.l.b16 %v708
      %v722 = vunpack.c.l.b16 %v709
      %v723 = vpack.c.b16 %v720, %v719
      %v724 = vpack.c.b16 %v722, %v721
      %727 = vmatpush.bf16.msra.mxu0 0
      %728 = vmatpush.bf16.msra.mxu0 0
      %729 = vmatpush.bf16.msra.mxu0 0
      %730 = vmatpush.bf16.msra.mxu0 0
      %731 = vmatpush.bf16.msra.mxu0 0
      %732 = vmatpush.bf16.msra.mxu0 0
      %733 = vmatpush.bf16.msra.mxu0 %v724
      %734 = vmatpush.bf16.msra.mxu0 %v723
      %735 = vmatmul.bf16.gmra.mxu0 %v220
      %v736 = vpop.f32.mrf.mxu0
      %v737 = vadd.f32 %v713, %v736
      %v738 = vpop.f32.mrf.mxu0
      %739 = vdwg.mxu0
      %v740 = vmul.f32 %v737, %v737
      %v741 = vsel %vm236, %v740, 0.0
      %742 = vadd.xlane.f32.xlu0 %v741
      %v743 = vpop.xlane.xlu0 %742
      %v744 = vmul.f32 %v743, 0.25
      %v745 = vadd.f32 %v744, 1e-08
      %v746 = vrsqrt.pop %v745
      %v747 = vmul.f32 %v746, %v745
      %v748 = vmul.f32 %v747, %v746
      %v749 = vmul.f32 0.5, %v748
      %v750 = vsub.f32 1.5, %v749
      %v751 = vmul.f32 %v746, %v750
      %vm752 = vweird.f32 %v745
      %vm753 = vweird.f32 %v746
      %vm754 = vmor %vm752, %vm753
      %v755 = vsel %vm754, %v746, %v751
      %v756 = vmul.f32 %v737, %v755
      %v757 = vmul.f32 %v756, 0.2
      %v758 = vmax.f32 %v756, %v757
      %s759 = scalar_lea.vmem %s194, 18
      %760 = vst.msk [vmem:[%s759] sm:$0x3] %vm255, %v758
      %s761 = scalar_lea.vmem %s183, 160
      %v762 = vld [vmem:[%s761] sm:$0xf]
      %v763 = vld [vmem:[%s761 + $0x4] sm:$0xf]
      %v764 = vld [vmem:[%s761 + $0x8] sm:$0xf]
      %v765 = vld [vmem:[%s761 + $0xc] sm:$0xf]
      %s766 = scalar_lea.vmem %s188, 10
      %v767 = vld [vmem:[%s766] sm:$0x1]
      %v769 = vperm.slane %v767, 0
      %v775 = vunpack.c.l.b16 %v762
      %v776 = vunpack.c.l.b16 %v763
      %v777 = vunpack.c.l.b16 %v764
      %v778 = vunpack.c.l.b16 %v765
      %v779 = vpack.c.b16 %v776, %v775
      %v780 = vpack.c.b16 %v778, %v777
      %783 = vmatpush.bf16.msra.mxu0 0
      %784 = vmatpush.bf16.msra.mxu0 0
      %785 = vmatpush.bf16.msra.mxu0 0
      %786 = vmatpush.bf16.msra.mxu0 0
      %787 = vmatpush.bf16.msra.mxu0 0
      %788 = vmatpush.bf16.msra.mxu0 0
      %789 = vmatpush.bf16.msra.mxu0 %v780
      %790 = vmatpush.bf16.msra.mxu0 %v779
      %791 = vmatmul.bf16.gmra.mxu0 %v220
      %v792 = vpop.f32.mrf.mxu0
      %v793 = vadd.f32 %v769, %v792
      %v794 = vpop.f32.mrf.mxu0
      %795 = vdwg.mxu0
      %v796 = vmul.f32 %v793, %v793
      %v797 = vsel %vm236, %v796, 0.0
      %798 = vadd.xlane.f32.xlu0 %v797
      %v799 = vpop.xlane.xlu0 %798
      %v800 = vmul.f32 %v799, 0.25
      %v801 = vadd.f32 %v800, 1e-08
      %v802 = vrsqrt.pop %v801
      %v803 = vmul.f32 %v802, %v801
      %v804 = vmul.f32 %v803, %v802
      %v805 = vmul.f32 0.5, %v804
      %v806 = vsub.f32 1.5, %v805
      %v807 = vmul.f32 %v802, %v806
      %vm808 = vweird.f32 %v801
      %vm809 = vweird.f32 %v802
      %vm810 = vmor %vm808, %vm809
      %v811 = vsel %vm810, %v802, %v807
      %v812 = vmul.f32 %v793, %v811
      %v813 = vmul.f32 %v812, 0.2
      %v814 = vmax.f32 %v812, %v813
      %s815 = scalar_lea.vmem %s194, 20
      %816 = vst.msk [vmem:[%s815] sm:$0x3] %vm255, %v814
      %s817 = scalar_lea.vmem %s183, 176
      %v818 = vld [vmem:[%s817] sm:$0xf]
      %v819 = vld [vmem:[%s817 + $0x4] sm:$0xf]
      %v820 = vld [vmem:[%s817 + $0x8] sm:$0xf]
      %v821 = vld [vmem:[%s817 + $0xc] sm:$0xf]
      %s822 = scalar_lea.vmem %s188, 11
      %v823 = vld [vmem:[%s822] sm:$0x1]
      %v825 = vperm.slane %v823, 0
      %v831 = vunpack.c.l.b16 %v818
      %v832 = vunpack.c.l.b16 %v819
      %v833 = vunpack.c.l.b16 %v820
      %v834 = vunpack.c.l.b16 %v821
      %v835 = vpack.c.b16 %v832, %v831
      %v836 = vpack.c.b16 %v834, %v833
      %839 = vmatpush.bf16.msra.mxu0 0
      %840 = vmatpush.bf16.msra.mxu0 0
      %841 = vmatpush.bf16.msra.mxu0 0
      %842 = vmatpush.bf16.msra.mxu0 0
      %843 = vmatpush.bf16.msra.mxu0 0
      %844 = vmatpush.bf16.msra.mxu0 0
      %845 = vmatpush.bf16.msra.mxu0 %v836
      %846 = vmatpush.bf16.msra.mxu0 %v835
      %847 = vmatmul.bf16.gmra.mxu0 %v220
      %v848 = vpop.f32.mrf.mxu0
      %v849 = vadd.f32 %v825, %v848
      %v850 = vpop.f32.mrf.mxu0
      %851 = vdwg.mxu0
      %v852 = vmul.f32 %v849, %v849
      %v853 = vsel %vm236, %v852, 0.0
      %854 = vadd.xlane.f32.xlu0 %v853
      %v855 = vpop.xlane.xlu0 %854
      %v856 = vmul.f32 %v855, 0.25
      %v857 = vadd.f32 %v856, 1e-08
      %v858 = vrsqrt.pop %v857
      %v859 = vmul.f32 %v858, %v857
      %v860 = vmul.f32 %v859, %v858
      %v861 = vmul.f32 0.5, %v860
      %v862 = vsub.f32 1.5, %v861
      %v863 = vmul.f32 %v858, %v862
      %vm864 = vweird.f32 %v857
      %vm865 = vweird.f32 %v858
      %vm866 = vmor %vm864, %vm865
      %v867 = vsel %vm866, %v858, %v863
      %v868 = vmul.f32 %v849, %v867
      %v869 = vmul.f32 %v868, 0.2
      %v870 = vmax.f32 %v868, %v869
      %s871 = scalar_lea.vmem %s194, 22
      %872 = vst.msk [vmem:[%s871] sm:$0x3] %vm255, %v870
      %s873 = scalar_lea.vmem %s183, 192
      %v874 = vld [vmem:[%s873] sm:$0xf]
      %v875 = vld [vmem:[%s873 + $0x4] sm:$0xf]
      %v876 = vld [vmem:[%s873 + $0x8] sm:$0xf]
      %v877 = vld [vmem:[%s873 + $0xc] sm:$0xf]
      %s878 = scalar_lea.vmem %s188, 12
      %v879 = vld [vmem:[%s878] sm:$0x1]
      %v881 = vperm.slane %v879, 0
      %v887 = vunpack.c.l.b16 %v874
      %v888 = vunpack.c.l.b16 %v875
      %v889 = vunpack.c.l.b16 %v876
      %v890 = vunpack.c.l.b16 %v877
      %v891 = vpack.c.b16 %v888, %v887
      %v892 = vpack.c.b16 %v890, %v889
      %895 = vmatpush.bf16.msra.mxu0 0
      %896 = vmatpush.bf16.msra.mxu0 0
      %897 = vmatpush.bf16.msra.mxu0 0
      %898 = vmatpush.bf16.msra.mxu0 0
      %899 = vmatpush.bf16.msra.mxu0 0
      %900 = vmatpush.bf16.msra.mxu0 0
      %901 = vmatpush.bf16.msra.mxu0 %v892
      %902 = vmatpush.bf16.msra.mxu0 %v891
      %903 = vmatmul.bf16.gmra.mxu0 %v220
      %v904 = vpop.f32.mrf.mxu0
      %v905 = vadd.f32 %v881, %v904
      %v906 = vpop.f32.mrf.mxu0
      %907 = vdwg.mxu0
      %v908 = vmul.f32 %v905, %v905
      %v909 = vsel %vm236, %v908, 0.0
      %910 = vadd.xlane.f32.xlu0 %v909
      %v911 = vpop.xlane.xlu0 %910
      %v912 = vmul.f32 %v911, 0.25
      %v913 = vadd.f32 %v912, 1e-08
      %v914 = vrsqrt.pop %v913
      %v915 = vmul.f32 %v914, %v913
      %v916 = vmul.f32 %v915, %v914
      %v917 = vmul.f32 0.5, %v916
      %v918 = vsub.f32 1.5, %v917
      %v919 = vmul.f32 %v914, %v918
      %vm920 = vweird.f32 %v913
      %vm921 = vweird.f32 %v914
      %vm922 = vmor %vm920, %vm921
      %v923 = vsel %vm922, %v914, %v919
      %v924 = vmul.f32 %v905, %v923
      %v925 = vmul.f32 %v924, 0.2
      %v926 = vmax.f32 %v924, %v925
      %s927 = scalar_lea.vmem %s194, 24
      %928 = vst.msk [vmem:[%s927] sm:$0x3] %vm255, %v926
      %s929 = scalar_lea.vmem %s183, 208
      %v930 = vld [vmem:[%s929] sm:$0xf]
      %v931 = vld [vmem:[%s929 + $0x4] sm:$0xf]
      %v932 = vld [vmem:[%s929 + $0x8] sm:$0xf]
      %v933 = vld [vmem:[%s929 + $0xc] sm:$0xf]
      %s934 = scalar_lea.vmem %s188, 13
      %v935 = vld [vmem:[%s934] sm:$0x1]
      %v937 = vperm.slane %v935, 0
      %v943 = vunpack.c.l.b16 %v930
      %v944 = vunpack.c.l.b16 %v931
      %v945 = vunpack.c.l.b16 %v932
      %v946 = vunpack.c.l.b16 %v933
      %v947 = vpack.c.b16 %v944, %v943
      %v948 = vpack.c.b16 %v946, %v945
      %951 = vmatpush.bf16.msra.mxu0 0
      %952 = vmatpush.bf16.msra.mxu0 0
      %953 = vmatpush.bf16.msra.mxu0 0
      %954 = vmatpush.bf16.msra.mxu0 0
      %955 = vmatpush.bf16.msra.mxu0 0
      %956 = vmatpush.bf16.msra.mxu0 0
      %957 = vmatpush.bf16.msra.mxu0 %v948
      %958 = vmatpush.bf16.msra.mxu0 %v947
      %959 = vmatmul.bf16.gmra.mxu0 %v220
      %v960 = vpop.f32.mrf.mxu0
      %v961 = vadd.f32 %v937, %v960
      %v962 = vpop.f32.mrf.mxu0
      %963 = vdwg.mxu0
      %v964 = vmul.f32 %v961, %v961
      %v965 = vsel %vm236, %v964, 0.0
      %966 = vadd.xlane.f32.xlu0 %v965
      %v967 = vpop.xlane.xlu0 %966
      %v968 = vmul.f32 %v967, 0.25
      %v969 = vadd.f32 %v968, 1e-08
      %v970 = vrsqrt.pop %v969
      %v971 = vmul.f32 %v970, %v969
      %v972 = vmul.f32 %v971, %v970
      %v973 = vmul.f32 0.5, %v972
      %v974 = vsub.f32 1.5, %v973
      %v975 = vmul.f32 %v970, %v974
      %vm976 = vweird.f32 %v969
      %vm977 = vweird.f32 %v970
      %vm978 = vmor %vm976, %vm977
      %v979 = vsel %vm978, %v970, %v975
      %v980 = vmul.f32 %v961, %v979
      %v981 = vmul.f32 %v980, 0.2
      %v982 = vmax.f32 %v980, %v981
      %s983 = scalar_lea.vmem %s194, 26
      %984 = vst.msk [vmem:[%s983] sm:$0x3] %vm255, %v982
      %s985 = scalar_lea.vmem %s183, 224
      %v986 = vld [vmem:[%s985] sm:$0xf]
      %v987 = vld [vmem:[%s985 + $0x4] sm:$0xf]
      %v988 = vld [vmem:[%s985 + $0x8] sm:$0xf]
      %v989 = vld [vmem:[%s985 + $0xc] sm:$0xf]
      %s990 = scalar_lea.vmem %s188, 14
      %v991 = vld [vmem:[%s990] sm:$0x1]
      %v993 = vperm.slane %v991, 0
      %v999 = vunpack.c.l.b16 %v986
      %v1000 = vunpack.c.l.b16 %v987
      %v1001 = vunpack.c.l.b16 %v988
      %v1002 = vunpack.c.l.b16 %v989
      %v1003 = vpack.c.b16 %v1000, %v999
      %v1004 = vpack.c.b16 %v1002, %v1001
      %1007 = vmatpush.bf16.msra.mxu0 0
      %1008 = vmatpush.bf16.msra.mxu0 0
      %1009 = vmatpush.bf16.msra.mxu0 0
      %1010 = vmatpush.bf16.msra.mxu0 0
      %1011 = vmatpush.bf16.msra.mxu0 0
      %1012 = vmatpush.bf16.msra.mxu0 0
      %1013 = vmatpush.bf16.msra.mxu0 %v1004
      %1014 = vmatpush.bf16.msra.mxu0 %v1003
      %1015 = vmatmul.bf16.gmra.mxu0 %v220
      %v1016 = vpop.f32.mrf.mxu0
      %v1017 = vadd.f32 %v993, %v1016
      %v1018 = vpop.f32.mrf.mxu0
      %1019 = vdwg.mxu0
      %v1020 = vmul.f32 %v1017, %v1017
      %v1021 = vsel %vm236, %v1020, 0.0
      %1022 = vadd.xlane.f32.xlu0 %v1021
      %v1023 = vpop.xlane.xlu0 %1022
      %v1024 = vmul.f32 %v1023, 0.25
      %v1025 = vadd.f32 %v1024, 1e-08
      %v1026 = vrsqrt.pop %v1025
      %v1027 = vmul.f32 %v1026, %v1025
      %v1028 = vmul.f32 %v1027, %v1026
      %v1029 = vmul.f32 0.5, %v1028
      %v1030 = vsub.f32 1.5, %v1029
      %v1031 = vmul.f32 %v1026, %v1030
      %vm1032 = vweird.f32 %v1025
      %vm1033 = vweird.f32 %v1026
      %vm1034 = vmor %vm1032, %vm1033
      %v1035 = vsel %vm1034, %v1026, %v1031
      %v1036 = vmul.f32 %v1017, %v1035
      %v1037 = vmul.f32 %v1036, 0.2
      %v1038 = vmax.f32 %v1036, %v1037
      %s1039 = scalar_lea.vmem %s194, 28
      %1040 = vst.msk [vmem:[%s1039] sm:$0x3] %vm255, %v1038
      %s1041 = scalar_lea.vmem %s183, 240
      %v1042 = vld [vmem:[%s1041] sm:$0xf]
      %v1043 = vld [vmem:[%s1041 + $0x4] sm:$0xf]
      %v1044 = vld [vmem:[%s1041 + $0x8] sm:$0xf]
      %v1045 = vld [vmem:[%s1041 + $0xc] sm:$0xf]
      %s1046 = scalar_lea.vmem %s188, 15
      %v1047 = vld [vmem:[%s1046] sm:$0x1]
      %v1049 = vperm.slane %v1047, 0
      %v1055 = vunpack.c.l.b16 %v1042
      %v1056 = vunpack.c.l.b16 %v1043
      %v1057 = vunpack.c.l.b16 %v1044
      %v1058 = vunpack.c.l.b16 %v1045
      %v1059 = vpack.c.b16 %v1056, %v1055
      %v1060 = vpack.c.b16 %v1058, %v1057
      %1063 = vmatpush.bf16.msra.mxu0 0
      %1064 = vmatpush.bf16.msra.mxu0 0
      %1065 = vmatpush.bf16.msra.mxu0 0
      %1066 = vmatpush.bf16.msra.mxu0 0
      %1067 = vmatpush.bf16.msra.mxu0 0
      %1068 = vmatpush.bf16.msra.mxu0 0
      %1069 = vmatpush.bf16.msra.mxu0 %v1060
      %1070 = vmatpush.bf16.msra.mxu0 %v1059
      %1071 = vmatmul.bf16.gmra.mxu0 %v220
      %v1072 = vpop.f32.mrf.mxu0
      %v1073 = vadd.f32 %v1049, %v1072
      %v1074 = vpop.f32.mrf.mxu0
      %1075 = vdwg.mxu0
      %v1076 = vmul.f32 %v1073, %v1073
      %v1077 = vsel %vm236, %v1076, 0.0
      %1078 = vadd.xlane.f32.xlu0 %v1077
      %v1079 = vpop.xlane.xlu0 %1078
      %v1080 = vmul.f32 %v1079, 0.25
      %v1081 = vadd.f32 %v1080, 1e-08
      %v1082 = vrsqrt.pop %v1081
      %v1083 = vmul.f32 %v1082, %v1081
      %v1084 = vmul.f32 %v1083, %v1082
      %v1085 = vmul.f32 0.5, %v1084
      %v1086 = vsub.f32 1.5, %v1085
      %v1087 = vmul.f32 %v1082, %v1086
      %vm1088 = vweird.f32 %v1081
      %vm1089 = vweird.f32 %v1082
      %vm1090 = vmor %vm1088, %vm1089
      %v1091 = vsel %vm1090, %v1082, %v1087
      %v1092 = vmul.f32 %v1073, %v1091
      %v1093 = vmul.f32 %v1092, 0.2
      %v1094 = vmax.f32 %v1092, %v1093
      %s1095 = scalar_lea.vmem %s194, 30
      %1096 = vst.msk [vmem:[%s1095] sm:$0x3] %vm255, %v1094
      %s1097 = scalar_lea.vmem %s183, 256
      %v1098 = vld [vmem:[%s1097] sm:$0xf]
      %v1099 = vld [vmem:[%s1097 + $0x4] sm:$0xf]
      %v1100 = vld [vmem:[%s1097 + $0x8] sm:$0xf]
      %v1101 = vld [vmem:[%s1097 + $0xc] sm:$0xf]
      %s1102 = scalar_lea.vmem %s188, 16
      %v1103 = vld [vmem:[%s1102] sm:$0x1]
      %v1105 = vperm.slane %v1103, 0
      %v1111 = vunpack.c.l.b16 %v1098
      %v1112 = vunpack.c.l.b16 %v1099
      %v1113 = vunpack.c.l.b16 %v1100
      %v1114 = vunpack.c.l.b16 %v1101
      %v1115 = vpack.c.b16 %v1112, %v1111
      %v1116 = vpack.c.b16 %v1114, %v1113
      %1119 = vmatpush.bf16.msra.mxu0 0
      %1120 = vmatpush.bf16.msra.mxu0 0
      %1121 = vmatpush.bf16.msra.mxu0 0
      %1122 = vmatpush.bf16.msra.mxu0 0
      %1123 = vmatpush.bf16.msra.mxu0 0
      %1124 = vmatpush.bf16.msra.mxu0 0
      %1125 = vmatpush.bf16.msra.mxu0 %v1116
      %1126 = vmatpush.bf16.msra.mxu0 %v1115
      %1127 = vmatmul.bf16.gmra.mxu0 %v220
      %v1128 = vpop.f32.mrf.mxu0
      %v1129 = vadd.f32 %v1105, %v1128
      %v1130 = vpop.f32.mrf.mxu0
      %1131 = vdwg.mxu0
      %v1132 = vmul.f32 %v1129, %v1129
      %v1133 = vsel %vm236, %v1132, 0.0
      %1134 = vadd.xlane.f32.xlu0 %v1133
      %v1135 = vpop.xlane.xlu0 %1134
      %v1136 = vmul.f32 %v1135, 0.25
      %v1137 = vadd.f32 %v1136, 1e-08
      %v1138 = vrsqrt.pop %v1137
      %v1139 = vmul.f32 %v1138, %v1137
      %v1140 = vmul.f32 %v1139, %v1138
      %v1141 = vmul.f32 0.5, %v1140
      %v1142 = vsub.f32 1.5, %v1141
      %v1143 = vmul.f32 %v1138, %v1142
      %vm1144 = vweird.f32 %v1137
      %vm1145 = vweird.f32 %v1138
      %vm1146 = vmor %vm1144, %vm1145
      %v1147 = vsel %vm1146, %v1138, %v1143
      %v1148 = vmul.f32 %v1129, %v1147
      %v1149 = vmul.f32 %v1148, 0.2
      %v1150 = vmax.f32 %v1148, %v1149
      %s1151 = scalar_lea.vmem %s194, 32
      %1152 = vst.msk [vmem:[%s1151] sm:$0x3] %vm255, %v1150
      %s1153 = scalar_lea.vmem %s183, 272
      %v1154 = vld [vmem:[%s1153] sm:$0xf]
      %v1155 = vld [vmem:[%s1153 + $0x4] sm:$0xf]
      %v1156 = vld [vmem:[%s1153 + $0x8] sm:$0xf]
      %v1157 = vld [vmem:[%s1153 + $0xc] sm:$0xf]
      %s1158 = scalar_lea.vmem %s188, 17
      %v1159 = vld [vmem:[%s1158] sm:$0x1]
      %v1161 = vperm.slane %v1159, 0
      %v1167 = vunpack.c.l.b16 %v1154
      %v1168 = vunpack.c.l.b16 %v1155
      %v1169 = vunpack.c.l.b16 %v1156
      %v1170 = vunpack.c.l.b16 %v1157
      %v1171 = vpack.c.b16 %v1168, %v1167
      %v1172 = vpack.c.b16 %v1170, %v1169
      %1175 = vmatpush.bf16.msra.mxu0 0
      %1176 = vmatpush.bf16.msra.mxu0 0
      %1177 = vmatpush.bf16.msra.mxu0 0
      %1178 = vmatpush.bf16.msra.mxu0 0
      %1179 = vmatpush.bf16.msra.mxu0 0
      %1180 = vmatpush.bf16.msra.mxu0 0
      %1181 = vmatpush.bf16.msra.mxu0 %v1172
      %1182 = vmatpush.bf16.msra.mxu0 %v1171
      %1183 = vmatmul.bf16.gmra.mxu0 %v220
      %v1184 = vpop.f32.mrf.mxu0
      %v1185 = vadd.f32 %v1161, %v1184
      %v1186 = vpop.f32.mrf.mxu0
      %1187 = vdwg.mxu0
      %v1188 = vmul.f32 %v1185, %v1185
      %v1189 = vsel %vm236, %v1188, 0.0
      %1190 = vadd.xlane.f32.xlu0 %v1189
      %v1191 = vpop.xlane.xlu0 %1190
      %v1192 = vmul.f32 %v1191, 0.25
      %v1193 = vadd.f32 %v1192, 1e-08
      %v1194 = vrsqrt.pop %v1193
      %v1195 = vmul.f32 %v1194, %v1193
      %v1196 = vmul.f32 %v1195, %v1194
      %v1197 = vmul.f32 0.5, %v1196
      %v1198 = vsub.f32 1.5, %v1197
      %v1199 = vmul.f32 %v1194, %v1198
      %vm1200 = vweird.f32 %v1193
      %vm1201 = vweird.f32 %v1194
      %vm1202 = vmor %vm1200, %vm1201
      %v1203 = vsel %vm1202, %v1194, %v1199
      %v1204 = vmul.f32 %v1185, %v1203
      %v1205 = vmul.f32 %v1204, 0.2
      %v1206 = vmax.f32 %v1204, %v1205
      %s1207 = scalar_lea.vmem %s194, 34
      %1208 = vst.msk [vmem:[%s1207] sm:$0x3] %vm255, %v1206
      %s1209 = scalar_lea.vmem %s183, 288
      %v1210 = vld [vmem:[%s1209] sm:$0xf]
      %v1211 = vld [vmem:[%s1209 + $0x4] sm:$0xf]
      %v1212 = vld [vmem:[%s1209 + $0x8] sm:$0xf]
      %v1213 = vld [vmem:[%s1209 + $0xc] sm:$0xf]
      %s1214 = scalar_lea.vmem %s188, 18
      %v1215 = vld [vmem:[%s1214] sm:$0x1]
      %v1217 = vperm.slane %v1215, 0
      %v1223 = vunpack.c.l.b16 %v1210
      %v1224 = vunpack.c.l.b16 %v1211
      %v1225 = vunpack.c.l.b16 %v1212
      %v1226 = vunpack.c.l.b16 %v1213
      %v1227 = vpack.c.b16 %v1224, %v1223
      %v1228 = vpack.c.b16 %v1226, %v1225
      %1231 = vmatpush.bf16.msra.mxu0 0
      %1232 = vmatpush.bf16.msra.mxu0 0
      %1233 = vmatpush.bf16.msra.mxu0 0
      %1234 = vmatpush.bf16.msra.mxu0 0
      %1235 = vmatpush.bf16.msra.mxu0 0
      %1236 = vmatpush.bf16.msra.mxu0 0
      %1237 = vmatpush.bf16.msra.mxu0 %v1228
      %1238 = vmatpush.bf16.msra.mxu0 %v1227
      %1239 = vmatmul.bf16.gmra.mxu0 %v220
      %v1240 = vpop.f32.mrf.mxu0
      %v1241 = vadd.f32 %v1217, %v1240
      %v1242 = vpop.f32.mrf.mxu0
      %1243 = vdwg.mxu0
      %v1244 = vmul.f32 %v1241, %v1241
      %v1245 = vsel %vm236, %v1244, 0.0
      %1246 = vadd.xlane.f32.xlu0 %v1245
      %v1247 = vpop.xlane.xlu0 %1246
      %v1248 = vmul.f32 %v1247, 0.25
      %v1249 = vadd.f32 %v1248, 1e-08
      %v1250 = vrsqrt.pop %v1249
      %v1251 = vmul.f32 %v1250, %v1249
      %v1252 = vmul.f32 %v1251, %v1250
      %v1253 = vmul.f32 0.5, %v1252
      %v1254 = vsub.f32 1.5, %v1253
      %v1255 = vmul.f32 %v1250, %v1254
      %vm1256 = vweird.f32 %v1249
      %vm1257 = vweird.f32 %v1250
      %vm1258 = vmor %vm1256, %vm1257
      %v1259 = vsel %vm1258, %v1250, %v1255
      %v1260 = vmul.f32 %v1241, %v1259
      %v1261 = vmul.f32 %v1260, 0.2
      %v1262 = vmax.f32 %v1260, %v1261
      %s1263 = scalar_lea.vmem %s194, 36
      %1264 = vst.msk [vmem:[%s1263] sm:$0x3] %vm255, %v1262
      %s1265 = scalar_lea.vmem %s183, 304
      %v1266 = vld [vmem:[%s1265] sm:$0xf]
      %v1267 = vld [vmem:[%s1265 + $0x4] sm:$0xf]
      %v1268 = vld [vmem:[%s1265 + $0x8] sm:$0xf]
      %v1269 = vld [vmem:[%s1265 + $0xc] sm:$0xf]
      %s1270 = scalar_lea.vmem %s188, 19
      %v1271 = vld [vmem:[%s1270] sm:$0x1]
      %v1273 = vperm.slane %v1271, 0
      %v1279 = vunpack.c.l.b16 %v1266
      %v1280 = vunpack.c.l.b16 %v1267
      %v1281 = vunpack.c.l.b16 %v1268
      %v1282 = vunpack.c.l.b16 %v1269
      %v1283 = vpack.c.b16 %v1280, %v1279
      %v1284 = vpack.c.b16 %v1282, %v1281
      %1287 = vmatpush.bf16.msra.mxu0 0
      %1288 = vmatpush.bf16.msra.mxu0 0
      %1289 = vmatpush.bf16.msra.mxu0 0
      %1290 = vmatpush.bf16.msra.mxu0 0
      %1291 = vmatpush.bf16.msra.mxu0 0
      %1292 = vmatpush.bf16.msra.mxu0 0
      %1293 = vmatpush.bf16.msra.mxu0 %v1284
      %1294 = vmatpush.bf16.msra.mxu0 %v1283
      %1295 = vmatmul.bf16.gmra.mxu0 %v220
      %v1296 = vpop.f32.mrf.mxu0
      %v1297 = vadd.f32 %v1273, %v1296
      %v1298 = vpop.f32.mrf.mxu0
      %1299 = vdwg.mxu0
      %v1300 = vmul.f32 %v1297, %v1297
      %v1301 = vsel %vm236, %v1300, 0.0
      %1302 = vadd.xlane.f32.xlu0 %v1301
      %v1303 = vpop.xlane.xlu0 %1302
      %v1304 = vmul.f32 %v1303, 0.25
      %v1305 = vadd.f32 %v1304, 1e-08
      %v1306 = vrsqrt.pop %v1305
      %v1307 = vmul.f32 %v1306, %v1305
      %v1308 = vmul.f32 %v1307, %v1306
      %v1309 = vmul.f32 0.5, %v1308
      %v1310 = vsub.f32 1.5, %v1309
      %v1311 = vmul.f32 %v1306, %v1310
      %vm1312 = vweird.f32 %v1305
      %vm1313 = vweird.f32 %v1306
      %vm1314 = vmor %vm1312, %vm1313
      %v1315 = vsel %vm1314, %v1306, %v1311
      %v1316 = vmul.f32 %v1297, %v1315
      %v1317 = vmul.f32 %v1316, 0.2
      %v1318 = vmax.f32 %v1316, %v1317
      %s1319 = scalar_lea.vmem %s194, 38
      %1320 = vst.msk [vmem:[%s1319] sm:$0x3] %vm255, %v1318
      %s1321 = scalar_lea.vmem %s183, 320
      %v1322 = vld [vmem:[%s1321] sm:$0xf]
      %v1323 = vld [vmem:[%s1321 + $0x4] sm:$0xf]
      %v1324 = vld [vmem:[%s1321 + $0x8] sm:$0xf]
      %v1325 = vld [vmem:[%s1321 + $0xc] sm:$0xf]
      %s1326 = scalar_lea.vmem %s188, 20
      %v1327 = vld [vmem:[%s1326] sm:$0x1]
      %v1329 = vperm.slane %v1327, 0
      %v1335 = vunpack.c.l.b16 %v1322
      %v1336 = vunpack.c.l.b16 %v1323
      %v1337 = vunpack.c.l.b16 %v1324
      %v1338 = vunpack.c.l.b16 %v1325
      %v1339 = vpack.c.b16 %v1336, %v1335
      %v1340 = vpack.c.b16 %v1338, %v1337
      %1343 = vmatpush.bf16.msra.mxu0 0
      %1344 = vmatpush.bf16.msra.mxu0 0
      %1345 = vmatpush.bf16.msra.mxu0 0
      %1346 = vmatpush.bf16.msra.mxu0 0
      %1347 = vmatpush.bf16.msra.mxu0 0
      %1348 = vmatpush.bf16.msra.mxu0 0
      %1349 = vmatpush.bf16.msra.mxu0 %v1340
      %1350 = vmatpush.bf16.msra.mxu0 %v1339
      %1351 = vmatmul.bf16.gmra.mxu0 %v220
      %v1352 = vpop.f32.mrf.mxu0
      %v1353 = vadd.f32 %v1329, %v1352
      %v1354 = vpop.f32.mrf.mxu0
      %1355 = vdwg.mxu0
      %v1356 = vmul.f32 %v1353, %v1353
      %v1357 = vsel %vm236, %v1356, 0.0
      %1358 = vadd.xlane.f32.xlu0 %v1357
      %v1359 = vpop.xlane.xlu0 %1358
      %v1360 = vmul.f32 %v1359, 0.25
      %v1361 = vadd.f32 %v1360, 1e-08
      %v1362 = vrsqrt.pop %v1361
      %v1363 = vmul.f32 %v1362, %v1361
      %v1364 = vmul.f32 %v1363, %v1362
      %v1365 = vmul.f32 0.5, %v1364
      %v1366 = vsub.f32 1.5, %v1365
      %v1367 = vmul.f32 %v1362, %v1366
      %vm1368 = vweird.f32 %v1361
      %vm1369 = vweird.f32 %v1362
      %vm1370 = vmor %vm1368, %vm1369
      %v1371 = vsel %vm1370, %v1362, %v1367
      %v1372 = vmul.f32 %v1353, %v1371
      %v1373 = vmul.f32 %v1372, 0.2
      %v1374 = vmax.f32 %v1372, %v1373
      %s1375 = scalar_lea.vmem %s194, 40
      %1376 = vst.msk [vmem:[%s1375] sm:$0x3] %vm255, %v1374
      %s1377 = scalar_lea.vmem %s183, 336
      %v1378 = vld [vmem:[%s1377] sm:$0xf]
      %v1379 = vld [vmem:[%s1377 + $0x4] sm:$0xf]
      %v1380 = vld [vmem:[%s1377 + $0x8] sm:$0xf]
      %v1381 = vld [vmem:[%s1377 + $0xc] sm:$0xf]
      %s1382 = scalar_lea.vmem %s188, 21
      %v1383 = vld [vmem:[%s1382] sm:$0x1]
      %v1385 = vperm.slane %v1383, 0
      %v1391 = vunpack.c.l.b16 %v1378
      %v1392 = vunpack.c.l.b16 %v1379
      %v1393 = vunpack.c.l.b16 %v1380
      %v1394 = vunpack.c.l.b16 %v1381
      %v1395 = vpack.c.b16 %v1392, %v1391
      %v1396 = vpack.c.b16 %v1394, %v1393
      %1399 = vmatpush.bf16.msra.mxu0 0
      %1400 = vmatpush.bf16.msra.mxu0 0
      %1401 = vmatpush.bf16.msra.mxu0 0
      %1402 = vmatpush.bf16.msra.mxu0 0
      %1403 = vmatpush.bf16.msra.mxu0 0
      %1404 = vmatpush.bf16.msra.mxu0 0
      %1405 = vmatpush.bf16.msra.mxu0 %v1396
      %1406 = vmatpush.bf16.msra.mxu0 %v1395
      %1407 = vmatmul.bf16.gmra.mxu0 %v220
      %v1408 = vpop.f32.mrf.mxu0
      %v1409 = vadd.f32 %v1385, %v1408
      %v1410 = vpop.f32.mrf.mxu0
      %1411 = vdwg.mxu0
      %v1412 = vmul.f32 %v1409, %v1409
      %v1413 = vsel %vm236, %v1412, 0.0
      %1414 = vadd.xlane.f32.xlu0 %v1413
      %v1415 = vpop.xlane.xlu0 %1414
      %v1416 = vmul.f32 %v1415, 0.25
      %v1417 = vadd.f32 %v1416, 1e-08
      %v1418 = vrsqrt.pop %v1417
      %v1419 = vmul.f32 %v1418, %v1417
      %v1420 = vmul.f32 %v1419, %v1418
      %v1421 = vmul.f32 0.5, %v1420
      %v1422 = vsub.f32 1.5, %v1421
      %v1423 = vmul.f32 %v1418, %v1422
      %vm1424 = vweird.f32 %v1417
      %vm1425 = vweird.f32 %v1418
      %vm1426 = vmor %vm1424, %vm1425
      %v1427 = vsel %vm1426, %v1418, %v1423
      %v1428 = vmul.f32 %v1409, %v1427
      %v1429 = vmul.f32 %v1428, 0.2
      %v1430 = vmax.f32 %v1428, %v1429
      %s1431 = scalar_lea.vmem %s194, 42
      %1432 = vst.msk [vmem:[%s1431] sm:$0x3] %vm255, %v1430
      %s1433 = scalar_lea.vmem %s183, 352
      %v1434 = vld [vmem:[%s1433] sm:$0xf]
      %v1435 = vld [vmem:[%s1433 + $0x4] sm:$0xf]
      %v1436 = vld [vmem:[%s1433 + $0x8] sm:$0xf]
      %v1437 = vld [vmem:[%s1433 + $0xc] sm:$0xf]
      %s1438 = scalar_lea.vmem %s188, 22
      %v1439 = vld [vmem:[%s1438] sm:$0x1]
      %v1441 = vperm.slane %v1439, 0
      %v1447 = vunpack.c.l.b16 %v1434
      %v1448 = vunpack.c.l.b16 %v1435
      %v1449 = vunpack.c.l.b16 %v1436
      %v1450 = vunpack.c.l.b16 %v1437
      %v1451 = vpack.c.b16 %v1448, %v1447
      %v1452 = vpack.c.b16 %v1450, %v1449
      %1455 = vmatpush.bf16.msra.mxu0 0
      %1456 = vmatpush.bf16.msra.mxu0 0
      %1457 = vmatpush.bf16.msra.mxu0 0
      %1458 = vmatpush.bf16.msra.mxu0 0
      %1459 = vmatpush.bf16.msra.mxu0 0
      %1460 = vmatpush.bf16.msra.mxu0 0
      %1461 = vmatpush.bf16.msra.mxu0 %v1452
      %1462 = vmatpush.bf16.msra.mxu0 %v1451
      %1463 = vmatmul.bf16.gmra.mxu0 %v220
      %v1464 = vpop.f32.mrf.mxu0
      %v1465 = vadd.f32 %v1441, %v1464
      %v1466 = vpop.f32.mrf.mxu0
      %1467 = vdwg.mxu0
      %v1468 = vmul.f32 %v1465, %v1465
      %v1469 = vsel %vm236, %v1468, 0.0
      %1470 = vadd.xlane.f32.xlu0 %v1469
      %v1471 = vpop.xlane.xlu0 %1470
      %v1472 = vmul.f32 %v1471, 0.25
      %v1473 = vadd.f32 %v1472, 1e-08
      %v1474 = vrsqrt.pop %v1473
      %v1475 = vmul.f32 %v1474, %v1473
      %v1476 = vmul.f32 %v1475, %v1474
      %v1477 = vmul.f32 0.5, %v1476
      %v1478 = vsub.f32 1.5, %v1477
      %v1479 = vmul.f32 %v1474, %v1478
      %vm1480 = vweird.f32 %v1473
      %vm1481 = vweird.f32 %v1474
      %vm1482 = vmor %vm1480, %vm1481
      %v1483 = vsel %vm1482, %v1474, %v1479
      %v1484 = vmul.f32 %v1465, %v1483
      %v1485 = vmul.f32 %v1484, 0.2
      %v1486 = vmax.f32 %v1484, %v1485
      %s1487 = scalar_lea.vmem %s194, 44
      %1488 = vst.msk [vmem:[%s1487] sm:$0x3] %vm255, %v1486
      %s1489 = scalar_lea.vmem %s183, 368
      %v1490 = vld [vmem:[%s1489] sm:$0xf]
      %v1491 = vld [vmem:[%s1489 + $0x4] sm:$0xf]
      %v1492 = vld [vmem:[%s1489 + $0x8] sm:$0xf]
      %v1493 = vld [vmem:[%s1489 + $0xc] sm:$0xf]
      %s1494 = scalar_lea.vmem %s188, 23
      %v1495 = vld [vmem:[%s1494] sm:$0x1]
      %v1497 = vperm.slane %v1495, 0
      %v1503 = vunpack.c.l.b16 %v1490
      %v1504 = vunpack.c.l.b16 %v1491
      %v1505 = vunpack.c.l.b16 %v1492
      %v1506 = vunpack.c.l.b16 %v1493
      %v1507 = vpack.c.b16 %v1504, %v1503
      %v1508 = vpack.c.b16 %v1506, %v1505
      %1511 = vmatpush.bf16.msra.mxu0 0
      %1512 = vmatpush.bf16.msra.mxu0 0
      %1513 = vmatpush.bf16.msra.mxu0 0
      %1514 = vmatpush.bf16.msra.mxu0 0
      %1515 = vmatpush.bf16.msra.mxu0 0
      %1516 = vmatpush.bf16.msra.mxu0 0
      %1517 = vmatpush.bf16.msra.mxu0 %v1508
      %1518 = vmatpush.bf16.msra.mxu0 %v1507
      %1519 = vmatmul.bf16.gmra.mxu0 %v220
      %v1520 = vpop.f32.mrf.mxu0
      %v1521 = vadd.f32 %v1497, %v1520
      %v1522 = vpop.f32.mrf.mxu0
      %1523 = vdwg.mxu0
      %v1524 = vmul.f32 %v1521, %v1521
      %v1525 = vsel %vm236, %v1524, 0.0
      %1526 = vadd.xlane.f32.xlu0 %v1525
      %v1527 = vpop.xlane.xlu0 %1526
      %v1528 = vmul.f32 %v1527, 0.25
      %v1529 = vadd.f32 %v1528, 1e-08
      %v1530 = vrsqrt.pop %v1529
      %v1531 = vmul.f32 %v1530, %v1529
      %v1532 = vmul.f32 %v1531, %v1530
      %v1533 = vmul.f32 0.5, %v1532
      %v1534 = vsub.f32 1.5, %v1533
      %v1535 = vmul.f32 %v1530, %v1534
      %vm1536 = vweird.f32 %v1529
      %vm1537 = vweird.f32 %v1530
      %vm1538 = vmor %vm1536, %vm1537
      %v1539 = vsel %vm1538, %v1530, %v1535
      %v1540 = vmul.f32 %v1521, %v1539
      %v1541 = vmul.f32 %v1540, 0.2
      %v1542 = vmax.f32 %v1540, %v1541
      %s1543 = scalar_lea.vmem %s194, 46
      %1544 = vst.msk [vmem:[%s1543] sm:$0x3] %vm255, %v1542
      %s1545 = scalar_lea.vmem %s183, 384
      %v1546 = vld [vmem:[%s1545] sm:$0xf]
      %v1547 = vld [vmem:[%s1545 + $0x4] sm:$0xf]
      %v1548 = vld [vmem:[%s1545 + $0x8] sm:$0xf]
      %v1549 = vld [vmem:[%s1545 + $0xc] sm:$0xf]
      %s1550 = scalar_lea.vmem %s188, 24
      %v1551 = vld [vmem:[%s1550] sm:$0x1]
      %v1553 = vperm.slane %v1551, 0
      %v1559 = vunpack.c.l.b16 %v1546
      %v1560 = vunpack.c.l.b16 %v1547
      %v1561 = vunpack.c.l.b16 %v1548
      %v1562 = vunpack.c.l.b16 %v1549
      %v1563 = vpack.c.b16 %v1560, %v1559
      %v1564 = vpack.c.b16 %v1562, %v1561
      %1567 = vmatpush.bf16.msra.mxu0 0
      %1568 = vmatpush.bf16.msra.mxu0 0
      %1569 = vmatpush.bf16.msra.mxu0 0
      %1570 = vmatpush.bf16.msra.mxu0 0
      %1571 = vmatpush.bf16.msra.mxu0 0
      %1572 = vmatpush.bf16.msra.mxu0 0
      %1573 = vmatpush.bf16.msra.mxu0 %v1564
      %1574 = vmatpush.bf16.msra.mxu0 %v1563
      %1575 = vmatmul.bf16.gmra.mxu0 %v220
      %v1576 = vpop.f32.mrf.mxu0
      %v1577 = vadd.f32 %v1553, %v1576
      %v1578 = vpop.f32.mrf.mxu0
      %1579 = vdwg.mxu0
      %v1580 = vmul.f32 %v1577, %v1577
      %v1581 = vsel %vm236, %v1580, 0.0
      %1582 = vadd.xlane.f32.xlu0 %v1581
      %v1583 = vpop.xlane.xlu0 %1582
      %v1584 = vmul.f32 %v1583, 0.25
      %v1585 = vadd.f32 %v1584, 1e-08
      %v1586 = vrsqrt.pop %v1585
      %v1587 = vmul.f32 %v1586, %v1585
      %v1588 = vmul.f32 %v1587, %v1586
      %v1589 = vmul.f32 0.5, %v1588
      %v1590 = vsub.f32 1.5, %v1589
      %v1591 = vmul.f32 %v1586, %v1590
      %vm1592 = vweird.f32 %v1585
      %vm1593 = vweird.f32 %v1586
      %vm1594 = vmor %vm1592, %vm1593
      %v1595 = vsel %vm1594, %v1586, %v1591
      %v1596 = vmul.f32 %v1577, %v1595
      %v1597 = vmul.f32 %v1596, 0.2
      %v1598 = vmax.f32 %v1596, %v1597
      %s1599 = scalar_lea.vmem %s194, 48
      %1600 = vst.msk [vmem:[%s1599] sm:$0x3] %vm255, %v1598
      %s1601 = scalar_lea.vmem %s183, 400
      %v1602 = vld [vmem:[%s1601] sm:$0xf]
      %v1603 = vld [vmem:[%s1601 + $0x4] sm:$0xf]
      %v1604 = vld [vmem:[%s1601 + $0x8] sm:$0xf]
      %v1605 = vld [vmem:[%s1601 + $0xc] sm:$0xf]
      %s1606 = scalar_lea.vmem %s188, 25
      %v1607 = vld [vmem:[%s1606] sm:$0x1]
      %v1609 = vperm.slane %v1607, 0
      %v1615 = vunpack.c.l.b16 %v1602
      %v1616 = vunpack.c.l.b16 %v1603
      %v1617 = vunpack.c.l.b16 %v1604
      %v1618 = vunpack.c.l.b16 %v1605
      %v1619 = vpack.c.b16 %v1616, %v1615
      %v1620 = vpack.c.b16 %v1618, %v1617
      %1623 = vmatpush.bf16.msra.mxu0 0
      %1624 = vmatpush.bf16.msra.mxu0 0
      %1625 = vmatpush.bf16.msra.mxu0 0
      %1626 = vmatpush.bf16.msra.mxu0 0
      %1627 = vmatpush.bf16.msra.mxu0 0
      %1628 = vmatpush.bf16.msra.mxu0 0
      %1629 = vmatpush.bf16.msra.mxu0 %v1620
      %1630 = vmatpush.bf16.msra.mxu0 %v1619
      %1631 = vmatmul.bf16.gmra.mxu0 %v220
      %v1632 = vpop.f32.mrf.mxu0
      %v1633 = vadd.f32 %v1609, %v1632
      %v1634 = vpop.f32.mrf.mxu0
      %1635 = vdwg.mxu0
      %v1636 = vmul.f32 %v1633, %v1633
      %v1637 = vsel %vm236, %v1636, 0.0
      %1638 = vadd.xlane.f32.xlu0 %v1637
      %v1639 = vpop.xlane.xlu0 %1638
      %v1640 = vmul.f32 %v1639, 0.25
      %v1641 = vadd.f32 %v1640, 1e-08
      %v1642 = vrsqrt.pop %v1641
      %v1643 = vmul.f32 %v1642, %v1641
      %v1644 = vmul.f32 %v1643, %v1642
      %v1645 = vmul.f32 0.5, %v1644
      %v1646 = vsub.f32 1.5, %v1645
      %v1647 = vmul.f32 %v1642, %v1646
      %vm1648 = vweird.f32 %v1641
      %vm1649 = vweird.f32 %v1642
      %vm1650 = vmor %vm1648, %vm1649
      %v1651 = vsel %vm1650, %v1642, %v1647
      %v1652 = vmul.f32 %v1633, %v1651
      %v1653 = vmul.f32 %v1652, 0.2
      %v1654 = vmax.f32 %v1652, %v1653
      %s1655 = scalar_lea.vmem %s194, 50
      %1656 = vst.msk [vmem:[%s1655] sm:$0x3] %vm255, %v1654
      %s1657 = scalar_lea.vmem %s183, 416
      %v1658 = vld [vmem:[%s1657] sm:$0xf]
      %v1659 = vld [vmem:[%s1657 + $0x4] sm:$0xf]
      %v1660 = vld [vmem:[%s1657 + $0x8] sm:$0xf]
      %v1661 = vld [vmem:[%s1657 + $0xc] sm:$0xf]
      %s1662 = scalar_lea.vmem %s188, 26
      %v1663 = vld [vmem:[%s1662] sm:$0x1]
      %v1665 = vperm.slane %v1663, 0
      %v1671 = vunpack.c.l.b16 %v1658
      %v1672 = vunpack.c.l.b16 %v1659
      %v1673 = vunpack.c.l.b16 %v1660
      %v1674 = vunpack.c.l.b16 %v1661
      %v1675 = vpack.c.b16 %v1672, %v1671
      %v1676 = vpack.c.b16 %v1674, %v1673
      %1679 = vmatpush.bf16.msra.mxu0 0
      %1680 = vmatpush.bf16.msra.mxu0 0
      %1681 = vmatpush.bf16.msra.mxu0 0
      %1682 = vmatpush.bf16.msra.mxu0 0
      %1683 = vmatpush.bf16.msra.mxu0 0
      %1684 = vmatpush.bf16.msra.mxu0 0
      %1685 = vmatpush.bf16.msra.mxu0 %v1676
      %1686 = vmatpush.bf16.msra.mxu0 %v1675
      %1687 = vmatmul.bf16.gmra.mxu0 %v220
      %v1688 = vpop.f32.mrf.mxu0
      %v1689 = vadd.f32 %v1665, %v1688
      %v1690 = vpop.f32.mrf.mxu0
      %1691 = vdwg.mxu0
      %v1692 = vmul.f32 %v1689, %v1689
      %v1693 = vsel %vm236, %v1692, 0.0
      %1694 = vadd.xlane.f32.xlu0 %v1693
      %v1695 = vpop.xlane.xlu0 %1694
      %v1696 = vmul.f32 %v1695, 0.25
      %v1697 = vadd.f32 %v1696, 1e-08
      %v1698 = vrsqrt.pop %v1697
      %v1699 = vmul.f32 %v1698, %v1697
      %v1700 = vmul.f32 %v1699, %v1698
      %v1701 = vmul.f32 0.5, %v1700
      %v1702 = vsub.f32 1.5, %v1701
      %v1703 = vmul.f32 %v1698, %v1702
      %vm1704 = vweird.f32 %v1697
      %vm1705 = vweird.f32 %v1698
      %vm1706 = vmor %vm1704, %vm1705
      %v1707 = vsel %vm1706, %v1698, %v1703
      %v1708 = vmul.f32 %v1689, %v1707
      %v1709 = vmul.f32 %v1708, 0.2
      %v1710 = vmax.f32 %v1708, %v1709
      %s1711 = scalar_lea.vmem %s194, 52
      %1712 = vst.msk [vmem:[%s1711] sm:$0x3] %vm255, %v1710
      %s1713 = scalar_lea.vmem %s183, 432
      %v1714 = vld [vmem:[%s1713] sm:$0xf]
      %v1715 = vld [vmem:[%s1713 + $0x4] sm:$0xf]
      %v1716 = vld [vmem:[%s1713 + $0x8] sm:$0xf]
      %v1717 = vld [vmem:[%s1713 + $0xc] sm:$0xf]
      %s1718 = scalar_lea.vmem %s188, 27
      %v1719 = vld [vmem:[%s1718] sm:$0x1]
      %v1721 = vperm.slane %v1719, 0
      %v1727 = vunpack.c.l.b16 %v1714
      %v1728 = vunpack.c.l.b16 %v1715
      %v1729 = vunpack.c.l.b16 %v1716
      %v1730 = vunpack.c.l.b16 %v1717
      %v1731 = vpack.c.b16 %v1728, %v1727
      %v1732 = vpack.c.b16 %v1730, %v1729
      %1735 = vmatpush.bf16.msra.mxu0 0
      %1736 = vmatpush.bf16.msra.mxu0 0
      %1737 = vmatpush.bf16.msra.mxu0 0
      %1738 = vmatpush.bf16.msra.mxu0 0
      %1739 = vmatpush.bf16.msra.mxu0 0
      %1740 = vmatpush.bf16.msra.mxu0 0
      %1741 = vmatpush.bf16.msra.mxu0 %v1732
      %1742 = vmatpush.bf16.msra.mxu0 %v1731
      %1743 = vmatmul.bf16.gmra.mxu0 %v220
      %v1744 = vpop.f32.mrf.mxu0
      %v1745 = vadd.f32 %v1721, %v1744
      %v1746 = vpop.f32.mrf.mxu0
      %1747 = vdwg.mxu0
      %v1748 = vmul.f32 %v1745, %v1745
      %v1749 = vsel %vm236, %v1748, 0.0
      %1750 = vadd.xlane.f32.xlu0 %v1749
      %v1751 = vpop.xlane.xlu0 %1750
      %v1752 = vmul.f32 %v1751, 0.25
      %v1753 = vadd.f32 %v1752, 1e-08
      %v1754 = vrsqrt.pop %v1753
      %v1755 = vmul.f32 %v1754, %v1753
      %v1756 = vmul.f32 %v1755, %v1754
      %v1757 = vmul.f32 0.5, %v1756
      %v1758 = vsub.f32 1.5, %v1757
      %v1759 = vmul.f32 %v1754, %v1758
      %vm1760 = vweird.f32 %v1753
      %vm1761 = vweird.f32 %v1754
      %vm1762 = vmor %vm1760, %vm1761
      %v1763 = vsel %vm1762, %v1754, %v1759
      %v1764 = vmul.f32 %v1745, %v1763
      %v1765 = vmul.f32 %v1764, 0.2
      %v1766 = vmax.f32 %v1764, %v1765
      %s1767 = scalar_lea.vmem %s194, 54
      %1768 = vst.msk [vmem:[%s1767] sm:$0x3] %vm255, %v1766
      %s1769 = scalar_lea.vmem %s183, 448
      %v1770 = vld [vmem:[%s1769] sm:$0xf]
      %v1771 = vld [vmem:[%s1769 + $0x4] sm:$0xf]
      %v1772 = vld [vmem:[%s1769 + $0x8] sm:$0xf]
      %v1773 = vld [vmem:[%s1769 + $0xc] sm:$0xf]
      %s1774 = scalar_lea.vmem %s188, 28
      %v1775 = vld [vmem:[%s1774] sm:$0x1]
      %v1777 = vperm.slane %v1775, 0
      %v1783 = vunpack.c.l.b16 %v1770
      %v1784 = vunpack.c.l.b16 %v1771
      %v1785 = vunpack.c.l.b16 %v1772
      %v1786 = vunpack.c.l.b16 %v1773
      %v1787 = vpack.c.b16 %v1784, %v1783
      %v1788 = vpack.c.b16 %v1786, %v1785
      %1791 = vmatpush.bf16.msra.mxu0 0
      %1792 = vmatpush.bf16.msra.mxu0 0
      %1793 = vmatpush.bf16.msra.mxu0 0
      %1794 = vmatpush.bf16.msra.mxu0 0
      %1795 = vmatpush.bf16.msra.mxu0 0
      %1796 = vmatpush.bf16.msra.mxu0 0
      %1797 = vmatpush.bf16.msra.mxu0 %v1788
      %1798 = vmatpush.bf16.msra.mxu0 %v1787
      %1799 = vmatmul.bf16.gmra.mxu0 %v220
      %v1800 = vpop.f32.mrf.mxu0
      %v1801 = vadd.f32 %v1777, %v1800
      %v1802 = vpop.f32.mrf.mxu0
      %1803 = vdwg.mxu0
      %v1804 = vmul.f32 %v1801, %v1801
      %v1805 = vsel %vm236, %v1804, 0.0
      %1806 = vadd.xlane.f32.xlu0 %v1805
      %v1807 = vpop.xlane.xlu0 %1806
      %v1808 = vmul.f32 %v1807, 0.25
      %v1809 = vadd.f32 %v1808, 1e-08
      %v1810 = vrsqrt.pop %v1809
      %v1811 = vmul.f32 %v1810, %v1809
      %v1812 = vmul.f32 %v1811, %v1810
      %v1813 = vmul.f32 0.5, %v1812
      %v1814 = vsub.f32 1.5, %v1813
      %v1815 = vmul.f32 %v1810, %v1814
      %vm1816 = vweird.f32 %v1809
      %vm1817 = vweird.f32 %v1810
      %vm1818 = vmor %vm1816, %vm1817
      %v1819 = vsel %vm1818, %v1810, %v1815
      %v1820 = vmul.f32 %v1801, %v1819
      %v1821 = vmul.f32 %v1820, 0.2
      %v1822 = vmax.f32 %v1820, %v1821
      %s1823 = scalar_lea.vmem %s194, 56
      %1824 = vst.msk [vmem:[%s1823] sm:$0x3] %vm255, %v1822
      %s1825 = scalar_lea.vmem %s183, 464
      %v1826 = vld [vmem:[%s1825] sm:$0xf]
      %v1827 = vld [vmem:[%s1825 + $0x4] sm:$0xf]
      %v1828 = vld [vmem:[%s1825 + $0x8] sm:$0xf]
      %v1829 = vld [vmem:[%s1825 + $0xc] sm:$0xf]
      %s1830 = scalar_lea.vmem %s188, 29
      %v1831 = vld [vmem:[%s1830] sm:$0x1]
      %v1833 = vperm.slane %v1831, 0
      %v1839 = vunpack.c.l.b16 %v1826
      %v1840 = vunpack.c.l.b16 %v1827
      %v1841 = vunpack.c.l.b16 %v1828
      %v1842 = vunpack.c.l.b16 %v1829
      %v1843 = vpack.c.b16 %v1840, %v1839
      %v1844 = vpack.c.b16 %v1842, %v1841
      %1847 = vmatpush.bf16.msra.mxu0 0
      %1848 = vmatpush.bf16.msra.mxu0 0
      %1849 = vmatpush.bf16.msra.mxu0 0
      %1850 = vmatpush.bf16.msra.mxu0 0
      %1851 = vmatpush.bf16.msra.mxu0 0
      %1852 = vmatpush.bf16.msra.mxu0 0
      %1853 = vmatpush.bf16.msra.mxu0 %v1844
      %1854 = vmatpush.bf16.msra.mxu0 %v1843
      %1855 = vmatmul.bf16.gmra.mxu0 %v220
      %v1856 = vpop.f32.mrf.mxu0
      %v1857 = vadd.f32 %v1833, %v1856
      %v1858 = vpop.f32.mrf.mxu0
      %1859 = vdwg.mxu0
      %v1860 = vmul.f32 %v1857, %v1857
      %v1861 = vsel %vm236, %v1860, 0.0
      %1862 = vadd.xlane.f32.xlu0 %v1861
      %v1863 = vpop.xlane.xlu0 %1862
      %v1864 = vmul.f32 %v1863, 0.25
      %v1865 = vadd.f32 %v1864, 1e-08
      %v1866 = vrsqrt.pop %v1865
      %v1867 = vmul.f32 %v1866, %v1865
      %v1868 = vmul.f32 %v1867, %v1866
      %v1869 = vmul.f32 0.5, %v1868
      %v1870 = vsub.f32 1.5, %v1869
      %v1871 = vmul.f32 %v1866, %v1870
      %vm1872 = vweird.f32 %v1865
      %vm1873 = vweird.f32 %v1866
      %vm1874 = vmor %vm1872, %vm1873
      %v1875 = vsel %vm1874, %v1866, %v1871
      %v1876 = vmul.f32 %v1857, %v1875
      %v1877 = vmul.f32 %v1876, 0.2
      %v1878 = vmax.f32 %v1876, %v1877
      %s1879 = scalar_lea.vmem %s194, 58
      %1880 = vst.msk [vmem:[%s1879] sm:$0x3] %vm255, %v1878
      %s1881 = scalar_lea.vmem %s183, 480
      %v1882 = vld [vmem:[%s1881] sm:$0xf]
      %v1883 = vld [vmem:[%s1881 + $0x4] sm:$0xf]
      %v1884 = vld [vmem:[%s1881 + $0x8] sm:$0xf]
      %v1885 = vld [vmem:[%s1881 + $0xc] sm:$0xf]
      %s1886 = scalar_lea.vmem %s188, 30
      %v1887 = vld [vmem:[%s1886] sm:$0x1]
      %v1889 = vperm.slane %v1887, 0
      %v1895 = vunpack.c.l.b16 %v1882
      %v1896 = vunpack.c.l.b16 %v1883
      %v1897 = vunpack.c.l.b16 %v1884
      %v1898 = vunpack.c.l.b16 %v1885
      %v1899 = vpack.c.b16 %v1896, %v1895
      %v1900 = vpack.c.b16 %v1898, %v1897
      %1903 = vmatpush.bf16.msra.mxu0 0
      %1904 = vmatpush.bf16.msra.mxu0 0
      %1905 = vmatpush.bf16.msra.mxu0 0
      %1906 = vmatpush.bf16.msra.mxu0 0
      %1907 = vmatpush.bf16.msra.mxu0 0
      %1908 = vmatpush.bf16.msra.mxu0 0
      %1909 = vmatpush.bf16.msra.mxu0 %v1900
      %1910 = vmatpush.bf16.msra.mxu0 %v1899
      %1911 = vmatmul.bf16.gmra.mxu0 %v220
      %v1912 = vpop.f32.mrf.mxu0
      %v1913 = vadd.f32 %v1889, %v1912
      %v1914 = vpop.f32.mrf.mxu0
      %1915 = vdwg.mxu0
      %v1916 = vmul.f32 %v1913, %v1913
      %v1917 = vsel %vm236, %v1916, 0.0
      %1918 = vadd.xlane.f32.xlu0 %v1917
      %v1919 = vpop.xlane.xlu0 %1918
      %v1920 = vmul.f32 %v1919, 0.25
      %v1921 = vadd.f32 %v1920, 1e-08
      %v1922 = vrsqrt.pop %v1921
      %v1923 = vmul.f32 %v1922, %v1921
      %v1924 = vmul.f32 %v1923, %v1922
      %v1925 = vmul.f32 0.5, %v1924
      %v1926 = vsub.f32 1.5, %v1925
      %v1927 = vmul.f32 %v1922, %v1926
      %vm1928 = vweird.f32 %v1921
      %vm1929 = vweird.f32 %v1922
      %vm1930 = vmor %vm1928, %vm1929
      %v1931 = vsel %vm1930, %v1922, %v1927
      %v1932 = vmul.f32 %v1913, %v1931
      %v1933 = vmul.f32 %v1932, 0.2
      %v1934 = vmax.f32 %v1932, %v1933
      %s1935 = scalar_lea.vmem %s194, 60
      %1936 = vst.msk [vmem:[%s1935] sm:$0x3] %vm255, %v1934
      %s1937 = scalar_lea.vmem %s183, 496
      %v1938 = vld [vmem:[%s1937] sm:$0xf]
      %v1939 = vld [vmem:[%s1937 + $0x4] sm:$0xf]
      %v1940 = vld [vmem:[%s1937 + $0x8] sm:$0xf]
      %v1941 = vld [vmem:[%s1937 + $0xc] sm:$0xf]
      %s1942 = scalar_lea.vmem %s188, 31
      %v1943 = vld [vmem:[%s1942] sm:$0x1]
      %v1945 = vperm.slane %v1943, 0
      %v1951 = vunpack.c.l.b16 %v1938
      %v1952 = vunpack.c.l.b16 %v1939
      %v1953 = vunpack.c.l.b16 %v1940
      %v1954 = vunpack.c.l.b16 %v1941
      %v1955 = vpack.c.b16 %v1952, %v1951
      %v1956 = vpack.c.b16 %v1954, %v1953
      %1959 = vmatpush.bf16.msra.mxu0 0
      %1960 = vmatpush.bf16.msra.mxu0 0
      %1961 = vmatpush.bf16.msra.mxu0 0
      %1962 = vmatpush.bf16.msra.mxu0 0
      %1963 = vmatpush.bf16.msra.mxu0 0
      %1964 = vmatpush.bf16.msra.mxu0 0
      %1965 = vmatpush.bf16.msra.mxu0 %v1956
      %1966 = vmatpush.bf16.msra.mxu0 %v1955
      %1967 = vmatmul.bf16.gmra.mxu0 %v220
      %v1968 = vpop.f32.mrf.mxu0
      %v1969 = vadd.f32 %v1945, %v1968
      %v1970 = vpop.f32.mrf.mxu0
      %1971 = vdwg.mxu0
      %v1972 = vmul.f32 %v1969, %v1969
      %v1973 = vsel %vm236, %v1972, 0.0
      %1974 = vadd.xlane.f32.xlu0 %v1973
      %v1975 = vpop.xlane.xlu0 %1974
      %v1976 = vmul.f32 %v1975, 0.25
      %v1977 = vadd.f32 %v1976, 1e-08
      %v1978 = vrsqrt.pop %v1977
      %v1979 = vmul.f32 %v1978, %v1977
      %v1980 = vmul.f32 %v1979, %v1978
      %v1981 = vmul.f32 0.5, %v1980
      %v1982 = vsub.f32 1.5, %v1981
      %v1983 = vmul.f32 %v1978, %v1982
      %vm1984 = vweird.f32 %v1977
      %vm1985 = vweird.f32 %v1978
      %vm1986 = vmor %vm1984, %vm1985
      %v1987 = vsel %vm1986, %v1978, %v1983
      %v1988 = vmul.f32 %v1969, %v1987
      %v1989 = vmul.f32 %v1988, 0.2
      %v1990 = vmax.f32 %v1988, %v1989
      %s1991 = scalar_lea.vmem %s194, 62
      %1992 = vst.msk [vmem:[%s1991] sm:$0x3] %vm255, %v1990
      %s1993 = smul.u32 32, %s14
      %p1994 = scmp.lt.s32.totalorder %s1993, 63
      %s1995 = scalar_select %p1994, %s1993, 63
      %s1996 = smul.addr %s1995, 2
      %s1997 = scalar_lea.vmem %s3, %s1996
      // Predicated region
      $region33: #{first_layer_forward.1} parent=31 // pred_check
        %p1998 = pneg %p105
      $region34: #{first_layer_forward.1} parent=31 // pred_check_branch
        %2000 = sbr.rel (%p1998) target = $region36
      $region35: #{first_layer_forward.1} parent=31 // pred_region
        %s2001 = smul.u32 32, %s14
      $region36: #{first_layer_forward.1} parent=31 // pred_fallthru
        _
    $region32: #{first_layer_forward.1} parent=5 // pred_fallthru
      _
    %p2002 = scmp.le.s32.totalorder 2, %s9
    // Predicated region
    $region37: #{first_layer_forward.1} parent=5 // pred_check
      %p2003 = pneg %p2002
    $region38: #{first_layer_forward.1} parent=5 // pred_check_branch
      %2005 = sbr.rel (%p2003) target = $region40
    $region39: #{first_layer_forward.1} parent=5 // pred_region
      %s2006 = ssub.s32 %s9, 2
      // Predicated region
      $region41: #{first_layer_forward.1} parent=39 // pred_check
        %p2007 = pneg %p111
      $region42: #{first_layer_forward.1} parent=39 // pred_check_branch
        %2009 = sbr.rel (%p2007) target = $region44
      $region43: #{first_layer_forward.1} parent=39 // pred_region
        %s2010 = smul.u32 32, %s15
        %p2011 = scmp.lt.s32.totalorder %s2010, 63
        %s2012 = scalar_select %p2011, %s2010, 63
        %s2013 = smul.addr %s2012, 2
        %s2014 = scalar_lea.vmem %s3, %s2013
      $region44: #{first_layer_forward.1} parent=39 // pred_fallthru
        _
    $region40: #{first_layer_forward.1} parent=5 // pred_fallthru
      _
  $region6: #{first_layer_forward.1} parent=0 // loop_footer
    %s13 = sadd.s32 1, %s9
  $region7: #{first_layer_forward.1} parent=0 // loop_footer_branch
    %8 = sbr.rel target = $region3
  $region8: #{first_layer_forward.1} parent=0 // loop_exit
    _

</llo_original>
